<compile_context>
chip_gen: v7x
topology: tpu7x:2x2x1
jax: 0.10.0
libtpu: 0.0.40
codegen_flags: <defaults>
</compile_context>

<pallas_src>
import functools

import jax
import jax.numpy as jnp
from jax.experimental import pallas as pl
from jax.experimental.pallas import tpu as pltpu


def _round_up(x, m):
    return ((x + m - 1) // m) * m


# ----------------------------------------------------------------------------
# Pallas kernel: per-block fused complex 2-layer MLP + ReLU + softshrink
# ----------------------------------------------------------------------------
def _afno_block_mlp_kernel(x_ref, w1_ref, b1_ref, w2_ref, b2_ref, out_ref,
                           *, lam, nb):
    """One token tile.

    x_ref   : [nb, tm, 2*bs]   bf16   (per block: [xr | xi])
    w1_ref  : [nb, 2*bs, 2*bsf] bf16  (fused [[w1r, w1i], [-w1i, w1r]])
    b1_ref  : [nb, 1, 2*bsf]   f32    ([b1r | b1i])
    w2_ref  : [nb, 2*bsf, 2*bs] bf16  (fused [[w2r, w2i], [-w2i, w2r]])
    b2_ref  : [nb, 1, 2*bs]    f32    ([b2r | b2i])
    out_ref : [nb, tm, 2*bs]   bf16   (softshrinked [o2r | o2i])
    """

    def softshrink(v):
        return jnp.where(v > lam, v - lam, jnp.where(v < -lam, v + lam, 0.0))

    def per_block(b, carry):
        # Dynamic leading-axis ref indexing keeps exactly one block's
        # intermediates live (bounds VMEM spill traffic).
        xb = x_ref[b]                                            # [tm, 2bs] bf16

        # ---- layer 1: one fused MXU matmul, f32 accumulation ----
        o1 = jnp.dot(xb, w1_ref[b], preferred_element_type=jnp.float32)
        o1 = jnp.maximum(o1 + b1_ref[b], 0.0)                    # [tm, 2bsf] f32

        # ---- layer 2: one fused MXU matmul, f32 accumulation ----
        o2 = jnp.dot(o1.astype(jnp.bfloat16), w2_ref[b],
                     preferred_element_type=jnp.float32)
        o2 = o2 + b2_ref[b]                                      # [tm, 2bs] f32

        # ---- softshrink in f32, single cast at the store ----
        out_ref[b] = softshrink(o2).astype(out_ref.dtype)
        return carry

    jax.lax.fori_loop(0, nb, per_block, 0)


def afno_block_mlp_pallas(xr, xi, w1f, b1f, w2f, b2f, *, lam, tm=256):
    """xr, xi: [N, nb, bs] token-major real/imag parts of the kept modes (f32).

    Returns softshrinked (o2_real, o2_imag) as f32 [N, nb, bs]."""
    n, nb, bs = xr.shape
    tb = 2 * bs

    # MXU / bf16-packing friendly token tile (always a multiple of 128).
    tm = min(tm, _round_up(n, 128))
    n_pad = _round_up(n, tm)
    grid = (n_pad // tm,)

    # Kernel input: per block the last dim is [xr | xi]; block-major so the
    # kernel can index blocks along the leading axis.  The cast / concat / pad
    # / transpose all fuse into one XLA producer pass over the activations.
    x = jnp.concatenate([xr, xi], axis=-1).astype(jnp.bfloat16)   # [n, nb, 2bs]
    if n_pad != n:
        x = jnp.pad(x, ((0, n_pad - n), (0, 0), (0, 0)))
    x = jnp.transpose(x, (1, 0, 2))                               # [nb, n_pad, 2bs]

    tok_spec = pl.BlockSpec((nb, tm, tb), lambda i: (0, i, 0))
    resident = lambda a: pl.BlockSpec(a.shape, lambda i: (0, 0, 0))

    out = pl.pallas_call(
        functools.partial(_afno_block_mlp_kernel, lam=lam, nb=nb),
        out_shape=jax.ShapeDtypeStruct((nb, n_pad, tb), jnp.bfloat16),
        grid_spec=pltpu.PrefetchScalarGridSpec(
            num_scalar_prefetch=0,
            grid=grid,
            in_specs=[
                tok_spec,                       # activations [xr | xi]
                resident(w1f), resident(b1f),   # layer-1 fused weight (bf16) + bias (f32)
                resident(w2f), resident(b2f),   # layer-2 fused weight (bf16) + bias (f32)
            ],
            out_specs=tok_spec,
        ),
        compiler_params=pltpu.CompilerParams(
            # token-tile axis is independent -> megacore sharding on v7x.
            dimension_semantics=("parallel",),
            # per-block loop keeps the live set small; resident fused weights
            # are ~2.4 MB bf16 at production sizes, so 32 MiB holds with
            # headroom even on v7x's 64 MiB/TC.
            vmem_limit_bytes=32 * 1024 * 1024,
        ),
    )(x, w1f, b1f, w2f, b2f)

    # back to token-major [N, nb, 2bs]; the pad-row slice fuses into the
    # transpose, and the bf16->f32 upcast fuses into the complex assembly.
    out = jnp.transpose(out[:, :n, :], (1, 0, 2)).astype(jnp.float32)
    return out[..., :bs], out[..., bs:]


# ----------------------------------------------------------------------------
# AFNO3D module (JAX glue around the kernel)
# ----------------------------------------------------------------------------
class AFNO3D:
    def __init__(self, hidden_size, num_blocks=8, sparsity_threshold=0.01,
                 hard_thresholding_fraction=1, hidden_size_factor=1, key=None):
        assert hidden_size % num_blocks == 0
        self.hidden_size = hidden_size
        self.num_blocks = num_blocks
        self.block_size = hidden_size // num_blocks
        self.sparsity_threshold = sparsity_threshold
        self.hard_thresholding_fraction = hard_thresholding_fraction
        self.hidden_size_factor = hidden_size_factor
        self.scale = 0.02

        key = jax.random.PRNGKey(0) if key is None else key
        k1, k2, k3, k4 = jax.random.split(key, 4)
        bs, f, nb = self.block_size, hidden_size_factor, num_blocks
        bsf = bs * f

        # raw f32 parameters (same layout / init style as the PyTorch module)
        self.w1 = self.scale * jax.random.normal(k1, (2, nb, bs, bsf), jnp.float32)
        self.b1 = self.scale * jax.random.normal(k2, (2, nb, bsf), jnp.float32)
        self.w2 = self.scale * jax.random.normal(k3, (2, nb, bsf, bs), jnp.float32)
        self.b2 = self.scale * jax.random.normal(k4, (2, nb, bs), jnp.float32)

        # Kernel-ready fused parameters (built once, in f32, rounded once):
        #   [xr | xi] @ [[wr, wi], [-wi, wr]] = [xr@wr - xi@wi | xr@wi + xi@wr]
        def fuse_w(wr, wi):
            top = jnp.concatenate([wr, wi], axis=-1)
            bot = jnp.concatenate([-wi, wr], axis=-1)
            return jnp.concatenate([top, bot], axis=-2)

        bf16 = jnp.bfloat16
        self.W1f = fuse_w(self.w1[0], self.w1[1]).astype(bf16)          # [nb, 2bs, 2bsf]
        self.B1f = jnp.concatenate([self.b1[0], self.b1[1]], -1)[:, None, :]  # [nb,1,2bsf] f32
        self.W2f = fuse_w(self.w2[0], self.w2[1]).astype(bf16)          # [nb, 2bsf, 2bs]
        self.B2f = jnp.concatenate([self.b2[0], self.b2[1]], -1)[:, None, :]  # [nb,1,2bs] f32

    def __call__(self, x):
        # x: [B, D, H, W, C]
        bias = x
        dtype = x.dtype
        x = x.astype(jnp.float32)
        B, D, H, W, C = x.shape
        Wf = W // 2 + 1
        nb, bs = self.num_blocks, self.block_size

        # TODO(synk): 3-D rfftn/irfftn have no Pallas TPU equivalent; they stay in XLA.
        xf = jnp.fft.rfftn(x, axes=(1, 2, 3), norm='ortho')     # [B, D, H, Wf, C] complex64

        total_modes = H // 2 + 1
        kept = int(total_modes * self.hard_thresholding_fraction)
        h_lo = total_modes - kept
        h_hi = min(total_modes + kept, H)
        w_hi = min(kept, Wf)

        if kept == 0 or w_hi == 0:
            xc = jnp.zeros((B, D, H, Wf, C), jnp.complex64)
        else:
            xk = xf[:, :, h_lo:h_hi, :w_hi, :]                  # kept-mode region
            Hk, Wk = xk.shape[2], xk.shape[3]
            N = B * D * Hk * Wk

            xr = jnp.real(xk).reshape(N, nb, bs)
            xi = jnp.imag(xk).reshape(N, nb, bs)

            o2r_k, o2i_k = afno_block_mlp_pallas(
                xr, xi, self.W1f, self.B1f, self.W2f, self.B2f,
                lam=float(self.sparsity_threshold))

            xc_k = jax.lax.complex(o2r_k.reshape(B, D, Hk, Wk, C),
                                   o2i_k.reshape(B, D, Hk, Wk, C))

            if h_lo == 0 and Hk == H and Wk == Wf:
                xc = xc_k                                       # kept region == full rFFT grid
            else:
                xc = jnp.zeros((B, D, H, Wf, C), jnp.complex64)
                xc = jax.lax.dynamic_update_slice(xc, xc_k, (0, 0, h_lo, 0, 0))

        y = jnp.fft.irfftn(xc, s=(D, H, W), axes=(1, 2, 3), norm='ortho')
        return y.astype(dtype) + bias


# ----------------------------------------------------------------------------
# Pure-JAX reference (mirrors the PyTorch forward, f32 throughout)
# ----------------------------------------------------------------------------
def afno3d_reference(mod: AFNO3D, x):
    dtype = x.dtype
    bias = x
    x = x.astype(jnp.float32)
    B, D, H, W, C = x.shape
    Wf = W // 2 + 1
    nb, bs = mod.num_blocks, mod.block_size

    xf = jnp.fft.rfftn(x, axes=(1, 2, 3), norm='ortho').reshape(B, D, H, Wf, nb, bs)

    total_modes = H // 2 + 1
    kept = int(total_modes * mod.hard_thresholding_fraction)
    h_lo, h_hi = total_modes - kept, min(total_modes + kept, H)
    w_hi = min(kept, Wf)

    xk = xf[:, :, h_lo:h_hi, :w_hi]
    ein = lambda a, w: jnp.einsum('...bi,bio->...bo', a, w)
    o1r = jax.nn.relu(ein(jnp.real(xk), mod.w1[0]) - ein(jnp.imag(xk), mod.w1[1]) + mod.b1[0])
    o1i = jax.nn.relu(ein(jnp.imag(xk), mod.w1[0]) + ein(jnp.real(xk), mod.w1[1]) + mod.b1[1])
    o2r_k = ein(o1r, mod.w2[0]) - ein(o1i, mod.w2[1]) + mod.b2[0]
    o2i_k = ein(o1i, mod.w2[0]) + ein(o1r, mod.w2[1]) + mod.b2[1]

    o2r = jnp.zeros((B, D, H, Wf, nb, bs), jnp.float32).at[:, :, h_lo:h_hi, :w_hi].set(o2r_k)
    o2i = jnp.zeros((B, D, H, Wf, nb, bs), jnp.float32).at[:, :, h_lo:h_hi, :w_hi].set(o2i_k)

    lam = mod.sparsity_threshold
    shrink = lambda v: jnp.where(v > lam, v - lam, jnp.where(v < -lam, v + lam, 0.0))
    xc = (shrink(o2r) + 1j * shrink(o2i)).reshape(B, D, H, Wf, C)
    y = jnp.fft.irfftn(xc, s=(D, H, W), axes=(1, 2, 3), norm='ortho')
    return y.astype(dtype) + bias


if __name__ == "__main__":
    # Small shapes: batch=2, depth=4, H=8, W=8, hidden=64, num_blocks=8 (bs=8), factor=2
    B, D, H, W, C = 2, 4, 8, 8, 64
    key = jax.random.PRNGKey(0)
    kx, kp1, kp2 = jax.random.split(key, 3)
    x = jax.random.normal(kx, (B, D, H, W, C), jnp.float32)

    # test both the full kept-mode region (default fraction=1) and a
    # hard-thresholded variant (exercises the scatter-back path).
    for frac, kp in ((1.0, kp1), (0.5, kp2)):
        mod = AFNO3D(hidden_size=C, num_blocks=8, hidden_size_factor=2,
                     hard_thresholding_fraction=frac, key=kp)
        fwd = jax.jit(mod.__call__)
        out = jax.block_until_ready(fwd(x))
        ref = jax.block_until_ready(afno3d_reference(mod, x))
        assert out.shape == (B, D, H, W, C)
        err = float(jnp.max(jnp.abs(out - ref)))
        # bf16 MXU operands / bf16 writeback with f32 accumulation + f32 shrink
        assert err < 2e-3, f"fraction={frac}: max abs err {err}"

    print("KERNEL_OK")
</pallas_src>

<mosaic_0001>
module attributes {stable_mosaic.version = 11 : i64} {
  func.func @_afno_block_mlp_kernel(%arg0: i32, %arg1: memref<8x256x16xbf16, #tpu.memory_space<vmem>>, %arg2: memref<8x16x32xbf16, #tpu.memory_space<vmem>>, %arg3: memref<8x1x32xf32, #tpu.memory_space<vmem>>, %arg4: memref<8x32x16xbf16, #tpu.memory_space<vmem>>, %arg5: memref<8x1x16xf32, #tpu.memory_space<vmem>>, %arg6: memref<8x256x16xbf16, #tpu.memory_space<vmem>>) attributes {dimension_semantics = [#tpu.dimension_semantics<parallel>], iteration_bounds = array<i64: 2>, scalar_prefetch = 0 : i64, scratch_operands = 0 : i64, tpu.core_type = #tpu.core_type<tc>, window_params = [{transform_indices = @transform_0, window_bounds = array<i64: 8, 256, 16>}, {pipeline_mode = #tpu.pipeline_mode<synchronous>, transform_indices = @transform_1, window_bounds = array<i64: 8, 16, 32>}, {pipeline_mode = #tpu.pipeline_mode<synchronous>, transform_indices = @transform_2, window_bounds = array<i64: 8, 1, 32>}, {pipeline_mode = #tpu.pipeline_mode<synchronous>, transform_indices = @transform_3, window_bounds = array<i64: 8, 32, 16>}, {pipeline_mode = #tpu.pipeline_mode<synchronous>, transform_indices = @transform_4, window_bounds = array<i64: 8, 1, 16>}, {transform_indices = @transform_5, window_bounds = array<i64: 8, 256, 16>}]} {
    %c0_i32 = arith.constant 0 : i32
    %c8_i32 = arith.constant 8 : i32
    %0 = arith.addi %c0_i32, %c8_i32 : i32
    %c1_i32 = arith.constant 1 : i32
    scf.for %arg7 = %c0_i32 to %0 step %c1_i32  : i32 {
      %1 = arith.index_cast %arg7 : i32 to index
      %c0 = arith.constant 0 : index
      %c0_1 = arith.constant 0 : index
      %2 = vector.load %arg1[%1, %c0, %c0_1] : memref<8x256x16xbf16, #tpu.memory_space<vmem>>, vector<1x256x16xbf16>
      %3 = vector.shape_cast %2 : vector<1x256x16xbf16> to vector<256x16xbf16>
      %4 = arith.index_cast %arg7 : i32 to index
      %c0_2 = arith.constant 0 : index
      %c0_3 = arith.constant 0 : index
      %5 = vector.load %arg2[%4, %c0_2, %c0_3] : memref<8x16x32xbf16, #tpu.memory_space<vmem>>, vector<1x16x32xbf16>
      %6 = vector.shape_cast %5 : vector<1x16x32xbf16> to vector<16x32xbf16>
      %cst = arith.constant dense<0.000000e+00> : vector<256x32xf32>
      %7 = tpu.matmul %3, %6, %cst {dimension_numbers = #tpu.dot_dimension_numbers<[1], [0], [0], [1], [0, 0, 1, 1], [], []>} : vector<256x16xbf16>, vector<16x32xbf16>, vector<256x32xf32> -> vector<256x32xf32>
      %8 = arith.index_cast %arg7 : i32 to index
      %c0_4 = arith.constant 0 : index
      %c0_5 = arith.constant 0 : index
      %9 = vector.load %arg3[%8, %c0_4, %c0_5] : memref<8x1x32xf32, #tpu.memory_space<vmem>>, vector<1x1x32xf32>
      %10 = vector.shape_cast %9 : vector<1x1x32xf32> to vector<1x32xf32>
      %11 = vector.broadcast %10 : vector<1x32xf32> to vector<256x32xf32>
      %12 = arith.addf %7, %11 : vector<256x32xf32>
      %cst_6 = arith.constant 0.000000e+00 : f32
      %13 = vector.broadcast %cst_6 : f32 to vector<256x32xf32>
      %14 = arith.maximumf %12, %13 : vector<256x32xf32>
      %15 = arith.truncf %14 : vector<256x32xf32> to vector<256x32xbf16>
      %16 = arith.index_cast %arg7 : i32 to index
      %c0_7 = arith.constant 0 : index
      %c0_8 = arith.constant 0 : index
      %17 = vector.load %arg4[%16, %c0_7, %c0_8] : memref<8x32x16xbf16, #tpu.memory_space<vmem>>, vector<1x32x16xbf16>
      %18 = vector.shape_cast %17 : vector<1x32x16xbf16> to vector<32x16xbf16>
      %cst_9 = arith.constant dense<0.000000e+00> : vector<256x16xf32>
      %19 = tpu.matmul %15, %18, %cst_9 {dimension_numbers = #tpu.dot_dimension_numbers<[1], [0], [0], [1], [0, 0, 1, 1], [], []>} : vector<256x32xbf16>, vector<32x16xbf16>, vector<256x16xf32> -> vector<256x16xf32>
      %20 = arith.index_cast %arg7 : i32 to index
      %c0_10 = arith.constant 0 : index
      %c0_11 = arith.constant 0 : index
      %21 = vector.load %arg5[%20, %c0_10, %c0_11] : memref<8x1x16xf32, #tpu.memory_space<vmem>>, vector<1x1x16xf32>
      %22 = vector.shape_cast %21 : vector<1x1x16xf32> to vector<1x16xf32>
      %23 = vector.broadcast %22 : vector<1x16xf32> to vector<256x16xf32>
      %24 = arith.addf %19, %23 : vector<256x16xf32>
      %cst_12 = arith.constant 0.00999999977 : f32
      %25 = vector.broadcast %cst_12 : f32 to vector<256x16xf32>
      %26 = arith.cmpf ogt, %24, %25 : vector<256x16xf32>
      %cst_13 = arith.constant 0.00999999977 : f32
      %27 = vector.broadcast %cst_13 : f32 to vector<256x16xf32>
      %28 = arith.subf %24, %27 : vector<256x16xf32>
      %cst_14 = arith.constant -0.00999999977 : f32
      %29 = vector.broadcast %cst_14 : f32 to vector<256x16xf32>
      %30 = arith.cmpf olt, %24, %29 : vector<256x16xf32>
      %cst_15 = arith.constant 0.00999999977 : f32
      %31 = vector.broadcast %cst_15 : f32 to vector<256x16xf32>
      %32 = arith.addf %24, %31 : vector<256x16xf32>
      %cst_16 = arith.constant 0.000000e+00 : f32
      %33 = vector.broadcast %cst_16 : f32 to vector<256x16xf32>
      %34 = arith.select %30, %32, %33 : vector<256x16xi1>, vector<256x16xf32>
      %35 = arith.select %26, %28, %34 : vector<256x16xi1>, vector<256x16xf32>
      %36 = arith.truncf %35 : vector<256x16xf32> to vector<256x16xbf16>
      %37 = arith.index_cast %arg7 : i32 to index
      %c0_17 = arith.constant 0 : index
      %c0_18 = arith.constant 0 : index
      %38 = vector.load %arg6[%37, %c0_17, %c0_18] : memref<8x256x16xbf16, #tpu.memory_space<vmem>>, vector<1x256x16xbf16>
      %39 = vector.shape_cast %38 : vector<1x256x16xbf16> to vector<256x16xbf16>
      %40 = vector.shape_cast %36 : vector<256x16xbf16> to vector<1x256x16xbf16>
      tpu.vector_store %arg6[%37, %c0_17, %c0_18], %40 {strides = array<i32>} : memref<8x256x16xbf16, #tpu.memory_space<vmem>>, vector<1x256x16xbf16>,
    }
    %c8_i32_0 = arith.constant 8 : i32
    return
  }
  func.func @transform_0(%arg0: i32) -> (i32, i32, i32) {
    %c0_i32 = arith.constant 0 : i32
    %c0_i32_0 = arith.constant 0 : i32
    %c0_i32_1 = arith.constant 0 : i32
    return %c0_i32, %arg0, %c0_i32_0 : i32, i32, i32
  }
  func.func @transform_1(%arg0: i32) -> (i32, i32, i32) {
    %c0_i32 = arith.constant 0 : i32
    %c0_i32_0 = arith.constant 0 : i32
    %c0_i32_1 = arith.constant 0 : i32
    %c0_i32_2 = arith.constant 0 : i32
    return %c0_i32, %c0_i32_0, %c0_i32_1 : i32, i32, i32
  }
  func.func @transform_2(%arg0: i32) -> (i32, i32, i32) {
    %c0_i32 = arith.constant 0 : i32
    %c0_i32_0 = arith.constant 0 : i32
    %c0_i32_1 = arith.constant 0 : i32
    %c0_i32_2 = arith.constant 0 : i32
    return %c0_i32, %c0_i32_0, %c0_i32_1 : i32, i32, i32
  }
  func.func @transform_3(%arg0: i32) -> (i32, i32, i32) {
    %c0_i32 = arith.constant 0 : i32
    %c0_i32_0 = arith.constant 0 : i32
    %c0_i32_1 = arith.constant 0 : i32
    %c0_i32_2 = arith.constant 0 : i32
    return %c0_i32, %c0_i32_0, %c0_i32_1 : i32, i32, i32
  }
  func.func @transform_4(%arg0: i32) -> (i32, i32, i32) {
    %c0_i32 = arith.constant 0 : i32
    %c0_i32_0 = arith.constant 0 : i32
    %c0_i32_1 = arith.constant 0 : i32
    %c0_i32_2 = arith.constant 0 : i32
    return %c0_i32, %c0_i32_0, %c0_i32_1 : i32, i32, i32
  }
  func.func @transform_5(%arg0: i32) -> (i32, i32, i32) {
    %c0_i32 = arith.constant 0 : i32
    %c0_i32_0 = arith.constant 0 : i32
    %c0_i32_1 = arith.constant 0 : i32
    return %c0_i32, %arg0, %c0_i32_0 : i32, i32, i32
  }
}

</mosaic_0001>

<llo_original>
// kernel: a_call__.1
$region0: #{a_call__.1}
  #allocation0 [shape = 'u32[]', space=smem, size = 0x4, offset = 0x4, fixed_abs, tag = 'smem constant byte address 0x4 - core index']
  #allocation1 [shape = 'u32[144,128]{1,0:T(1,128)}', space=vmem, size = 0x12000, scoped, tag = 'internal scratch']
  %s0 = inlined_call_operand.vmem [shape: bf16[8,512,16], index: 0, kind: input, shape index: {}]
  %s1 = inlined_call_operand.vmem [shape: bf16[8,16,32], index: 1, kind: input, shape index: {}]
  %s2 = inlined_call_operand.vmem [shape: f32[8,1,32], index: 2, kind: input, shape index: {}]
  %s3 = inlined_call_operand.vmem [shape: bf16[8,32,16], index: 3, kind: input, shape index: {}]
  %s4 = inlined_call_operand.vmem [shape: f32[8,1,16], index: 4, kind: input, shape index: {}]
  %s5 = inlined_call_operand.vmem [shape: bf16[8,512,16], index: 5, kind: output, shape index: {}]
  %s6 = sld [smem:[#allocation0]]
  $region138: #{a_call__.1} parent=0
    _
  %s8 = ssub.s32 1, %s6
  %s9 = scalar_select 0, %s8, %s6
  $region1: #{a_call__.1} parent=0
    #allocation2 [shape = 'u8[1048576]{0}', space=vmem, size = 0x100000, scoped, tag = 'input window, operand 0']
    #allocation3 [shape = 'u8[1048576]{0}', space=vmem, size = 0x100000, scoped, tag = 'output window, operand 0']
    loop: start=0, step=1, limit=4
    $region2: #{a_call__.1} parent=1 // loop_pre_header
      _
    $region3: #{a_call__.1} parent=1 // loop_header
      %s11 = sphi 0, %s15
      %p12 = scmp.ge.s32.totalorder %s11, 4
      %s21 = sphi 0, %s23
      %s24 = sphi 0, %s21
      %s25 = sphi 0, %s24
      %s41 = sphi 0, %s25
      %s45 = sphi 0, %s45
      %s47 = sphi 0, %s45
      %s48 = sphi 0, %s47
      %s62 = sphi 0, %s48
      %s66 = sphi 0, %s66
      %s68 = sphi 0, %s66
      %s69 = sphi 0, %s68
      %s83 = sphi 0, %s69
      %s87 = sphi 0, %s87
      %s89 = sphi 0, %s87
      %s90 = sphi 0, %s89
      %s104 = sphi 0, %s90
      %s108 = sphi 0, %s108
      %s110 = sphi 0, %s108
      %s111 = sphi 0, %s110
      %s125 = sphi 0, %s111
      %s131 = sphi 0, %s133
      %s134 = sphi 0, %s131
      %s135 = sphi 0, %s134
      %s151 = sphi 0, %s135
    $region4: #{a_call__.1} parent=1 // loop_header_branch
      %14 = sbr.rel (%p12) target = $region8
    $region5: #{a_call__.1} parent=1 // loop_body
      %s16 = ssub.s32 %s11, 1
      %s17 = ssub.s32 %s11, 2
      %s18 = sadd.s32 %s11, 1
      %s19 = ssub.s32 %s11, %s18
      %p20 = scmp.eq.s32.totalorder %s19, 0
      %s22 = sadd.s32 %s21, 1
      %s23 = scalar_select %p20, %s21, %s22
      %p26 = pneg %p20
      %p27 = scmp.eq.s32.totalorder %s11, 1
      %p28 = por %p26, %p27
      %p29 = scmp.ne.s32.totalorder %s21, %s24
      %p30 = scmp.eq.s32.totalorder %s11, 0
      %p31 = por %p29, %p30
      %p32 = scmp.ne.s32.totalorder %s21, %s24
      %p33 = scmp.eq.s32.totalorder %s16, 1
      %p34 = por %p32, %p33
      %p35 = scmp.ne.s32.totalorder %s24, %s25
      %p36 = scmp.eq.s32.totalorder %s16, 0
      %p37 = por %p35, %p36
      %p38 = scmp.ne.s32.totalorder %s24, %s25
      %p39 = scmp.eq.s32.totalorder %s17, 1
      %p40 = por %p38, %p39
      %p42 = scmp.ne.s32.totalorder %s25, %s41
      %p43 = scmp.eq.s32.totalorder %s17, 0
      %p44 = por %p42, %p43
      %s46 = sadd.s32 %s45, 1
      %p49 = scmp.eq.s32.totalorder %s11, 1
      %p50 = scmp.ne.s32.totalorder %s45, %s47
      %p51 = scmp.eq.s32.totalorder %s11, 0
      %p52 = por %p50, %p51
      %p53 = scmp.ne.s32.totalorder %s45, %s47
      %p54 = scmp.eq.s32.totalorder %s16, 1
      %p55 = por %p53, %p54
      %p56 = scmp.ne.s32.totalorder %s47, %s48
      %p57 = scmp.eq.s32.totalorder %s16, 0
      %p58 = por %p56, %p57
      %p59 = scmp.ne.s32.totalorder %s47, %s48
      %p60 = scmp.eq.s32.totalorder %s17, 1
      %p61 = por %p59, %p60
      %p63 = scmp.ne.s32.totalorder %s48, %s62
      %p64 = scmp.eq.s32.totalorder %s17, 0
      %p65 = por %p63, %p64
      %s67 = sadd.s32 %s66, 1
      %p70 = scmp.eq.s32.totalorder %s11, 1
      %p71 = scmp.ne.s32.totalorder %s66, %s68
      %p72 = scmp.eq.s32.totalorder %s11, 0
      %p73 = por %p71, %p72
      %p74 = scmp.ne.s32.totalorder %s66, %s68
      %p75 = scmp.eq.s32.totalorder %s16, 1
      %p76 = por %p74, %p75
      %p77 = scmp.ne.s32.totalorder %s68, %s69
      %p78 = scmp.eq.s32.totalorder %s16, 0
      %p79 = por %p77, %p78
      %p80 = scmp.ne.s32.totalorder %s68, %s69
      %p81 = scmp.eq.s32.totalorder %s17, 1
      %p82 = por %p80, %p81
      %p84 = scmp.ne.s32.totalorder %s69, %s83
      %p85 = scmp.eq.s32.totalorder %s17, 0
      %p86 = por %p84, %p85
      %s88 = sadd.s32 %s87, 1
      %p91 = scmp.eq.s32.totalorder %s11, 1
      %p92 = scmp.ne.s32.totalorder %s87, %s89
      %p93 = scmp.eq.s32.totalorder %s11, 0
      %p94 = por %p92, %p93
      %p95 = scmp.ne.s32.totalorder %s87, %s89
      %p96 = scmp.eq.s32.totalorder %s16, 1
      %p97 = por %p95, %p96
      %p98 = scmp.ne.s32.totalorder %s89, %s90
      %p99 = scmp.eq.s32.totalorder %s16, 0
      %p100 = por %p98, %p99
      %p101 = scmp.ne.s32.totalorder %s89, %s90
      %p102 = scmp.eq.s32.totalorder %s17, 1
      %p103 = por %p101, %p102
      %p105 = scmp.ne.s32.totalorder %s90, %s104
      %p106 = scmp.eq.s32.totalorder %s17, 0
      %p107 = por %p105, %p106
      %s109 = sadd.s32 %s108, 1
      %p112 = scmp.eq.s32.totalorder %s11, 1
      %p113 = scmp.ne.s32.totalorder %s108, %s110
      %p114 = scmp.eq.s32.totalorder %s11, 0
      %p115 = por %p113, %p114
      %p116 = scmp.ne.s32.totalorder %s108, %s110
      %p117 = scmp.eq.s32.totalorder %s16, 1
      %p118 = por %p116, %p117
      %p119 = scmp.ne.s32.totalorder %s110, %s111
      %p120 = scmp.eq.s32.totalorder %s16, 0
      %p121 = por %p119, %p120
      %p122 = scmp.ne.s32.totalorder %s110, %s111
      %p123 = scmp.eq.s32.totalorder %s17, 1
      %p124 = por %p122, %p123
      %p126 = scmp.ne.s32.totalorder %s111, %s125
      %p127 = scmp.eq.s32.totalorder %s17, 0
      %p128 = por %p126, %p127
      %s129 = ssub.s32 %s11, %s18
      %p130 = scmp.eq.s32.totalorder %s129, 0
      %s132 = sadd.s32 %s131, 1
      %s133 = scalar_select %p130, %s131, %s132
      %p136 = pneg %p130
      %p137 = scmp.eq.s32.totalorder %s11, 1
      %p138 = por %p136, %p137
      %p139 = scmp.ne.s32.totalorder %s131, %s134
      %p140 = scmp.eq.s32.totalorder %s11, 0
      %p141 = por %p139, %p140
      %p142 = scmp.ne.s32.totalorder %s131, %s134
      %p143 = scmp.eq.s32.totalorder %s16, 1
      %p144 = por %p142, %p143
      %p145 = scmp.ne.s32.totalorder %s134, %s135
      %p146 = scmp.eq.s32.totalorder %s16, 0
      %p147 = por %p145, %p146
      %p148 = scmp.ne.s32.totalorder %s134, %s135
      %p149 = scmp.eq.s32.totalorder %s17, 1
      %p150 = por %p148, %p149
      %p152 = scmp.ne.s32.totalorder %s135, %s151
      %p153 = scmp.eq.s32.totalorder %s17, 0
      %p154 = por %p152, %p153
      %p155 = scmp.le.s32.totalorder 1, %s11
      %p156 = scmp.lt.s32.totalorder %s11, 3
      %p157 = pnand %p155, %p156
      %p158 = pneg %p157
      // Predicated region
      $region9: #{a_call__.1} parent=5 // pred_check
        _
      $region10: #{a_call__.1} parent=5 // pred_check_branch
        %160 = sbr.rel (%p157) target = $region12
      $region11: #{a_call__.1} parent=5 // pred_region
        %s161 = ssub.s32 %s11, 1
        // Predicated region
        $region13: #{a_call__.1} parent=11 // pred_check
          %p162 = pneg %p58
        $region14: #{a_call__.1} parent=11 // pred_check_branch
          %164 = sbr.rel (%p162) target = $region16
        $region15: #{a_call__.1} parent=11 // pred_region
          _
        $region16: #{a_call__.1} parent=11 // pred_fallthru
          _
        // Predicated region
        $region17: #{a_call__.1} parent=11 // pred_check
          %p165 = pneg %p79
        $region18: #{a_call__.1} parent=11 // pred_check_branch
          %167 = sbr.rel (%p165) target = $region20
        $region19: #{a_call__.1} parent=11 // pred_region
          _
        $region20: #{a_call__.1} parent=11 // pred_fallthru
          _
        // Predicated region
        $region21: #{a_call__.1} parent=11 // pred_check
          %p168 = pneg %p100
        $region22: #{a_call__.1} parent=11 // pred_check_branch
          %170 = sbr.rel (%p168) target = $region24
        $region23: #{a_call__.1} parent=11 // pred_region
          _
        $region24: #{a_call__.1} parent=11 // pred_fallthru
          _
        // Predicated region
        $region25: #{a_call__.1} parent=11 // pred_check
          %p171 = pneg %p121
        $region26: #{a_call__.1} parent=11 // pred_check_branch
          %173 = sbr.rel (%p171) target = $region28
        $region27: #{a_call__.1} parent=11 // pred_region
          _
        $region28: #{a_call__.1} parent=11 // pred_fallthru
          _
      $region12: #{a_call__.1} parent=5 // pred_fallthru
        _
      %p174 = scmp.lt.s32.totalorder %s11, 2
      // Predicated region
      $region29: #{a_call__.1} parent=5 // pred_check
        %p175 = pneg %p174
      $region30: #{a_call__.1} parent=5 // pred_check_branch
        %177 = sbr.rel (%p175) target = $region32
      $region31: #{a_call__.1} parent=5 // pred_region
        // Predicated region
        $region33: #{a_call__.1} parent=31 // pred_check
          %p178 = pneg %p31
        $region34: #{a_call__.1} parent=31 // pred_check_branch
          %180 = sbr.rel (%p178) target = $region36
        $region35: #{a_call__.1} parent=31 // pred_region
          %s181 = sand.u32 %s21, 1
          %s182 = sand.u32 %s21, 1
          %s183 = smul.addr %s182, 1024
          %s184 = scalar_lea.vmem [#allocation2], %s183
          %s185 = smul.u32 32, %s11
          %s186 = smul.addr %s185, 4
          %s187 = scalar_lea.vmem %s0, %s186
          // Predicated region
          $region37: #{a_call__.1} parent=35 // pred_check
            _
          $region38: #{a_call__.1} parent=35 // pred_check_branch
            %189 = sbr.rel (0) target = $region40
          $region39: #{a_call__.1} parent=35 // pred_region
            // Predicated region
            $region41: #{a_call__.1} parent=39 // pred_check
              _
            $region42: #{a_call__.1} parent=39 // pred_check_branch
              %191 = sbr.rel target = $region44
            $region43: #{a_call__.1} parent=39 // pred_region
              // Predicated region
              $region56: #{a_call__.1} parent=43 // pred_check
                _
              $region57: #{a_call__.1} parent=43 // pred_check_branch
                %716 = sbr.rel (0) target = $region59
              $region58: #{a_call__.1} parent=43 // pred_region
                loop: start=0, step=1, limit=1
                $region60: #{a_call__.1} parent=58 // loop_pre_header
                  _
                $region61: #{a_call__.1} parent=58 // loop_header
                  %s718 = sphi 0, %s722
                  %p719 = scmp.ge.s32.totalorder %s718, 1
                  %s723 = sphi %s187, %s187
                  %s724 = sphi %s184, %s184
                $region62: #{a_call__.1} parent=58 // loop_header_branch
                  %721 = sbr.rel (%p719) target = $region66
                $region63: #{a_call__.1} parent=58 // loop_body
                  _
                $region64: #{a_call__.1} parent=58 // loop_footer
                  %s722 = sadd.s32 1, %s718
                $region65: #{a_call__.1} parent=58 // loop_footer_branch
                  %717 = sbr.rel target = $region61
                $region66: #{a_call__.1} parent=58 // loop_exit
                  _
                loop: start=0, step=1, limit=1
                $region67: #{a_call__.1} parent=58 // loop_pre_header
                  _
                $region68: #{a_call__.1} parent=58 // loop_header
                  %s727 = sphi 0, %s731
                  %p728 = scmp.ge.s32.totalorder %s727, 1
                  %s732 = sphi %s187, %s187
                  %s733 = sphi %s184, %s184
                $region69: #{a_call__.1} parent=58 // loop_header_branch
                  %730 = sbr.rel (%p728) target = $region73
                $region70: #{a_call__.1} parent=58 // loop_body
                  %v734 = vld [vmem:[%s732] sm:$0xf]
                  %735 = vst [vmem:[%s733] sm:$0xf] %v734
                  %v736 = vld [vmem:[%s732 + $0x4] sm:$0xf]
                  %737 = vst [vmem:[%s733 + $0x4] sm:$0xf] %v736
                  %v738 = vld [vmem:[%s732 + $0x8] sm:$0xf]
                  %739 = vst [vmem:[%s733 + $0x8] sm:$0xf] %v738
                  %v740 = vld [vmem:[%s732 + $0xc] sm:$0xf]
                  %741 = vst [vmem:[%s733 + $0xc] sm:$0xf] %v740
                  %v742 = vld [vmem:[%s732 + $0x10] sm:$0xf]
                  %743 = vst [vmem:[%s733 + $0x10] sm:$0xf] %v742
                  %v744 = vld [vmem:[%s732 + $0x14] sm:$0xf]
                  %745 = vst [vmem:[%s733 + $0x14] sm:$0xf] %v744
                  %v746 = vld [vmem:[%s732 + $0x18] sm:$0xf]
                  %747 = vst [vmem:[%s733 + $0x18] sm:$0xf] %v746
                  %v748 = vld [vmem:[%s732 + $0x1c] sm:$0xf]
                  %749 = vst [vmem:[%s733 + $0x1c] sm:$0xf] %v748
                  %v750 = vld [vmem:[%s732 + $0x20] sm:$0xf]
                  %751 = vst [vmem:[%s733 + $0x20] sm:$0xf] %v750
                  %v752 = vld [vmem:[%s732 + $0x24] sm:$0xf]
                  %753 = vst [vmem:[%s733 + $0x24] sm:$0xf] %v752
                  %v754 = vld [vmem:[%s732 + $0x28] sm:$0xf]
                  %755 = vst [vmem:[%s733 + $0x28] sm:$0xf] %v754
                  %v756 = vld [vmem:[%s732 + $0x2c] sm:$0xf]
                  %757 = vst [vmem:[%s733 + $0x2c] sm:$0xf] %v756
                  %v758 = vld [vmem:[%s732 + $0x30] sm:$0xf]
                  %759 = vst [vmem:[%s733 + $0x30] sm:$0xf] %v758
                  %v760 = vld [vmem:[%s732 + $0x34] sm:$0xf]
                  %761 = vst [vmem:[%s733 + $0x34] sm:$0xf] %v760
                  %v762 = vld [vmem:[%s732 + $0x38] sm:$0xf]
                  %763 = vst [vmem:[%s733 + $0x38] sm:$0xf] %v762
                  %v764 = vld [vmem:[%s732 + $0x3c] sm:$0xf]
                  %765 = vst [vmem:[%s733 + $0x3c] sm:$0xf] %v764
                  %v766 = vld [vmem:[%s732 + $0x40] sm:$0xf]
                  %767 = vst [vmem:[%s733 + $0x40] sm:$0xf] %v766
                  %v768 = vld [vmem:[%s732 + $0x44] sm:$0xf]
                  %769 = vst [vmem:[%s733 + $0x44] sm:$0xf] %v768
                  %v770 = vld [vmem:[%s732 + $0x48] sm:$0xf]
                  %771 = vst [vmem:[%s733 + $0x48] sm:$0xf] %v770
                  %v772 = vld [vmem:[%s732 + $0x4c] sm:$0xf]
                  %773 = vst [vmem:[%s733 + $0x4c] sm:$0xf] %v772
                  %v774 = vld [vmem:[%s732 + $0x50] sm:$0xf]
                  %775 = vst [vmem:[%s733 + $0x50] sm:$0xf] %v774
                  %v776 = vld [vmem:[%s732 + $0x54] sm:$0xf]
                  %777 = vst [vmem:[%s733 + $0x54] sm:$0xf] %v776
                  %v778 = vld [vmem:[%s732 + $0x58] sm:$0xf]
                  %779 = vst [vmem:[%s733 + $0x58] sm:$0xf] %v778
                  %v780 = vld [vmem:[%s732 + $0x5c] sm:$0xf]
                  %781 = vst [vmem:[%s733 + $0x5c] sm:$0xf] %v780
                  %v782 = vld [vmem:[%s732 + $0x60] sm:$0xf]
                  %783 = vst [vmem:[%s733 + $0x60] sm:$0xf] %v782
                  %v784 = vld [vmem:[%s732 + $0x64] sm:$0xf]
                  %785 = vst [vmem:[%s733 + $0x64] sm:$0xf] %v784
                  %v786 = vld [vmem:[%s732 + $0x68] sm:$0xf]
                  %787 = vst [vmem:[%s733 + $0x68] sm:$0xf] %v786
                  %v788 = vld [vmem:[%s732 + $0x6c] sm:$0xf]
                  %789 = vst [vmem:[%s733 + $0x6c] sm:$0xf] %v788
                  %v790 = vld [vmem:[%s732 + $0x70] sm:$0xf]
                  %791 = vst [vmem:[%s733 + $0x70] sm:$0xf] %v790
                  %v792 = vld [vmem:[%s732 + $0x74] sm:$0xf]
                  %793 = vst [vmem:[%s733 + $0x74] sm:$0xf] %v792
                  %v794 = vld [vmem:[%s732 + $0x78] sm:$0xf]
                  %795 = vst [vmem:[%s733 + $0x78] sm:$0xf] %v794
                  %v796 = vld [vmem:[%s732 + $0x7c] sm:$0xf]
                  %797 = vst [vmem:[%s733 + $0x7c] sm:$0xf] %v796
                  %v798 = vld [vmem:[%s732 + $0x100] sm:$0xf]
                  %799 = vst [vmem:[%s733 + $0x80] sm:$0xf] %v798
                  %v800 = vld [vmem:[%s732 + $0x104] sm:$0xf]
                  %801 = vst [vmem:[%s733 + $0x84] sm:$0xf] %v800
                  %v802 = vld [vmem:[%s732 + $0x108] sm:$0xf]
                  %803 = vst [vmem:[%s733 + $0x88] sm:$0xf] %v802
                  %v804 = vld [vmem:[%s732 + $0x10c] sm:$0xf]
                  %805 = vst [vmem:[%s733 + $0x8c] sm:$0xf] %v804
                  %v806 = vld [vmem:[%s732 + $0x110] sm:$0xf]
                  %807 = vst [vmem:[%s733 + $0x90] sm:$0xf] %v806
                  %v808 = vld [vmem:[%s732 + $0x114] sm:$0xf]
                  %809 = vst [vmem:[%s733 + $0x94] sm:$0xf] %v808
                  %v810 = vld [vmem:[%s732 + $0x118] sm:$0xf]
                  %811 = vst [vmem:[%s733 + $0x98] sm:$0xf] %v810
                  %v812 = vld [vmem:[%s732 + $0x11c] sm:$0xf]
                  %813 = vst [vmem:[%s733 + $0x9c] sm:$0xf] %v812
                  %v814 = vld [vmem:[%s732 + $0x120] sm:$0xf]
                  %815 = vst [vmem:[%s733 + $0xa0] sm:$0xf] %v814
                  %v816 = vld [vmem:[%s732 + $0x124] sm:$0xf]
                  %817 = vst [vmem:[%s733 + $0xa4] sm:$0xf] %v816
                  %v818 = vld [vmem:[%s732 + $0x128] sm:$0xf]
                  %819 = vst [vmem:[%s733 + $0xa8] sm:$0xf] %v818
                  %v820 = vld [vmem:[%s732 + $0x12c] sm:$0xf]
                  %821 = vst [vmem:[%s733 + $0xac] sm:$0xf] %v820
                  %v822 = vld [vmem:[%s732 + $0x130] sm:$0xf]
                  %823 = vst [vmem:[%s733 + $0xb0] sm:$0xf] %v822
                  %v824 = vld [vmem:[%s732 + $0x134] sm:$0xf]
                  %825 = vst [vmem:[%s733 + $0xb4] sm:$0xf] %v824
                  %v826 = vld [vmem:[%s732 + $0x138] sm:$0xf]
                  %827 = vst [vmem:[%s733 + $0xb8] sm:$0xf] %v826
                  %v828 = vld [vmem:[%s732 + $0x13c] sm:$0xf]
                  %829 = vst [vmem:[%s733 + $0xbc] sm:$0xf] %v828
                  %v830 = vld [vmem:[%s732 + $0x140] sm:$0xf]
                  %831 = vst [vmem:[%s733 + $0xc0] sm:$0xf] %v830
                  %v832 = vld [vmem:[%s732 + $0x144] sm:$0xf]
                  %833 = vst [vmem:[%s733 + $0xc4] sm:$0xf] %v832
                  %v834 = vld [vmem:[%s732 + $0x148] sm:$0xf]
                  %835 = vst [vmem:[%s733 + $0xc8] sm:$0xf] %v834
                  %v836 = vld [vmem:[%s732 + $0x14c] sm:$0xf]
                  %837 = vst [vmem:[%s733 + $0xcc] sm:$0xf] %v836
                  %v838 = vld [vmem:[%s732 + $0x150] sm:$0xf]
                  %839 = vst [vmem:[%s733 + $0xd0] sm:$0xf] %v838
                  %v840 = vld [vmem:[%s732 + $0x154] sm:$0xf]
                  %841 = vst [vmem:[%s733 + $0xd4] sm:$0xf] %v840
                  %v842 = vld [vmem:[%s732 + $0x158] sm:$0xf]
                  %843 = vst [vmem:[%s733 + $0xd8] sm:$0xf] %v842
                  %v844 = vld [vmem:[%s732 + $0x15c] sm:$0xf]
                  %845 = vst [vmem:[%s733 + $0xdc] sm:$0xf] %v844
                  %v846 = vld [vmem:[%s732 + $0x160] sm:$0xf]
                  %847 = vst [vmem:[%s733 + $0xe0] sm:$0xf] %v846
                  %v848 = vld [vmem:[%s732 + $0x164] sm:$0xf]
                  %849 = vst [vmem:[%s733 + $0xe4] sm:$0xf] %v848
                  %v850 = vld [vmem:[%s732 + $0x168] sm:$0xf]
                  %851 = vst [vmem:[%s733 + $0xe8] sm:$0xf] %v850
                  %v852 = vld [vmem:[%s732 + $0x16c] sm:$0xf]
                  %853 = vst [vmem:[%s733 + $0xec] sm:$0xf] %v852
                  %v854 = vld [vmem:[%s732 + $0x170] sm:$0xf]
                  %855 = vst [vmem:[%s733 + $0xf0] sm:$0xf] %v854
                  %v856 = vld [vmem:[%s732 + $0x174] sm:$0xf]
                  %857 = vst [vmem:[%s733 + $0xf4] sm:$0xf] %v856
                  %v858 = vld [vmem:[%s732 + $0x178] sm:$0xf]
                  %859 = vst [vmem:[%s733 + $0xf8] sm:$0xf] %v858
                  %v860 = vld [vmem:[%s732 + $0x17c] sm:$0xf]
                  %861 = vst [vmem:[%s733 + $0xfc] sm:$0xf] %v860
                  %v862 = vld [vmem:[%s732 + $0x200] sm:$0xf]
                  %863 = vst [vmem:[%s733 + $0x100] sm:$0xf] %v862
                  %v864 = vld [vmem:[%s732 + $0x204] sm:$0xf]
                  %865 = vst [vmem:[%s733 + $0x104] sm:$0xf] %v864
                  %v866 = vld [vmem:[%s732 + $0x208] sm:$0xf]
                  %867 = vst [vmem:[%s733 + $0x108] sm:$0xf] %v866
                  %v868 = vld [vmem:[%s732 + $0x20c] sm:$0xf]
                  %869 = vst [vmem:[%s733 + $0x10c] sm:$0xf] %v868
                  %v870 = vld [vmem:[%s732 + $0x210] sm:$0xf]
                  %871 = vst [vmem:[%s733 + $0x110] sm:$0xf] %v870
                  %v872 = vld [vmem:[%s732 + $0x214] sm:$0xf]
                  %873 = vst [vmem:[%s733 + $0x114] sm:$0xf] %v872
                  %v874 = vld [vmem:[%s732 + $0x218] sm:$0xf]
                  %875 = vst [vmem:[%s733 + $0x118] sm:$0xf] %v874
                  %v876 = vld [vmem:[%s732 + $0x21c] sm:$0xf]
                  %877 = vst [vmem:[%s733 + $0x11c] sm:$0xf] %v876
                  %v878 = vld [vmem:[%s732 + $0x220] sm:$0xf]
                  %879 = vst [vmem:[%s733 + $0x120] sm:$0xf] %v878
                  %v880 = vld [vmem:[%s732 + $0x224] sm:$0xf]
                  %881 = vst [vmem:[%s733 + $0x124] sm:$0xf] %v880
                  %v882 = vld [vmem:[%s732 + $0x228] sm:$0xf]
                  %883 = vst [vmem:[%s733 + $0x128] sm:$0xf] %v882
                  %v884 = vld [vmem:[%s732 + $0x22c] sm:$0xf]
                  %885 = vst [vmem:[%s733 + $0x12c] sm:$0xf] %v884
                  %v886 = vld [vmem:[%s732 + $0x230] sm:$0xf]
                  %887 = vst [vmem:[%s733 + $0x130] sm:$0xf] %v886
                  %v888 = vld [vmem:[%s732 + $0x234] sm:$0xf]
                  %889 = vst [vmem:[%s733 + $0x134] sm:$0xf] %v888
                  %v890 = vld [vmem:[%s732 + $0x238] sm:$0xf]
                  %891 = vst [vmem:[%s733 + $0x138] sm:$0xf] %v890
                  %v892 = vld [vmem:[%s732 + $0x23c] sm:$0xf]
                  %893 = vst [vmem:[%s733 + $0x13c] sm:$0xf] %v892
                  %v894 = vld [vmem:[%s732 + $0x240] sm:$0xf]
                  %895 = vst [vmem:[%s733 + $0x140] sm:$0xf] %v894
                  %v896 = vld [vmem:[%s732 + $0x244] sm:$0xf]
                  %897 = vst [vmem:[%s733 + $0x144] sm:$0xf] %v896
                  %v898 = vld [vmem:[%s732 + $0x248] sm:$0xf]
                  %899 = vst [vmem:[%s733 + $0x148] sm:$0xf] %v898
                  %v900 = vld [vmem:[%s732 + $0x24c] sm:$0xf]
                  %901 = vst [vmem:[%s733 + $0x14c] sm:$0xf] %v900
                  %v902 = vld [vmem:[%s732 + $0x250] sm:$0xf]
                  %903 = vst [vmem:[%s733 + $0x150] sm:$0xf] %v902
                  %v904 = vld [vmem:[%s732 + $0x254] sm:$0xf]
                  %905 = vst [vmem:[%s733 + $0x154] sm:$0xf] %v904
                  %v906 = vld [vmem:[%s732 + $0x258] sm:$0xf]
                  %907 = vst [vmem:[%s733 + $0x158] sm:$0xf] %v906
                  %v908 = vld [vmem:[%s732 + $0x25c] sm:$0xf]
                  %909 = vst [vmem:[%s733 + $0x15c] sm:$0xf] %v908
                  %v910 = vld [vmem:[%s732 + $0x260] sm:$0xf]
                  %911 = vst [vmem:[%s733 + $0x160] sm:$0xf] %v910
                  %v912 = vld [vmem:[%s732 + $0x264] sm:$0xf]
                  %913 = vst [vmem:[%s733 + $0x164] sm:$0xf] %v912
                  %v914 = vld [vmem:[%s732 + $0x268] sm:$0xf]
                  %915 = vst [vmem:[%s733 + $0x168] sm:$0xf] %v914
                  %v916 = vld [vmem:[%s732 + $0x26c] sm:$0xf]
                  %917 = vst [vmem:[%s733 + $0x16c] sm:$0xf] %v916
                  %v918 = vld [vmem:[%s732 + $0x270] sm:$0xf]
                  %919 = vst [vmem:[%s733 + $0x170] sm:$0xf] %v918
                  %v920 = vld [vmem:[%s732 + $0x274] sm:$0xf]
                  %921 = vst [vmem:[%s733 + $0x174] sm:$0xf] %v920
                  %v922 = vld [vmem:[%s732 + $0x278] sm:$0xf]
                  %923 = vst [vmem:[%s733 + $0x178] sm:$0xf] %v922
                  %v924 = vld [vmem:[%s732 + $0x27c] sm:$0xf]
                  %925 = vst [vmem:[%s733 + $0x17c] sm:$0xf] %v924
                  %v926 = vld [vmem:[%s732 + $0x300] sm:$0xf]
                  %927 = vst [vmem:[%s733 + $0x180] sm:$0xf] %v926
                  %v928 = vld [vmem:[%s732 + $0x304] sm:$0xf]
                  %929 = vst [vmem:[%s733 + $0x184] sm:$0xf] %v928
                  %v930 = vld [vmem:[%s732 + $0x308] sm:$0xf]
                  %931 = vst [vmem:[%s733 + $0x188] sm:$0xf] %v930
                  %v932 = vld [vmem:[%s732 + $0x30c] sm:$0xf]
                  %933 = vst [vmem:[%s733 + $0x18c] sm:$0xf] %v932
                  %v934 = vld [vmem:[%s732 + $0x310] sm:$0xf]
                  %935 = vst [vmem:[%s733 + $0x190] sm:$0xf] %v934
                  %v936 = vld [vmem:[%s732 + $0x314] sm:$0xf]
                  %937 = vst [vmem:[%s733 + $0x194] sm:$0xf] %v936
                  %v938 = vld [vmem:[%s732 + $0x318] sm:$0xf]
                  %939 = vst [vmem:[%s733 + $0x198] sm:$0xf] %v938
                  %v940 = vld [vmem:[%s732 + $0x31c] sm:$0xf]
                  %941 = vst [vmem:[%s733 + $0x19c] sm:$0xf] %v940
                  %v942 = vld [vmem:[%s732 + $0x320] sm:$0xf]
                  %943 = vst [vmem:[%s733 + $0x1a0] sm:$0xf] %v942
                  %v944 = vld [vmem:[%s732 + $0x324] sm:$0xf]
                  %945 = vst [vmem:[%s733 + $0x1a4] sm:$0xf] %v944
                  %v946 = vld [vmem:[%s732 + $0x328] sm:$0xf]
                  %947 = vst [vmem:[%s733 + $0x1a8] sm:$0xf] %v946
                  %v948 = vld [vmem:[%s732 + $0x32c] sm:$0xf]
                  %949 = vst [vmem:[%s733 + $0x1ac] sm:$0xf] %v948
                  %v950 = vld [vmem:[%s732 + $0x330] sm:$0xf]
                  %951 = vst [vmem:[%s733 + $0x1b0] sm:$0xf] %v950
                  %v952 = vld [vmem:[%s732 + $0x334] sm:$0xf]
                  %953 = vst [vmem:[%s733 + $0x1b4] sm:$0xf] %v952
                  %v954 = vld [vmem:[%s732 + $0x338] sm:$0xf]
                  %955 = vst [vmem:[%s733 + $0x1b8] sm:$0xf] %v954
                  %v956 = vld [vmem:[%s732 + $0x33c] sm:$0xf]
                  %957 = vst [vmem:[%s733 + $0x1bc] sm:$0xf] %v956
                  %v958 = vld [vmem:[%s732 + $0x340] sm:$0xf]
                  %959 = vst [vmem:[%s733 + $0x1c0] sm:$0xf] %v958
                  %v960 = vld [vmem:[%s732 + $0x344] sm:$0xf]
                  %961 = vst [vmem:[%s733 + $0x1c4] sm:$0xf] %v960
                  %v962 = vld [vmem:[%s732 + $0x348] sm:$0xf]
                  %963 = vst [vmem:[%s733 + $0x1c8] sm:$0xf] %v962
                  %v964 = vld [vmem:[%s732 + $0x34c] sm:$0xf]
                  %965 = vst [vmem:[%s733 + $0x1cc] sm:$0xf] %v964
                  %v966 = vld [vmem:[%s732 + $0x350] sm:$0xf]
                  %967 = vst [vmem:[%s733 + $0x1d0] sm:$0xf] %v966
                  %v968 = vld [vmem:[%s732 + $0x354] sm:$0xf]
                  %969 = vst [vmem:[%s733 + $0x1d4] sm:$0xf] %v968
                  %v970 = vld [vmem:[%s732 + $0x358] sm:$0xf]
                  %971 = vst [vmem:[%s733 + $0x1d8] sm:$0xf] %v970
                  %v972 = vld [vmem:[%s732 + $0x35c] sm:$0xf]
                  %973 = vst [vmem:[%s733 + $0x1dc] sm:$0xf] %v972
                  %v974 = vld [vmem:[%s732 + $0x360] sm:$0xf]
                  %975 = vst [vmem:[%s733 + $0x1e0] sm:$0xf] %v974
                  %v976 = vld [vmem:[%s732 + $0x364] sm:$0xf]
                  %977 = vst [vmem:[%s733 + $0x1e4] sm:$0xf] %v976
                  %v978 = vld [vmem:[%s732 + $0x368] sm:$0xf]
                  %979 = vst [vmem:[%s733 + $0x1e8] sm:$0xf] %v978
                  %v980 = vld [vmem:[%s732 + $0x36c] sm:$0xf]
                  %981 = vst [vmem:[%s733 + $0x1ec] sm:$0xf] %v980
                  %v982 = vld [vmem:[%s732 + $0x370] sm:$0xf]
                  %983 = vst [vmem:[%s733 + $0x1f0] sm:$0xf] %v982
                  %v984 = vld [vmem:[%s732 + $0x374] sm:$0xf]
                  %985 = vst [vmem:[%s733 + $0x1f4] sm:$0xf] %v984
                  %v986 = vld [vmem:[%s732 + $0x378] sm:$0xf]
                  %987 = vst [vmem:[%s733 + $0x1f8] sm:$0xf] %v986
                  %v988 = vld [vmem:[%s732 + $0x37c] sm:$0xf]
                  %989 = vst [vmem:[%s733 + $0x1fc] sm:$0xf] %v988
                  %v990 = vld [vmem:[%s732 + $0x400] sm:$0xf]
                  %991 = vst [vmem:[%s733 + $0x200] sm:$0xf] %v990
                  %v992 = vld [vmem:[%s732 + $0x404] sm:$0xf]
                  %993 = vst [vmem:[%s733 + $0x204] sm:$0xf] %v992
                  %v994 = vld [vmem:[%s732 + $0x408] sm:$0xf]
                  %995 = vst [vmem:[%s733 + $0x208] sm:$0xf] %v994
                  %v996 = vld [vmem:[%s732 + $0x40c] sm:$0xf]
                  %997 = vst [vmem:[%s733 + $0x20c] sm:$0xf] %v996
                  %v998 = vld [vmem:[%s732 + $0x410] sm:$0xf]
                  %999 = vst [vmem:[%s733 + $0x210] sm:$0xf] %v998
                  %v1000 = vld [vmem:[%s732 + $0x414] sm:$0xf]
                  %1001 = vst [vmem:[%s733 + $0x214] sm:$0xf] %v1000
                  %v1002 = vld [vmem:[%s732 + $0x418] sm:$0xf]
                  %1003 = vst [vmem:[%s733 + $0x218] sm:$0xf] %v1002
                  %v1004 = vld [vmem:[%s732 + $0x41c] sm:$0xf]
                  %1005 = vst [vmem:[%s733 + $0x21c] sm:$0xf] %v1004
                  %v1006 = vld [vmem:[%s732 + $0x420] sm:$0xf]
                  %1007 = vst [vmem:[%s733 + $0x220] sm:$0xf] %v1006
                  %v1008 = vld [vmem:[%s732 + $0x424] sm:$0xf]
                  %1009 = vst [vmem:[%s733 + $0x224] sm:$0xf] %v1008
                  %v1010 = vld [vmem:[%s732 + $0x428] sm:$0xf]
                  %1011 = vst [vmem:[%s733 + $0x228] sm:$0xf] %v1010
                  %v1012 = vld [vmem:[%s732 + $0x42c] sm:$0xf]
                  %1013 = vst [vmem:[%s733 + $0x22c] sm:$0xf] %v1012
                  %v1014 = vld [vmem:[%s732 + $0x430] sm:$0xf]
                  %1015 = vst [vmem:[%s733 + $0x230] sm:$0xf] %v1014
                  %v1016 = vld [vmem:[%s732 + $0x434] sm:$0xf]
                  %1017 = vst [vmem:[%s733 + $0x234] sm:$0xf] %v1016
                  %v1018 = vld [vmem:[%s732 + $0x438] sm:$0xf]
                  %1019 = vst [vmem:[%s733 + $0x238] sm:$0xf] %v1018
                  %v1020 = vld [vmem:[%s732 + $0x43c] sm:$0xf]
                  %1021 = vst [vmem:[%s733 + $0x23c] sm:$0xf] %v1020
                  %v1022 = vld [vmem:[%s732 + $0x440] sm:$0xf]
                  %1023 = vst [vmem:[%s733 + $0x240] sm:$0xf] %v1022
                  %v1024 = vld [vmem:[%s732 + $0x444] sm:$0xf]
                  %1025 = vst [vmem:[%s733 + $0x244] sm:$0xf] %v1024
                  %v1026 = vld [vmem:[%s732 + $0x448] sm:$0xf]
                  %1027 = vst [vmem:[%s733 + $0x248] sm:$0xf] %v1026
                  %v1028 = vld [vmem:[%s732 + $0x44c] sm:$0xf]
                  %1029 = vst [vmem:[%s733 + $0x24c] sm:$0xf] %v1028
                  %v1030 = vld [vmem:[%s732 + $0x450] sm:$0xf]
                  %1031 = vst [vmem:[%s733 + $0x250] sm:$0xf] %v1030
                  %v1032 = vld [vmem:[%s732 + $0x454] sm:$0xf]
                  %1033 = vst [vmem:[%s733 + $0x254] sm:$0xf] %v1032
                  %v1034 = vld [vmem:[%s732 + $0x458] sm:$0xf]
                  %1035 = vst [vmem:[%s733 + $0x258] sm:$0xf] %v1034
                  %v1036 = vld [vmem:[%s732 + $0x45c] sm:$0xf]
                  %1037 = vst [vmem:[%s733 + $0x25c] sm:$0xf] %v1036
                  %v1038 = vld [vmem:[%s732 + $0x460] sm:$0xf]
                  %1039 = vst [vmem:[%s733 + $0x260] sm:$0xf] %v1038
                  %v1040 = vld [vmem:[%s732 + $0x464] sm:$0xf]
                  %1041 = vst [vmem:[%s733 + $0x264] sm:$0xf] %v1040
                  %v1042 = vld [vmem:[%s732 + $0x468] sm:$0xf]
                  %1043 = vst [vmem:[%s733 + $0x268] sm:$0xf] %v1042
                  %v1044 = vld [vmem:[%s732 + $0x46c] sm:$0xf]
                  %1045 = vst [vmem:[%s733 + $0x26c] sm:$0xf] %v1044
                  %v1046 = vld [vmem:[%s732 + $0x470] sm:$0xf]
                  %1047 = vst [vmem:[%s733 + $0x270] sm:$0xf] %v1046
                  %v1048 = vld [vmem:[%s732 + $0x474] sm:$0xf]
                  %1049 = vst [vmem:[%s733 + $0x274] sm:$0xf] %v1048
                  %v1050 = vld [vmem:[%s732 + $0x478] sm:$0xf]
                  %1051 = vst [vmem:[%s733 + $0x278] sm:$0xf] %v1050
                  %v1052 = vld [vmem:[%s732 + $0x47c] sm:$0xf]
                  %1053 = vst [vmem:[%s733 + $0x27c] sm:$0xf] %v1052
                  %v1054 = vld [vmem:[%s732 + $0x500] sm:$0xf]
                  %1055 = vst [vmem:[%s733 + $0x280] sm:$0xf] %v1054
                  %v1056 = vld [vmem:[%s732 + $0x504] sm:$0xf]
                  %1057 = vst [vmem:[%s733 + $0x284] sm:$0xf] %v1056
                  %v1058 = vld [vmem:[%s732 + $0x508] sm:$0xf]
                  %1059 = vst [vmem:[%s733 + $0x288] sm:$0xf] %v1058
                  %v1060 = vld [vmem:[%s732 + $0x50c] sm:$0xf]
                  %1061 = vst [vmem:[%s733 + $0x28c] sm:$0xf] %v1060
                  %v1062 = vld [vmem:[%s732 + $0x510] sm:$0xf]
                  %1063 = vst [vmem:[%s733 + $0x290] sm:$0xf] %v1062
                  %v1064 = vld [vmem:[%s732 + $0x514] sm:$0xf]
                  %1065 = vst [vmem:[%s733 + $0x294] sm:$0xf] %v1064
                  %v1066 = vld [vmem:[%s732 + $0x518] sm:$0xf]
                  %1067 = vst [vmem:[%s733 + $0x298] sm:$0xf] %v1066
                  %v1068 = vld [vmem:[%s732 + $0x51c] sm:$0xf]
                  %1069 = vst [vmem:[%s733 + $0x29c] sm:$0xf] %v1068
                  %v1070 = vld [vmem:[%s732 + $0x520] sm:$0xf]
                  %1071 = vst [vmem:[%s733 + $0x2a0] sm:$0xf] %v1070
                  %v1072 = vld [vmem:[%s732 + $0x524] sm:$0xf]
                  %1073 = vst [vmem:[%s733 + $0x2a4] sm:$0xf] %v1072
                  %v1074 = vld [vmem:[%s732 + $0x528] sm:$0xf]
                  %1075 = vst [vmem:[%s733 + $0x2a8] sm:$0xf] %v1074
                  %v1076 = vld [vmem:[%s732 + $0x52c] sm:$0xf]
                  %1077 = vst [vmem:[%s733 + $0x2ac] sm:$0xf] %v1076
                  %v1078 = vld [vmem:[%s732 + $0x530] sm:$0xf]
                  %1079 = vst [vmem:[%s733 + $0x2b0] sm:$0xf] %v1078
                  %v1080 = vld [vmem:[%s732 + $0x534] sm:$0xf]
                  %1081 = vst [vmem:[%s733 + $0x2b4] sm:$0xf] %v1080
                  %v1082 = vld [vmem:[%s732 + $0x538] sm:$0xf]
                  %1083 = vst [vmem:[%s733 + $0x2b8] sm:$0xf] %v1082
                  %v1084 = vld [vmem:[%s732 + $0x53c] sm:$0xf]
                  %1085 = vst [vmem:[%s733 + $0x2bc] sm:$0xf] %v1084
                  %v1086 = vld [vmem:[%s732 + $0x540] sm:$0xf]
                  %1087 = vst [vmem:[%s733 + $0x2c0] sm:$0xf] %v1086
                  %v1088 = vld [vmem:[%s732 + $0x544] sm:$0xf]
                  %1089 = vst [vmem:[%s733 + $0x2c4] sm:$0xf] %v1088
                  %v1090 = vld [vmem:[%s732 + $0x548] sm:$0xf]
                  %1091 = vst [vmem:[%s733 + $0x2c8] sm:$0xf] %v1090
                  %v1092 = vld [vmem:[%s732 + $0x54c] sm:$0xf]
                  %1093 = vst [vmem:[%s733 + $0x2cc] sm:$0xf] %v1092
                  %v1094 = vld [vmem:[%s732 + $0x550] sm:$0xf]
                  %1095 = vst [vmem:[%s733 + $0x2d0] sm:$0xf] %v1094
                  %v1096 = vld [vmem:[%s732 + $0x554] sm:$0xf]
                  %1097 = vst [vmem:[%s733 + $0x2d4] sm:$0xf] %v1096
                  %v1098 = vld [vmem:[%s732 + $0x558] sm:$0xf]
                  %1099 = vst [vmem:[%s733 + $0x2d8] sm:$0xf] %v1098
                  %v1100 = vld [vmem:[%s732 + $0x55c] sm:$0xf]
                  %1101 = vst [vmem:[%s733 + $0x2dc] sm:$0xf] %v1100
                  %v1102 = vld [vmem:[%s732 + $0x560] sm:$0xf]
                  %1103 = vst [vmem:[%s733 + $0x2e0] sm:$0xf] %v1102
                  %v1104 = vld [vmem:[%s732 + $0x564] sm:$0xf]
                  %1105 = vst [vmem:[%s733 + $0x2e4] sm:$0xf] %v1104
                  %v1106 = vld [vmem:[%s732 + $0x568] sm:$0xf]
                  %1107 = vst [vmem:[%s733 + $0x2e8] sm:$0xf] %v1106
                  %v1108 = vld [vmem:[%s732 + $0x56c] sm:$0xf]
                  %1109 = vst [vmem:[%s733 + $0x2ec] sm:$0xf] %v1108
                  %v1110 = vld [vmem:[%s732 + $0x570] sm:$0xf]
                  %1111 = vst [vmem:[%s733 + $0x2f0] sm:$0xf] %v1110
                  %v1112 = vld [vmem:[%s732 + $0x574] sm:$0xf]
                  %1113 = vst [vmem:[%s733 + $0x2f4] sm:$0xf] %v1112
                  %v1114 = vld [vmem:[%s732 + $0x578] sm:$0xf]
                  %1115 = vst [vmem:[%s733 + $0x2f8] sm:$0xf] %v1114
                  %v1116 = vld [vmem:[%s732 + $0x57c] sm:$0xf]
                  %1117 = vst [vmem:[%s733 + $0x2fc] sm:$0xf] %v1116
                  %v1118 = vld [vmem:[%s732 + $0x600] sm:$0xf]
                  %1119 = vst [vmem:[%s733 + $0x300] sm:$0xf] %v1118
                  %v1120 = vld [vmem:[%s732 + $0x604] sm:$0xf]
                  %1121 = vst [vmem:[%s733 + $0x304] sm:$0xf] %v1120
                  %v1122 = vld [vmem:[%s732 + $0x608] sm:$0xf]
                  %1123 = vst [vmem:[%s733 + $0x308] sm:$0xf] %v1122
                  %v1124 = vld [vmem:[%s732 + $0x60c] sm:$0xf]
                  %1125 = vst [vmem:[%s733 + $0x30c] sm:$0xf] %v1124
                  %v1126 = vld [vmem:[%s732 + $0x610] sm:$0xf]
                  %1127 = vst [vmem:[%s733 + $0x310] sm:$0xf] %v1126
                  %v1128 = vld [vmem:[%s732 + $0x614] sm:$0xf]
                  %1129 = vst [vmem:[%s733 + $0x314] sm:$0xf] %v1128
                  %v1130 = vld [vmem:[%s732 + $0x618] sm:$0xf]
                  %1131 = vst [vmem:[%s733 + $0x318] sm:$0xf] %v1130
                  %v1132 = vld [vmem:[%s732 + $0x61c] sm:$0xf]
                  %1133 = vst [vmem:[%s733 + $0x31c] sm:$0xf] %v1132
                  %v1134 = vld [vmem:[%s732 + $0x620] sm:$0xf]
                  %1135 = vst [vmem:[%s733 + $0x320] sm:$0xf] %v1134
                  %v1136 = vld [vmem:[%s732 + $0x624] sm:$0xf]
                  %1137 = vst [vmem:[%s733 + $0x324] sm:$0xf] %v1136
                  %v1138 = vld [vmem:[%s732 + $0x628] sm:$0xf]
                  %1139 = vst [vmem:[%s733 + $0x328] sm:$0xf] %v1138
                  %v1140 = vld [vmem:[%s732 + $0x62c] sm:$0xf]
                  %1141 = vst [vmem:[%s733 + $0x32c] sm:$0xf] %v1140
                  %v1142 = vld [vmem:[%s732 + $0x630] sm:$0xf]
                  %1143 = vst [vmem:[%s733 + $0x330] sm:$0xf] %v1142
                  %v1144 = vld [vmem:[%s732 + $0x634] sm:$0xf]
                  %1145 = vst [vmem:[%s733 + $0x334] sm:$0xf] %v1144
                  %v1146 = vld [vmem:[%s732 + $0x638] sm:$0xf]
                  %1147 = vst [vmem:[%s733 + $0x338] sm:$0xf] %v1146
                  %v1148 = vld [vmem:[%s732 + $0x63c] sm:$0xf]
                  %1149 = vst [vmem:[%s733 + $0x33c] sm:$0xf] %v1148
                  %v1150 = vld [vmem:[%s732 + $0x640] sm:$0xf]
                  %1151 = vst [vmem:[%s733 + $0x340] sm:$0xf] %v1150
                  %v1152 = vld [vmem:[%s732 + $0x644] sm:$0xf]
                  %1153 = vst [vmem:[%s733 + $0x344] sm:$0xf] %v1152
                  %v1154 = vld [vmem:[%s732 + $0x648] sm:$0xf]
                  %1155 = vst [vmem:[%s733 + $0x348] sm:$0xf] %v1154
                  %v1156 = vld [vmem:[%s732 + $0x64c] sm:$0xf]
                  %1157 = vst [vmem:[%s733 + $0x34c] sm:$0xf] %v1156
                  %v1158 = vld [vmem:[%s732 + $0x650] sm:$0xf]
                  %1159 = vst [vmem:[%s733 + $0x350] sm:$0xf] %v1158
                  %v1160 = vld [vmem:[%s732 + $0x654] sm:$0xf]
                  %1161 = vst [vmem:[%s733 + $0x354] sm:$0xf] %v1160
                  %v1162 = vld [vmem:[%s732 + $0x658] sm:$0xf]
                  %1163 = vst [vmem:[%s733 + $0x358] sm:$0xf] %v1162
                  %v1164 = vld [vmem:[%s732 + $0x65c] sm:$0xf]
                  %1165 = vst [vmem:[%s733 + $0x35c] sm:$0xf] %v1164
                  %v1166 = vld [vmem:[%s732 + $0x660] sm:$0xf]
                  %1167 = vst [vmem:[%s733 + $0x360] sm:$0xf] %v1166
                  %v1168 = vld [vmem:[%s732 + $0x664] sm:$0xf]
                  %1169 = vst [vmem:[%s733 + $0x364] sm:$0xf] %v1168
                  %v1170 = vld [vmem:[%s732 + $0x668] sm:$0xf]
                  %1171 = vst [vmem:[%s733 + $0x368] sm:$0xf] %v1170
                  %v1172 = vld [vmem:[%s732 + $0x66c] sm:$0xf]
                  %1173 = vst [vmem:[%s733 + $0x36c] sm:$0xf] %v1172
                  %v1174 = vld [vmem:[%s732 + $0x670] sm:$0xf]
                  %1175 = vst [vmem:[%s733 + $0x370] sm:$0xf] %v1174
                  %v1176 = vld [vmem:[%s732 + $0x674] sm:$0xf]
                  %1177 = vst [vmem:[%s733 + $0x374] sm:$0xf] %v1176
                  %v1178 = vld [vmem:[%s732 + $0x678] sm:$0xf]
                  %1179 = vst [vmem:[%s733 + $0x378] sm:$0xf] %v1178
                  %v1180 = vld [vmem:[%s732 + $0x67c] sm:$0xf]
                  %1181 = vst [vmem:[%s733 + $0x37c] sm:$0xf] %v1180
                  %v1182 = vld [vmem:[%s732 + $0x700] sm:$0xf]
                  %1183 = vst [vmem:[%s733 + $0x380] sm:$0xf] %v1182
                  %v1184 = vld [vmem:[%s732 + $0x704] sm:$0xf]
                  %1185 = vst [vmem:[%s733 + $0x384] sm:$0xf] %v1184
                  %v1186 = vld [vmem:[%s732 + $0x708] sm:$0xf]
                  %1187 = vst [vmem:[%s733 + $0x388] sm:$0xf] %v1186
                  %v1188 = vld [vmem:[%s732 + $0x70c] sm:$0xf]
                  %1189 = vst [vmem:[%s733 + $0x38c] sm:$0xf] %v1188
                  %v1190 = vld [vmem:[%s732 + $0x710] sm:$0xf]
                  %1191 = vst [vmem:[%s733 + $0x390] sm:$0xf] %v1190
                  %v1192 = vld [vmem:[%s732 + $0x714] sm:$0xf]
                  %1193 = vst [vmem:[%s733 + $0x394] sm:$0xf] %v1192
                  %v1194 = vld [vmem:[%s732 + $0x718] sm:$0xf]
                  %1195 = vst [vmem:[%s733 + $0x398] sm:$0xf] %v1194
                  %v1196 = vld [vmem:[%s732 + $0x71c] sm:$0xf]
                  %1197 = vst [vmem:[%s733 + $0x39c] sm:$0xf] %v1196
                  %v1198 = vld [vmem:[%s732 + $0x720] sm:$0xf]
                  %1199 = vst [vmem:[%s733 + $0x3a0] sm:$0xf] %v1198
                  %v1200 = vld [vmem:[%s732 + $0x724] sm:$0xf]
                  %1201 = vst [vmem:[%s733 + $0x3a4] sm:$0xf] %v1200
                  %v1202 = vld [vmem:[%s732 + $0x728] sm:$0xf]
                  %1203 = vst [vmem:[%s733 + $0x3a8] sm:$0xf] %v1202
                  %v1204 = vld [vmem:[%s732 + $0x72c] sm:$0xf]
                  %1205 = vst [vmem:[%s733 + $0x3ac] sm:$0xf] %v1204
                  %v1206 = vld [vmem:[%s732 + $0x730] sm:$0xf]
                  %1207 = vst [vmem:[%s733 + $0x3b0] sm:$0xf] %v1206
                  %v1208 = vld [vmem:[%s732 + $0x734] sm:$0xf]
                  %1209 = vst [vmem:[%s733 + $0x3b4] sm:$0xf] %v1208
                  %v1210 = vld [vmem:[%s732 + $0x738] sm:$0xf]
                  %1211 = vst [vmem:[%s733 + $0x3b8] sm:$0xf] %v1210
                  %v1212 = vld [vmem:[%s732 + $0x73c] sm:$0xf]
                  %1213 = vst [vmem:[%s733 + $0x3bc] sm:$0xf] %v1212
                  %v1214 = vld [vmem:[%s732 + $0x740] sm:$0xf]
                  %1215 = vst [vmem:[%s733 + $0x3c0] sm:$0xf] %v1214
                  %v1216 = vld [vmem:[%s732 + $0x744] sm:$0xf]
                  %1217 = vst [vmem:[%s733 + $0x3c4] sm:$0xf] %v1216
                  %v1218 = vld [vmem:[%s732 + $0x748] sm:$0xf]
                  %1219 = vst [vmem:[%s733 + $0x3c8] sm:$0xf] %v1218
                  %v1220 = vld [vmem:[%s732 + $0x74c] sm:$0xf]
                  %1221 = vst [vmem:[%s733 + $0x3cc] sm:$0xf] %v1220
                  %v1222 = vld [vmem:[%s732 + $0x750] sm:$0xf]
                  %1223 = vst [vmem:[%s733 + $0x3d0] sm:$0xf] %v1222
                  %v1224 = vld [vmem:[%s732 + $0x754] sm:$0xf]
                  %1225 = vst [vmem:[%s733 + $0x3d4] sm:$0xf] %v1224
                  %v1226 = vld [vmem:[%s732 + $0x758] sm:$0xf]
                  %1227 = vst [vmem:[%s733 + $0x3d8] sm:$0xf] %v1226
                  %v1228 = vld [vmem:[%s732 + $0x75c] sm:$0xf]
                  %1229 = vst [vmem:[%s733 + $0x3dc] sm:$0xf] %v1228
                  %v1230 = vld [vmem:[%s732 + $0x760] sm:$0xf]
                  %1231 = vst [vmem:[%s733 + $0x3e0] sm:$0xf] %v1230
                  %v1232 = vld [vmem:[%s732 + $0x764] sm:$0xf]
                  %1233 = vst [vmem:[%s733 + $0x3e4] sm:$0xf] %v1232
                  %v1234 = vld [vmem:[%s732 + $0x768] sm:$0xf]
                  %1235 = vst [vmem:[%s733 + $0x3e8] sm:$0xf] %v1234
                  %v1236 = vld [vmem:[%s732 + $0x76c] sm:$0xf]
                  %1237 = vst [vmem:[%s733 + $0x3ec] sm:$0xf] %v1236
                  %v1238 = vld [vmem:[%s732 + $0x770] sm:$0xf]
                  %1239 = vst [vmem:[%s733 + $0x3f0] sm:$0xf] %v1238
                  %v1240 = vld [vmem:[%s732 + $0x774] sm:$0xf]
                  %1241 = vst [vmem:[%s733 + $0x3f4] sm:$0xf] %v1240
                  %v1242 = vld [vmem:[%s732 + $0x778] sm:$0xf]
                  %1243 = vst [vmem:[%s733 + $0x3f8] sm:$0xf] %v1242
                  %v1244 = vld [vmem:[%s732 + $0x77c] sm:$0xf]
                  %1245 = vst [vmem:[%s733 + $0x3fc] sm:$0xf] %v1244
                $region71: #{a_call__.1} parent=58 // loop_footer
                  %s731 = sadd.s32 1, %s727
                $region72: #{a_call__.1} parent=58 // loop_footer_branch
                  %726 = sbr.rel target = $region68
                $region73: #{a_call__.1} parent=58 // loop_exit
                  _
              $region59: #{a_call__.1} parent=43 // pred_fallthru
                _
            $region44: #{a_call__.1} parent=39 // pred_fallthru
              _
            // Predicated region
            $region45: #{a_call__.1} parent=39 // pred_check
              _
            $region46: #{a_call__.1} parent=39 // pred_check_branch
              %193 = sbr.rel (0) target = $region48
            $region47: #{a_call__.1} parent=39 // pred_region
              loop: start=0, step=1, limit=1
              $region49: #{a_call__.1} parent=47 // loop_pre_header
                _
              $region50: #{a_call__.1} parent=47 // loop_header
                %s196 = sphi 0, %s200
                %p197 = scmp.ge.s32.totalorder %s196, 1
                %s201 = sphi %s187, %s187
                %s202 = sphi %s184, %s184
              $region51: #{a_call__.1} parent=47 // loop_header_branch
                %199 = sbr.rel (%p197) target = $region55
              $region52: #{a_call__.1} parent=47 // loop_body
                %v203 = vld [vmem:[%s201] sm:$0xf]
                %204 = vst [vmem:[%s202] sm:$0xf] %v203
                %v205 = vld [vmem:[%s201 + $0x4] sm:$0xf]
                %206 = vst [vmem:[%s202 + $0x4] sm:$0xf] %v205
                %v207 = vld [vmem:[%s201 + $0x8] sm:$0xf]
                %208 = vst [vmem:[%s202 + $0x8] sm:$0xf] %v207
                %v209 = vld [vmem:[%s201 + $0xc] sm:$0xf]
                %210 = vst [vmem:[%s202 + $0xc] sm:$0xf] %v209
                %v211 = vld [vmem:[%s201 + $0x10] sm:$0xf]
                %212 = vst [vmem:[%s202 + $0x10] sm:$0xf] %v211
                %v213 = vld [vmem:[%s201 + $0x14] sm:$0xf]
                %214 = vst [vmem:[%s202 + $0x14] sm:$0xf] %v213
                %v215 = vld [vmem:[%s201 + $0x18] sm:$0xf]
                %216 = vst [vmem:[%s202 + $0x18] sm:$0xf] %v215
                %v217 = vld [vmem:[%s201 + $0x1c] sm:$0xf]
                %218 = vst [vmem:[%s202 + $0x1c] sm:$0xf] %v217
                %v219 = vld [vmem:[%s201 + $0x20] sm:$0xf]
                %220 = vst [vmem:[%s202 + $0x20] sm:$0xf] %v219
                %v221 = vld [vmem:[%s201 + $0x24] sm:$0xf]
                %222 = vst [vmem:[%s202 + $0x24] sm:$0xf] %v221
                %v223 = vld [vmem:[%s201 + $0x28] sm:$0xf]
                %224 = vst [vmem:[%s202 + $0x28] sm:$0xf] %v223
                %v225 = vld [vmem:[%s201 + $0x2c] sm:$0xf]
                %226 = vst [vmem:[%s202 + $0x2c] sm:$0xf] %v225
                %v227 = vld [vmem:[%s201 + $0x30] sm:$0xf]
                %228 = vst [vmem:[%s202 + $0x30] sm:$0xf] %v227
                %v229 = vld [vmem:[%s201 + $0x34] sm:$0xf]
                %230 = vst [vmem:[%s202 + $0x34] sm:$0xf] %v229
                %v231 = vld [vmem:[%s201 + $0x38] sm:$0xf]
                %232 = vst [vmem:[%s202 + $0x38] sm:$0xf] %v231
                %v233 = vld [vmem:[%s201 + $0x3c] sm:$0xf]
                %234 = vst [vmem:[%s202 + $0x3c] sm:$0xf] %v233
                %v235 = vld [vmem:[%s201 + $0x40] sm:$0xf]
                %236 = vst [vmem:[%s202 + $0x40] sm:$0xf] %v235
                %v237 = vld [vmem:[%s201 + $0x44] sm:$0xf]
                %238 = vst [vmem:[%s202 + $0x44] sm:$0xf] %v237
                %v239 = vld [vmem:[%s201 + $0x48] sm:$0xf]
                %240 = vst [vmem:[%s202 + $0x48] sm:$0xf] %v239
                %v241 = vld [vmem:[%s201 + $0x4c] sm:$0xf]
                %242 = vst [vmem:[%s202 + $0x4c] sm:$0xf] %v241
                %v243 = vld [vmem:[%s201 + $0x50] sm:$0xf]
                %244 = vst [vmem:[%s202 + $0x50] sm:$0xf] %v243
                %v245 = vld [vmem:[%s201 + $0x54] sm:$0xf]
                %246 = vst [vmem:[%s202 + $0x54] sm:$0xf] %v245
                %v247 = vld [vmem:[%s201 + $0x58] sm:$0xf]
                %248 = vst [vmem:[%s202 + $0x58] sm:$0xf] %v247
                %v249 = vld [vmem:[%s201 + $0x5c] sm:$0xf]
                %250 = vst [vmem:[%s202 + $0x5c] sm:$0xf] %v249
                %v251 = vld [vmem:[%s201 + $0x60] sm:$0xf]
                %252 = vst [vmem:[%s202 + $0x60] sm:$0xf] %v251
                %v253 = vld [vmem:[%s201 + $0x64] sm:$0xf]
                %254 = vst [vmem:[%s202 + $0x64] sm:$0xf] %v253
                %v255 = vld [vmem:[%s201 + $0x68] sm:$0xf]
                %256 = vst [vmem:[%s202 + $0x68] sm:$0xf] %v255
                %v257 = vld [vmem:[%s201 + $0x6c] sm:$0xf]
                %258 = vst [vmem:[%s202 + $0x6c] sm:$0xf] %v257
                %v259 = vld [vmem:[%s201 + $0x70] sm:$0xf]
                %260 = vst [vmem:[%s202 + $0x70] sm:$0xf] %v259
                %v261 = vld [vmem:[%s201 + $0x74] sm:$0xf]
                %262 = vst [vmem:[%s202 + $0x74] sm:$0xf] %v261
                %v263 = vld [vmem:[%s201 + $0x78] sm:$0xf]
                %264 = vst [vmem:[%s202 + $0x78] sm:$0xf] %v263
                %v265 = vld [vmem:[%s201 + $0x7c] sm:$0xf]
                %266 = vst [vmem:[%s202 + $0x7c] sm:$0xf] %v265
                %v267 = vld [vmem:[%s201 + $0x100] sm:$0xf]
                %268 = vst [vmem:[%s202 + $0x80] sm:$0xf] %v267
                %v269 = vld [vmem:[%s201 + $0x104] sm:$0xf]
                %270 = vst [vmem:[%s202 + $0x84] sm:$0xf] %v269
                %v271 = vld [vmem:[%s201 + $0x108] sm:$0xf]
                %272 = vst [vmem:[%s202 + $0x88] sm:$0xf] %v271
                %v273 = vld [vmem:[%s201 + $0x10c] sm:$0xf]
                %274 = vst [vmem:[%s202 + $0x8c] sm:$0xf] %v273
                %v275 = vld [vmem:[%s201 + $0x110] sm:$0xf]
                %276 = vst [vmem:[%s202 + $0x90] sm:$0xf] %v275
                %v277 = vld [vmem:[%s201 + $0x114] sm:$0xf]
                %278 = vst [vmem:[%s202 + $0x94] sm:$0xf] %v277
                %v279 = vld [vmem:[%s201 + $0x118] sm:$0xf]
                %280 = vst [vmem:[%s202 + $0x98] sm:$0xf] %v279
                %v281 = vld [vmem:[%s201 + $0x11c] sm:$0xf]
                %282 = vst [vmem:[%s202 + $0x9c] sm:$0xf] %v281
                %v283 = vld [vmem:[%s201 + $0x120] sm:$0xf]
                %284 = vst [vmem:[%s202 + $0xa0] sm:$0xf] %v283
                %v285 = vld [vmem:[%s201 + $0x124] sm:$0xf]
                %286 = vst [vmem:[%s202 + $0xa4] sm:$0xf] %v285
                %v287 = vld [vmem:[%s201 + $0x128] sm:$0xf]
                %288 = vst [vmem:[%s202 + $0xa8] sm:$0xf] %v287
                %v289 = vld [vmem:[%s201 + $0x12c] sm:$0xf]
                %290 = vst [vmem:[%s202 + $0xac] sm:$0xf] %v289
                %v291 = vld [vmem:[%s201 + $0x130] sm:$0xf]
                %292 = vst [vmem:[%s202 + $0xb0] sm:$0xf] %v291
                %v293 = vld [vmem:[%s201 + $0x134] sm:$0xf]
                %294 = vst [vmem:[%s202 + $0xb4] sm:$0xf] %v293
                %v295 = vld [vmem:[%s201 + $0x138] sm:$0xf]
                %296 = vst [vmem:[%s202 + $0xb8] sm:$0xf] %v295
                %v297 = vld [vmem:[%s201 + $0x13c] sm:$0xf]
                %298 = vst [vmem:[%s202 + $0xbc] sm:$0xf] %v297
                %v299 = vld [vmem:[%s201 + $0x140] sm:$0xf]
                %300 = vst [vmem:[%s202 + $0xc0] sm:$0xf] %v299
                %v301 = vld [vmem:[%s201 + $0x144] sm:$0xf]
                %302 = vst [vmem:[%s202 + $0xc4] sm:$0xf] %v301
                %v303 = vld [vmem:[%s201 + $0x148] sm:$0xf]
                %304 = vst [vmem:[%s202 + $0xc8] sm:$0xf] %v303
                %v305 = vld [vmem:[%s201 + $0x14c] sm:$0xf]
                %306 = vst [vmem:[%s202 + $0xcc] sm:$0xf] %v305
                %v307 = vld [vmem:[%s201 + $0x150] sm:$0xf]
                %308 = vst [vmem:[%s202 + $0xd0] sm:$0xf] %v307
                %v309 = vld [vmem:[%s201 + $0x154] sm:$0xf]
                %310 = vst [vmem:[%s202 + $0xd4] sm:$0xf] %v309
                %v311 = vld [vmem:[%s201 + $0x158] sm:$0xf]
                %312 = vst [vmem:[%s202 + $0xd8] sm:$0xf] %v311
                %v313 = vld [vmem:[%s201 + $0x15c] sm:$0xf]
                %314 = vst [vmem:[%s202 + $0xdc] sm:$0xf] %v313
                %v315 = vld [vmem:[%s201 + $0x160] sm:$0xf]
                %316 = vst [vmem:[%s202 + $0xe0] sm:$0xf] %v315
                %v317 = vld [vmem:[%s201 + $0x164] sm:$0xf]
                %318 = vst [vmem:[%s202 + $0xe4] sm:$0xf] %v317
                %v319 = vld [vmem:[%s201 + $0x168] sm:$0xf]
                %320 = vst [vmem:[%s202 + $0xe8] sm:$0xf] %v319
                %v321 = vld [vmem:[%s201 + $0x16c] sm:$0xf]
                %322 = vst [vmem:[%s202 + $0xec] sm:$0xf] %v321
                %v323 = vld [vmem:[%s201 + $0x170] sm:$0xf]
                %324 = vst [vmem:[%s202 + $0xf0] sm:$0xf] %v323
                %v325 = vld [vmem:[%s201 + $0x174] sm:$0xf]
                %326 = vst [vmem:[%s202 + $0xf4] sm:$0xf] %v325
                %v327 = vld [vmem:[%s201 + $0x178] sm:$0xf]
                %328 = vst [vmem:[%s202 + $0xf8] sm:$0xf] %v327
                %v329 = vld [vmem:[%s201 + $0x17c] sm:$0xf]
                %330 = vst [vmem:[%s202 + $0xfc] sm:$0xf] %v329
                %v331 = vld [vmem:[%s201 + $0x200] sm:$0xf]
                %332 = vst [vmem:[%s202 + $0x100] sm:$0xf] %v331
                %v333 = vld [vmem:[%s201 + $0x204] sm:$0xf]
                %334 = vst [vmem:[%s202 + $0x104] sm:$0xf] %v333
                %v335 = vld [vmem:[%s201 + $0x208] sm:$0xf]
                %336 = vst [vmem:[%s202 + $0x108] sm:$0xf] %v335
                %v337 = vld [vmem:[%s201 + $0x20c] sm:$0xf]
                %338 = vst [vmem:[%s202 + $0x10c] sm:$0xf] %v337
                %v339 = vld [vmem:[%s201 + $0x210] sm:$0xf]
                %340 = vst [vmem:[%s202 + $0x110] sm:$0xf] %v339
                %v341 = vld [vmem:[%s201 + $0x214] sm:$0xf]
                %342 = vst [vmem:[%s202 + $0x114] sm:$0xf] %v341
                %v343 = vld [vmem:[%s201 + $0x218] sm:$0xf]
                %344 = vst [vmem:[%s202 + $0x118] sm:$0xf] %v343
                %v345 = vld [vmem:[%s201 + $0x21c] sm:$0xf]
                %346 = vst [vmem:[%s202 + $0x11c] sm:$0xf] %v345
                %v347 = vld [vmem:[%s201 + $0x220] sm:$0xf]
                %348 = vst [vmem:[%s202 + $0x120] sm:$0xf] %v347
                %v349 = vld [vmem:[%s201 + $0x224] sm:$0xf]
                %350 = vst [vmem:[%s202 + $0x124] sm:$0xf] %v349
                %v351 = vld [vmem:[%s201 + $0x228] sm:$0xf]
                %352 = vst [vmem:[%s202 + $0x128] sm:$0xf] %v351
                %v353 = vld [vmem:[%s201 + $0x22c] sm:$0xf]
                %354 = vst [vmem:[%s202 + $0x12c] sm:$0xf] %v353
                %v355 = vld [vmem:[%s201 + $0x230] sm:$0xf]
                %356 = vst [vmem:[%s202 + $0x130] sm:$0xf] %v355
                %v357 = vld [vmem:[%s201 + $0x234] sm:$0xf]
                %358 = vst [vmem:[%s202 + $0x134] sm:$0xf] %v357
                %v359 = vld [vmem:[%s201 + $0x238] sm:$0xf]
                %360 = vst [vmem:[%s202 + $0x138] sm:$0xf] %v359
                %v361 = vld [vmem:[%s201 + $0x23c] sm:$0xf]
                %362 = vst [vmem:[%s202 + $0x13c] sm:$0xf] %v361
                %v363 = vld [vmem:[%s201 + $0x240] sm:$0xf]
                %364 = vst [vmem:[%s202 + $0x140] sm:$0xf] %v363
                %v365 = vld [vmem:[%s201 + $0x244] sm:$0xf]
                %366 = vst [vmem:[%s202 + $0x144] sm:$0xf] %v365
                %v367 = vld [vmem:[%s201 + $0x248] sm:$0xf]
                %368 = vst [vmem:[%s202 + $0x148] sm:$0xf] %v367
                %v369 = vld [vmem:[%s201 + $0x24c] sm:$0xf]
                %370 = vst [vmem:[%s202 + $0x14c] sm:$0xf] %v369
                %v371 = vld [vmem:[%s201 + $0x250] sm:$0xf]
                %372 = vst [vmem:[%s202 + $0x150] sm:$0xf] %v371
                %v373 = vld [vmem:[%s201 + $0x254] sm:$0xf]
                %374 = vst [vmem:[%s202 + $0x154] sm:$0xf] %v373
                %v375 = vld [vmem:[%s201 + $0x258] sm:$0xf]
                %376 = vst [vmem:[%s202 + $0x158] sm:$0xf] %v375
                %v377 = vld [vmem:[%s201 + $0x25c] sm:$0xf]
                %378 = vst [vmem:[%s202 + $0x15c] sm:$0xf] %v377
                %v379 = vld [vmem:[%s201 + $0x260] sm:$0xf]
                %380 = vst [vmem:[%s202 + $0x160] sm:$0xf] %v379
                %v381 = vld [vmem:[%s201 + $0x264] sm:$0xf]
                %382 = vst [vmem:[%s202 + $0x164] sm:$0xf] %v381
                %v383 = vld [vmem:[%s201 + $0x268] sm:$0xf]
                %384 = vst [vmem:[%s202 + $0x168] sm:$0xf] %v383
                %v385 = vld [vmem:[%s201 + $0x26c] sm:$0xf]
                %386 = vst [vmem:[%s202 + $0x16c] sm:$0xf] %v385
                %v387 = vld [vmem:[%s201 + $0x270] sm:$0xf]
                %388 = vst [vmem:[%s202 + $0x170] sm:$0xf] %v387
                %v389 = vld [vmem:[%s201 + $0x274] sm:$0xf]
                %390 = vst [vmem:[%s202 + $0x174] sm:$0xf] %v389
                %v391 = vld [vmem:[%s201 + $0x278] sm:$0xf]
                %392 = vst [vmem:[%s202 + $0x178] sm:$0xf] %v391
                %v393 = vld [vmem:[%s201 + $0x27c] sm:$0xf]
                %394 = vst [vmem:[%s202 + $0x17c] sm:$0xf] %v393
                %v395 = vld [vmem:[%s201 + $0x300] sm:$0xf]
                %396 = vst [vmem:[%s202 + $0x180] sm:$0xf] %v395
                %v397 = vld [vmem:[%s201 + $0x304] sm:$0xf]
                %398 = vst [vmem:[%s202 + $0x184] sm:$0xf] %v397
                %v399 = vld [vmem:[%s201 + $0x308] sm:$0xf]
                %400 = vst [vmem:[%s202 + $0x188] sm:$0xf] %v399
                %v401 = vld [vmem:[%s201 + $0x30c] sm:$0xf]
                %402 = vst [vmem:[%s202 + $0x18c] sm:$0xf] %v401
                %v403 = vld [vmem:[%s201 + $0x310] sm:$0xf]
                %404 = vst [vmem:[%s202 + $0x190] sm:$0xf] %v403
                %v405 = vld [vmem:[%s201 + $0x314] sm:$0xf]
                %406 = vst [vmem:[%s202 + $0x194] sm:$0xf] %v405
                %v407 = vld [vmem:[%s201 + $0x318] sm:$0xf]
                %408 = vst [vmem:[%s202 + $0x198] sm:$0xf] %v407
                %v409 = vld [vmem:[%s201 + $0x31c] sm:$0xf]
                %410 = vst [vmem:[%s202 + $0x19c] sm:$0xf] %v409
                %v411 = vld [vmem:[%s201 + $0x320] sm:$0xf]
                %412 = vst [vmem:[%s202 + $0x1a0] sm:$0xf] %v411
                %v413 = vld [vmem:[%s201 + $0x324] sm:$0xf]
                %414 = vst [vmem:[%s202 + $0x1a4] sm:$0xf] %v413
                %v415 = vld [vmem:[%s201 + $0x328] sm:$0xf]
                %416 = vst [vmem:[%s202 + $0x1a8] sm:$0xf] %v415
                %v417 = vld [vmem:[%s201 + $0x32c] sm:$0xf]
                %418 = vst [vmem:[%s202 + $0x1ac] sm:$0xf] %v417
                %v419 = vld [vmem:[%s201 + $0x330] sm:$0xf]
                %420 = vst [vmem:[%s202 + $0x1b0] sm:$0xf] %v419
                %v421 = vld [vmem:[%s201 + $0x334] sm:$0xf]
                %422 = vst [vmem:[%s202 + $0x1b4] sm:$0xf] %v421
                %v423 = vld [vmem:[%s201 + $0x338] sm:$0xf]
                %424 = vst [vmem:[%s202 + $0x1b8] sm:$0xf] %v423
                %v425 = vld [vmem:[%s201 + $0x33c] sm:$0xf]
                %426 = vst [vmem:[%s202 + $0x1bc] sm:$0xf] %v425
                %v427 = vld [vmem:[%s201 + $0x340] sm:$0xf]
                %428 = vst [vmem:[%s202 + $0x1c0] sm:$0xf] %v427
                %v429 = vld [vmem:[%s201 + $0x344] sm:$0xf]
                %430 = vst [vmem:[%s202 + $0x1c4] sm:$0xf] %v429
                %v431 = vld [vmem:[%s201 + $0x348] sm:$0xf]
                %432 = vst [vmem:[%s202 + $0x1c8] sm:$0xf] %v431
                %v433 = vld [vmem:[%s201 + $0x34c] sm:$0xf]
                %434 = vst [vmem:[%s202 + $0x1cc] sm:$0xf] %v433
                %v435 = vld [vmem:[%s201 + $0x350] sm:$0xf]
                %436 = vst [vmem:[%s202 + $0x1d0] sm:$0xf] %v435
                %v437 = vld [vmem:[%s201 + $0x354] sm:$0xf]
                %438 = vst [vmem:[%s202 + $0x1d4] sm:$0xf] %v437
                %v439 = vld [vmem:[%s201 + $0x358] sm:$0xf]
                %440 = vst [vmem:[%s202 + $0x1d8] sm:$0xf] %v439
                %v441 = vld [vmem:[%s201 + $0x35c] sm:$0xf]
                %442 = vst [vmem:[%s202 + $0x1dc] sm:$0xf] %v441
                %v443 = vld [vmem:[%s201 + $0x360] sm:$0xf]
                %444 = vst [vmem:[%s202 + $0x1e0] sm:$0xf] %v443
                %v445 = vld [vmem:[%s201 + $0x364] sm:$0xf]
                %446 = vst [vmem:[%s202 + $0x1e4] sm:$0xf] %v445
                %v447 = vld [vmem:[%s201 + $0x368] sm:$0xf]
                %448 = vst [vmem:[%s202 + $0x1e8] sm:$0xf] %v447
                %v449 = vld [vmem:[%s201 + $0x36c] sm:$0xf]
                %450 = vst [vmem:[%s202 + $0x1ec] sm:$0xf] %v449
                %v451 = vld [vmem:[%s201 + $0x370] sm:$0xf]
                %452 = vst [vmem:[%s202 + $0x1f0] sm:$0xf] %v451
                %v453 = vld [vmem:[%s201 + $0x374] sm:$0xf]
                %454 = vst [vmem:[%s202 + $0x1f4] sm:$0xf] %v453
                %v455 = vld [vmem:[%s201 + $0x378] sm:$0xf]
                %456 = vst [vmem:[%s202 + $0x1f8] sm:$0xf] %v455
                %v457 = vld [vmem:[%s201 + $0x37c] sm:$0xf]
                %458 = vst [vmem:[%s202 + $0x1fc] sm:$0xf] %v457
                %v459 = vld [vmem:[%s201 + $0x400] sm:$0xf]
                %460 = vst [vmem:[%s202 + $0x200] sm:$0xf] %v459
                %v461 = vld [vmem:[%s201 + $0x404] sm:$0xf]
                %462 = vst [vmem:[%s202 + $0x204] sm:$0xf] %v461
                %v463 = vld [vmem:[%s201 + $0x408] sm:$0xf]
                %464 = vst [vmem:[%s202 + $0x208] sm:$0xf] %v463
                %v465 = vld [vmem:[%s201 + $0x40c] sm:$0xf]
                %466 = vst [vmem:[%s202 + $0x20c] sm:$0xf] %v465
                %v467 = vld [vmem:[%s201 + $0x410] sm:$0xf]
                %468 = vst [vmem:[%s202 + $0x210] sm:$0xf] %v467
                %v469 = vld [vmem:[%s201 + $0x414] sm:$0xf]
                %470 = vst [vmem:[%s202 + $0x214] sm:$0xf] %v469
                %v471 = vld [vmem:[%s201 + $0x418] sm:$0xf]
                %472 = vst [vmem:[%s202 + $0x218] sm:$0xf] %v471
                %v473 = vld [vmem:[%s201 + $0x41c] sm:$0xf]
                %474 = vst [vmem:[%s202 + $0x21c] sm:$0xf] %v473
                %v475 = vld [vmem:[%s201 + $0x420] sm:$0xf]
                %476 = vst [vmem:[%s202 + $0x220] sm:$0xf] %v475
                %v477 = vld [vmem:[%s201 + $0x424] sm:$0xf]
                %478 = vst [vmem:[%s202 + $0x224] sm:$0xf] %v477
                %v479 = vld [vmem:[%s201 + $0x428] sm:$0xf]
                %480 = vst [vmem:[%s202 + $0x228] sm:$0xf] %v479
                %v481 = vld [vmem:[%s201 + $0x42c] sm:$0xf]
                %482 = vst [vmem:[%s202 + $0x22c] sm:$0xf] %v481
                %v483 = vld [vmem:[%s201 + $0x430] sm:$0xf]
                %484 = vst [vmem:[%s202 + $0x230] sm:$0xf] %v483
                %v485 = vld [vmem:[%s201 + $0x434] sm:$0xf]
                %486 = vst [vmem:[%s202 + $0x234] sm:$0xf] %v485
                %v487 = vld [vmem:[%s201 + $0x438] sm:$0xf]
                %488 = vst [vmem:[%s202 + $0x238] sm:$0xf] %v487
                %v489 = vld [vmem:[%s201 + $0x43c] sm:$0xf]
                %490 = vst [vmem:[%s202 + $0x23c] sm:$0xf] %v489
                %v491 = vld [vmem:[%s201 + $0x440] sm:$0xf]
                %492 = vst [vmem:[%s202 + $0x240] sm:$0xf] %v491
                %v493 = vld [vmem:[%s201 + $0x444] sm:$0xf]
                %494 = vst [vmem:[%s202 + $0x244] sm:$0xf] %v493
                %v495 = vld [vmem:[%s201 + $0x448] sm:$0xf]
                %496 = vst [vmem:[%s202 + $0x248] sm:$0xf] %v495
                %v497 = vld [vmem:[%s201 + $0x44c] sm:$0xf]
                %498 = vst [vmem:[%s202 + $0x24c] sm:$0xf] %v497
                %v499 = vld [vmem:[%s201 + $0x450] sm:$0xf]
                %500 = vst [vmem:[%s202 + $0x250] sm:$0xf] %v499
                %v501 = vld [vmem:[%s201 + $0x454] sm:$0xf]
                %502 = vst [vmem:[%s202 + $0x254] sm:$0xf] %v501
                %v503 = vld [vmem:[%s201 + $0x458] sm:$0xf]
                %504 = vst [vmem:[%s202 + $0x258] sm:$0xf] %v503
                %v505 = vld [vmem:[%s201 + $0x45c] sm:$0xf]
                %506 = vst [vmem:[%s202 + $0x25c] sm:$0xf] %v505
                %v507 = vld [vmem:[%s201 + $0x460] sm:$0xf]
                %508 = vst [vmem:[%s202 + $0x260] sm:$0xf] %v507
                %v509 = vld [vmem:[%s201 + $0x464] sm:$0xf]
                %510 = vst [vmem:[%s202 + $0x264] sm:$0xf] %v509
                %v511 = vld [vmem:[%s201 + $0x468] sm:$0xf]
                %512 = vst [vmem:[%s202 + $0x268] sm:$0xf] %v511
                %v513 = vld [vmem:[%s201 + $0x46c] sm:$0xf]
                %514 = vst [vmem:[%s202 + $0x26c] sm:$0xf] %v513
                %v515 = vld [vmem:[%s201 + $0x470] sm:$0xf]
                %516 = vst [vmem:[%s202 + $0x270] sm:$0xf] %v515
                %v517 = vld [vmem:[%s201 + $0x474] sm:$0xf]
                %518 = vst [vmem:[%s202 + $0x274] sm:$0xf] %v517
                %v519 = vld [vmem:[%s201 + $0x478] sm:$0xf]
                %520 = vst [vmem:[%s202 + $0x278] sm:$0xf] %v519
                %v521 = vld [vmem:[%s201 + $0x47c] sm:$0xf]
                %522 = vst [vmem:[%s202 + $0x27c] sm:$0xf] %v521
                %v523 = vld [vmem:[%s201 + $0x500] sm:$0xf]
                %524 = vst [vmem:[%s202 + $0x280] sm:$0xf] %v523
                %v525 = vld [vmem:[%s201 + $0x504] sm:$0xf]
                %526 = vst [vmem:[%s202 + $0x284] sm:$0xf] %v525
                %v527 = vld [vmem:[%s201 + $0x508] sm:$0xf]
                %528 = vst [vmem:[%s202 + $0x288] sm:$0xf] %v527
                %v529 = vld [vmem:[%s201 + $0x50c] sm:$0xf]
                %530 = vst [vmem:[%s202 + $0x28c] sm:$0xf] %v529
                %v531 = vld [vmem:[%s201 + $0x510] sm:$0xf]
                %532 = vst [vmem:[%s202 + $0x290] sm:$0xf] %v531
                %v533 = vld [vmem:[%s201 + $0x514] sm:$0xf]
                %534 = vst [vmem:[%s202 + $0x294] sm:$0xf] %v533
                %v535 = vld [vmem:[%s201 + $0x518] sm:$0xf]
                %536 = vst [vmem:[%s202 + $0x298] sm:$0xf] %v535
                %v537 = vld [vmem:[%s201 + $0x51c] sm:$0xf]
                %538 = vst [vmem:[%s202 + $0x29c] sm:$0xf] %v537
                %v539 = vld [vmem:[%s201 + $0x520] sm:$0xf]
                %540 = vst [vmem:[%s202 + $0x2a0] sm:$0xf] %v539
                %v541 = vld [vmem:[%s201 + $0x524] sm:$0xf]
                %542 = vst [vmem:[%s202 + $0x2a4] sm:$0xf] %v541
                %v543 = vld [vmem:[%s201 + $0x528] sm:$0xf]
                %544 = vst [vmem:[%s202 + $0x2a8] sm:$0xf] %v543
                %v545 = vld [vmem:[%s201 + $0x52c] sm:$0xf]
                %546 = vst [vmem:[%s202 + $0x2ac] sm:$0xf] %v545
                %v547 = vld [vmem:[%s201 + $0x530] sm:$0xf]
                %548 = vst [vmem:[%s202 + $0x2b0] sm:$0xf] %v547
                %v549 = vld [vmem:[%s201 + $0x534] sm:$0xf]
                %550 = vst [vmem:[%s202 + $0x2b4] sm:$0xf] %v549
                %v551 = vld [vmem:[%s201 + $0x538] sm:$0xf]
                %552 = vst [vmem:[%s202 + $0x2b8] sm:$0xf] %v551
                %v553 = vld [vmem:[%s201 + $0x53c] sm:$0xf]
                %554 = vst [vmem:[%s202 + $0x2bc] sm:$0xf] %v553
                %v555 = vld [vmem:[%s201 + $0x540] sm:$0xf]
                %556 = vst [vmem:[%s202 + $0x2c0] sm:$0xf] %v555
                %v557 = vld [vmem:[%s201 + $0x544] sm:$0xf]
                %558 = vst [vmem:[%s202 + $0x2c4] sm:$0xf] %v557
                %v559 = vld [vmem:[%s201 + $0x548] sm:$0xf]
                %560 = vst [vmem:[%s202 + $0x2c8] sm:$0xf] %v559
                %v561 = vld [vmem:[%s201 + $0x54c] sm:$0xf]
                %562 = vst [vmem:[%s202 + $0x2cc] sm:$0xf] %v561
                %v563 = vld [vmem:[%s201 + $0x550] sm:$0xf]
                %564 = vst [vmem:[%s202 + $0x2d0] sm:$0xf] %v563
                %v565 = vld [vmem:[%s201 + $0x554] sm:$0xf]
                %566 = vst [vmem:[%s202 + $0x2d4] sm:$0xf] %v565
                %v567 = vld [vmem:[%s201 + $0x558] sm:$0xf]
                %568 = vst [vmem:[%s202 + $0x2d8] sm:$0xf] %v567
                %v569 = vld [vmem:[%s201 + $0x55c] sm:$0xf]
                %570 = vst [vmem:[%s202 + $0x2dc] sm:$0xf] %v569
                %v571 = vld [vmem:[%s201 + $0x560] sm:$0xf]
                %572 = vst [vmem:[%s202 + $0x2e0] sm:$0xf] %v571
                %v573 = vld [vmem:[%s201 + $0x564] sm:$0xf]
                %574 = vst [vmem:[%s202 + $0x2e4] sm:$0xf] %v573
                %v575 = vld [vmem:[%s201 + $0x568] sm:$0xf]
                %576 = vst [vmem:[%s202 + $0x2e8] sm:$0xf] %v575
                %v577 = vld [vmem:[%s201 + $0x56c] sm:$0xf]
                %578 = vst [vmem:[%s202 + $0x2ec] sm:$0xf] %v577
                %v579 = vld [vmem:[%s201 + $0x570] sm:$0xf]
                %580 = vst [vmem:[%s202 + $0x2f0] sm:$0xf] %v579
                %v581 = vld [vmem:[%s201 + $0x574] sm:$0xf]
                %582 = vst [vmem:[%s202 + $0x2f4] sm:$0xf] %v581
                %v583 = vld [vmem:[%s201 + $0x578] sm:$0xf]
                %584 = vst [vmem:[%s202 + $0x2f8] sm:$0xf] %v583
                %v585 = vld [vmem:[%s201 + $0x57c] sm:$0xf]
                %586 = vst [vmem:[%s202 + $0x2fc] sm:$0xf] %v585
                %v587 = vld [vmem:[%s201 + $0x600] sm:$0xf]
                %588 = vst [vmem:[%s202 + $0x300] sm:$0xf] %v587
                %v589 = vld [vmem:[%s201 + $0x604] sm:$0xf]
                %590 = vst [vmem:[%s202 + $0x304] sm:$0xf] %v589
                %v591 = vld [vmem:[%s201 + $0x608] sm:$0xf]
                %592 = vst [vmem:[%s202 + $0x308] sm:$0xf] %v591
                %v593 = vld [vmem:[%s201 + $0x60c] sm:$0xf]
                %594 = vst [vmem:[%s202 + $0x30c] sm:$0xf] %v593
                %v595 = vld [vmem:[%s201 + $0x610] sm:$0xf]
                %596 = vst [vmem:[%s202 + $0x310] sm:$0xf] %v595
                %v597 = vld [vmem:[%s201 + $0x614] sm:$0xf]
                %598 = vst [vmem:[%s202 + $0x314] sm:$0xf] %v597
                %v599 = vld [vmem:[%s201 + $0x618] sm:$0xf]
                %600 = vst [vmem:[%s202 + $0x318] sm:$0xf] %v599
                %v601 = vld [vmem:[%s201 + $0x61c] sm:$0xf]
                %602 = vst [vmem:[%s202 + $0x31c] sm:$0xf] %v601
                %v603 = vld [vmem:[%s201 + $0x620] sm:$0xf]
                %604 = vst [vmem:[%s202 + $0x320] sm:$0xf] %v603
                %v605 = vld [vmem:[%s201 + $0x624] sm:$0xf]
                %606 = vst [vmem:[%s202 + $0x324] sm:$0xf] %v605
                %v607 = vld [vmem:[%s201 + $0x628] sm:$0xf]
                %608 = vst [vmem:[%s202 + $0x328] sm:$0xf] %v607
                %v609 = vld [vmem:[%s201 + $0x62c] sm:$0xf]
                %610 = vst [vmem:[%s202 + $0x32c] sm:$0xf] %v609
                %v611 = vld [vmem:[%s201 + $0x630] sm:$0xf]
                %612 = vst [vmem:[%s202 + $0x330] sm:$0xf] %v611
                %v613 = vld [vmem:[%s201 + $0x634] sm:$0xf]
                %614 = vst [vmem:[%s202 + $0x334] sm:$0xf] %v613
                %v615 = vld [vmem:[%s201 + $0x638] sm:$0xf]
                %616 = vst [vmem:[%s202 + $0x338] sm:$0xf] %v615
                %v617 = vld [vmem:[%s201 + $0x63c] sm:$0xf]
                %618 = vst [vmem:[%s202 + $0x33c] sm:$0xf] %v617
                %v619 = vld [vmem:[%s201 + $0x640] sm:$0xf]
                %620 = vst [vmem:[%s202 + $0x340] sm:$0xf] %v619
                %v621 = vld [vmem:[%s201 + $0x644] sm:$0xf]
                %622 = vst [vmem:[%s202 + $0x344] sm:$0xf] %v621
                %v623 = vld [vmem:[%s201 + $0x648] sm:$0xf]
                %624 = vst [vmem:[%s202 + $0x348] sm:$0xf] %v623
                %v625 = vld [vmem:[%s201 + $0x64c] sm:$0xf]
                %626 = vst [vmem:[%s202 + $0x34c] sm:$0xf] %v625
                %v627 = vld [vmem:[%s201 + $0x650] sm:$0xf]
                %628 = vst [vmem:[%s202 + $0x350] sm:$0xf] %v627
                %v629 = vld [vmem:[%s201 + $0x654] sm:$0xf]
                %630 = vst [vmem:[%s202 + $0x354] sm:$0xf] %v629
                %v631 = vld [vmem:[%s201 + $0x658] sm:$0xf]
                %632 = vst [vmem:[%s202 + $0x358] sm:$0xf] %v631
                %v633 = vld [vmem:[%s201 + $0x65c] sm:$0xf]
                %634 = vst [vmem:[%s202 + $0x35c] sm:$0xf] %v633
                %v635 = vld [vmem:[%s201 + $0x660] sm:$0xf]
                %636 = vst [vmem:[%s202 + $0x360] sm:$0xf] %v635
                %v637 = vld [vmem:[%s201 + $0x664] sm:$0xf]
                %638 = vst [vmem:[%s202 + $0x364] sm:$0xf] %v637
                %v639 = vld [vmem:[%s201 + $0x668] sm:$0xf]
                %640 = vst [vmem:[%s202 + $0x368] sm:$0xf] %v639
                %v641 = vld [vmem:[%s201 + $0x66c] sm:$0xf]
                %642 = vst [vmem:[%s202 + $0x36c] sm:$0xf] %v641
                %v643 = vld [vmem:[%s201 + $0x670] sm:$0xf]
                %644 = vst [vmem:[%s202 + $0x370] sm:$0xf] %v643
                %v645 = vld [vmem:[%s201 + $0x674] sm:$0xf]
                %646 = vst [vmem:[%s202 + $0x374] sm:$0xf] %v645
                %v647 = vld [vmem:[%s201 + $0x678] sm:$0xf]
                %648 = vst [vmem:[%s202 + $0x378] sm:$0xf] %v647
                %v649 = vld [vmem:[%s201 + $0x67c] sm:$0xf]
                %650 = vst [vmem:[%s202 + $0x37c] sm:$0xf] %v649
                %v651 = vld [vmem:[%s201 + $0x700] sm:$0xf]
                %652 = vst [vmem:[%s202 + $0x380] sm:$0xf] %v651
                %v653 = vld [vmem:[%s201 + $0x704] sm:$0xf]
                %654 = vst [vmem:[%s202 + $0x384] sm:$0xf] %v653
                %v655 = vld [vmem:[%s201 + $0x708] sm:$0xf]
                %656 = vst [vmem:[%s202 + $0x388] sm:$0xf] %v655
                %v657 = vld [vmem:[%s201 + $0x70c] sm:$0xf]
                %658 = vst [vmem:[%s202 + $0x38c] sm:$0xf] %v657
                %v659 = vld [vmem:[%s201 + $0x710] sm:$0xf]
                %660 = vst [vmem:[%s202 + $0x390] sm:$0xf] %v659
                %v661 = vld [vmem:[%s201 + $0x714] sm:$0xf]
                %662 = vst [vmem:[%s202 + $0x394] sm:$0xf] %v661
                %v663 = vld [vmem:[%s201 + $0x718] sm:$0xf]
                %664 = vst [vmem:[%s202 + $0x398] sm:$0xf] %v663
                %v665 = vld [vmem:[%s201 + $0x71c] sm:$0xf]
                %666 = vst [vmem:[%s202 + $0x39c] sm:$0xf] %v665
                %v667 = vld [vmem:[%s201 + $0x720] sm:$0xf]
                %668 = vst [vmem:[%s202 + $0x3a0] sm:$0xf] %v667
                %v669 = vld [vmem:[%s201 + $0x724] sm:$0xf]
                %670 = vst [vmem:[%s202 + $0x3a4] sm:$0xf] %v669
                %v671 = vld [vmem:[%s201 + $0x728] sm:$0xf]
                %672 = vst [vmem:[%s202 + $0x3a8] sm:$0xf] %v671
                %v673 = vld [vmem:[%s201 + $0x72c] sm:$0xf]
                %674 = vst [vmem:[%s202 + $0x3ac] sm:$0xf] %v673
                %v675 = vld [vmem:[%s201 + $0x730] sm:$0xf]
                %676 = vst [vmem:[%s202 + $0x3b0] sm:$0xf] %v675
                %v677 = vld [vmem:[%s201 + $0x734] sm:$0xf]
                %678 = vst [vmem:[%s202 + $0x3b4] sm:$0xf] %v677
                %v679 = vld [vmem:[%s201 + $0x738] sm:$0xf]
                %680 = vst [vmem:[%s202 + $0x3b8] sm:$0xf] %v679
                %v681 = vld [vmem:[%s201 + $0x73c] sm:$0xf]
                %682 = vst [vmem:[%s202 + $0x3bc] sm:$0xf] %v681
                %v683 = vld [vmem:[%s201 + $0x740] sm:$0xf]
                %684 = vst [vmem:[%s202 + $0x3c0] sm:$0xf] %v683
                %v685 = vld [vmem:[%s201 + $0x744] sm:$0xf]
                %686 = vst [vmem:[%s202 + $0x3c4] sm:$0xf] %v685
                %v687 = vld [vmem:[%s201 + $0x748] sm:$0xf]
                %688 = vst [vmem:[%s202 + $0x3c8] sm:$0xf] %v687
                %v689 = vld [vmem:[%s201 + $0x74c] sm:$0xf]
                %690 = vst [vmem:[%s202 + $0x3cc] sm:$0xf] %v689
                %v691 = vld [vmem:[%s201 + $0x750] sm:$0xf]
                %692 = vst [vmem:[%s202 + $0x3d0] sm:$0xf] %v691
                %v693 = vld [vmem:[%s201 + $0x754] sm:$0xf]
                %694 = vst [vmem:[%s202 + $0x3d4] sm:$0xf] %v693
                %v695 = vld [vmem:[%s201 + $0x758] sm:$0xf]
                %696 = vst [vmem:[%s202 + $0x3d8] sm:$0xf] %v695
                %v697 = vld [vmem:[%s201 + $0x75c] sm:$0xf]
                %698 = vst [vmem:[%s202 + $0x3dc] sm:$0xf] %v697
                %v699 = vld [vmem:[%s201 + $0x760] sm:$0xf]
                %700 = vst [vmem:[%s202 + $0x3e0] sm:$0xf] %v699
                %v701 = vld [vmem:[%s201 + $0x764] sm:$0xf]
                %702 = vst [vmem:[%s202 + $0x3e4] sm:$0xf] %v701
                %v703 = vld [vmem:[%s201 + $0x768] sm:$0xf]
                %704 = vst [vmem:[%s202 + $0x3e8] sm:$0xf] %v703
                %v705 = vld [vmem:[%s201 + $0x76c] sm:$0xf]
                %706 = vst [vmem:[%s202 + $0x3ec] sm:$0xf] %v705
                %v707 = vld [vmem:[%s201 + $0x770] sm:$0xf]
                %708 = vst [vmem:[%s202 + $0x3f0] sm:$0xf] %v707
                %v709 = vld [vmem:[%s201 + $0x774] sm:$0xf]
                %710 = vst [vmem:[%s202 + $0x3f4] sm:$0xf] %v709
                %v711 = vld [vmem:[%s201 + $0x778] sm:$0xf]
                %712 = vst [vmem:[%s202 + $0x3f8] sm:$0xf] %v711
                %v713 = vld [vmem:[%s201 + $0x77c] sm:$0xf]
                %714 = vst [vmem:[%s202 + $0x3fc] sm:$0xf] %v713
              $region53: #{a_call__.1} parent=47 // loop_footer
                %s200 = sadd.s32 1, %s196
              $region54: #{a_call__.1} parent=47 // loop_footer_branch
                %195 = sbr.rel target = $region50
              $region55: #{a_call__.1} parent=47 // loop_exit
                _
            $region48: #{a_call__.1} parent=39 // pred_fallthru
              _
          $region40: #{a_call__.1} parent=35 // pred_fallthru
            _
          %1246 = vnop
        $region36: #{a_call__.1} parent=31 // pred_fallthru
          _
      $region32: #{a_call__.1} parent=5 // pred_fallthru
        _
      %p1247 = scmp.le.s32.totalorder 1, %s11
      %p1248 = scmp.lt.s32.totalorder %s11, 3
      %p1249 = pnand %p1247, %p1248
      %p1250 = pneg %p1249
      // Predicated region
      $region74: #{a_call__.1} parent=5 // pred_check
        _
      $region75: #{a_call__.1} parent=5 // pred_check_branch
        %1252 = sbr.rel (%p1249) target = $region77
      $region76: #{a_call__.1} parent=5 // pred_region
        %s1253 = ssub.s32 %s11, 1
        %s1254 = sand.u32 %s24, 1
        %s1255 = sand.u32 %s24, 1
        %s1256 = smul.addr %s1255, 1024
        %s1257 = scalar_lea.vmem [#allocation2], %s1256
        // Predicated region
        $region78: #{a_call__.1} parent=76 // pred_check
          %p1258 = pneg %p37
        $region79: #{a_call__.1} parent=76 // pred_check_branch
          %1260 = sbr.rel (%p1258) target = $region81
        $region80: #{a_call__.1} parent=76 // pred_region
          _
        $region81: #{a_call__.1} parent=76 // pred_fallthru
          _
        %s1261 = sand.u32 %s24, 1
        %s1262 = sand.u32 %s24, 1
        %s1263 = smul.addr %s1262, 1024
        %s1264 = scalar_lea.vmem [#allocation2], %s1263
        %p1265 = pneg %p37
        %p1266 = pneg %p34
        %p1267 = pneg %p58
        %p1268 = pneg %p55
        %p1269 = pneg %p79
        %p1270 = pneg %p76
        %p1271 = pneg %p100
        %p1272 = pneg %p97
        %p1273 = pneg %p121
        %p1274 = pneg %p118
        %p1275 = pneg %p147
        %p1276 = pneg %p144
        %s1277 = sand.u32 %s134, 1
        %s1278 = sand.u32 %s134, 1
        %s1279 = smul.addr %s1278, 1024
        %s1280 = scalar_lea.vmem [#allocation3], %s1279
        %s1281 = smul.u32 32, %s16
        %s1282 = smul.u32 32, %s16
        loop: start=0, step=1, limit=8
        $region82: #{a_call__.1} parent=76 // loop_pre_header
          _
        $region83: #{a_call__.1} parent=76 // loop_header
          %s1285 = sphi 0, %s1289
          %p1286 = scmp.ge.s32.totalorder %s1285, 8
        $region84: #{a_call__.1} parent=76 // loop_header_branch
          %1288 = sbr.rel (%p1286) target = $region88
        $region85: #{a_call__.1} parent=76 // loop_body
          %s1290 = smul.u32 %s1285, 32
          %s1291 = smul.addr %s1290, 4
          %s1292 = scalar_lea.vmem %s1257, %s1291 [#allocation2]
          %v1293 = vld [vmem:[%s1292] sm:$0xf]
          %v1294 = vld [vmem:[%s1292 + $0x4] sm:$0xf]
          %v1295 = vld [vmem:[%s1292 + $0x8] sm:$0xf]
          %v1296 = vld [vmem:[%s1292 + $0xc] sm:$0xf]
          %v1297 = vld [vmem:[%s1292 + $0x10] sm:$0xf]
          %v1298 = vld [vmem:[%s1292 + $0x14] sm:$0xf]
          %v1299 = vld [vmem:[%s1292 + $0x18] sm:$0xf]
          %v1300 = vld [vmem:[%s1292 + $0x1c] sm:$0xf]
          %v1301 = vld [vmem:[%s1292 + $0x20] sm:$0xf]
          %v1302 = vld [vmem:[%s1292 + $0x24] sm:$0xf]
          %v1303 = vld [vmem:[%s1292 + $0x28] sm:$0xf]
          %v1304 = vld [vmem:[%s1292 + $0x2c] sm:$0xf]
          %v1305 = vld [vmem:[%s1292 + $0x30] sm:$0xf]
          %v1306 = vld [vmem:[%s1292 + $0x34] sm:$0xf]
          %v1307 = vld [vmem:[%s1292 + $0x38] sm:$0xf]
          %v1308 = vld [vmem:[%s1292 + $0x3c] sm:$0xf]
          %v1309 = vld [vmem:[%s1292 + $0x40] sm:$0xf]
          %v1310 = vld [vmem:[%s1292 + $0x44] sm:$0xf]
          %v1311 = vld [vmem:[%s1292 + $0x48] sm:$0xf]
          %v1312 = vld [vmem:[%s1292 + $0x4c] sm:$0xf]
          %v1313 = vld [vmem:[%s1292 + $0x50] sm:$0xf]
          %v1314 = vld [vmem:[%s1292 + $0x54] sm:$0xf]
          %v1315 = vld [vmem:[%s1292 + $0x58] sm:$0xf]
          %v1316 = vld [vmem:[%s1292 + $0x5c] sm:$0xf]
          %v1317 = vld [vmem:[%s1292 + $0x60] sm:$0xf]
          %v1318 = vld [vmem:[%s1292 + $0x64] sm:$0xf]
          %v1319 = vld [vmem:[%s1292 + $0x68] sm:$0xf]
          %v1320 = vld [vmem:[%s1292 + $0x6c] sm:$0xf]
          %v1321 = vld [vmem:[%s1292 + $0x70] sm:$0xf]
          %v1322 = vld [vmem:[%s1292 + $0x74] sm:$0xf]
          %v1323 = vld [vmem:[%s1292 + $0x78] sm:$0xf]
          %v1324 = vld [vmem:[%s1292 + $0x7c] sm:$0xf]
          %s1325 = smul.u32 %s1285, 2
          %s1326 = smul.addr %s1325, 4
          %s1327 = scalar_lea.vmem %s1, %s1326
          %v1328 = vld [vmem:[%s1327] sm:$0xf]
          %v1329 = vld [vmem:[%s1327 + $0x4] sm:$0xf]
          %s1330 = scalar_lea.vmem %s2, %s1285
          %v1331 = vld [vmem:[%s1330] sm:$0x1]
          %v1333 = vlaneseq
          %v1334 = vshrl.u32 %v1333, 7
          %v1335 = vsub.s32 0, %v1334
          %v1336 = vrot.slane %v1331, %v1335
          %v1370 = vunpack.c.l.b16 %v1293
          %v1371 = vunpack.c.l.b16 %v1294
          %v1372 = vunpack.c.l.b16 %v1295
          %v1373 = vunpack.c.l.b16 %v1296
          %v1374 = vunpack.c.l.b16 %v1297
          %v1375 = vunpack.c.l.b16 %v1298
          %v1376 = vunpack.c.l.b16 %v1299
          %v1377 = vunpack.c.l.b16 %v1300
          %v1378 = vunpack.c.l.b16 %v1301
          %v1379 = vunpack.c.l.b16 %v1302
          %v1380 = vunpack.c.l.b16 %v1303
          %v1381 = vunpack.c.l.b16 %v1304
          %v1382 = vunpack.c.l.b16 %v1305
          %v1383 = vunpack.c.l.b16 %v1306
          %v1384 = vunpack.c.l.b16 %v1307
          %v1385 = vunpack.c.l.b16 %v1308
          %v1386 = vunpack.c.l.b16 %v1309
          %v1387 = vunpack.c.l.b16 %v1310
          %v1388 = vunpack.c.l.b16 %v1311
          %v1389 = vunpack.c.l.b16 %v1312
          %v1390 = vunpack.c.l.b16 %v1313
          %v1391 = vunpack.c.l.b16 %v1314
          %v1392 = vunpack.c.l.b16 %v1315
          %v1393 = vunpack.c.l.b16 %v1316
          %v1394 = vunpack.c.l.b16 %v1317
          %v1395 = vunpack.c.l.b16 %v1318
          %v1396 = vunpack.c.l.b16 %v1319
          %v1397 = vunpack.c.l.b16 %v1320
          %v1398 = vunpack.c.l.b16 %v1321
          %v1399 = vunpack.c.l.b16 %v1322
          %v1400 = vunpack.c.l.b16 %v1323
          %v1401 = vunpack.c.l.b16 %v1324
          %v1402 = vpack.c.b16 %v1371, %v1370
          %v1403 = vpack.c.b16 %v1373, %v1372
          %v1404 = vpack.c.b16 %v1375, %v1374
          %v1405 = vpack.c.b16 %v1377, %v1376
          %v1406 = vpack.c.b16 %v1379, %v1378
          %v1407 = vpack.c.b16 %v1381, %v1380
          %v1408 = vpack.c.b16 %v1383, %v1382
          %v1409 = vpack.c.b16 %v1385, %v1384
          %v1410 = vpack.c.b16 %v1387, %v1386
          %v1411 = vpack.c.b16 %v1389, %v1388
          %v1412 = vpack.c.b16 %v1391, %v1390
          %v1413 = vpack.c.b16 %v1393, %v1392
          %v1414 = vpack.c.b16 %v1395, %v1394
          %v1415 = vpack.c.b16 %v1397, %v1396
          %v1416 = vpack.c.b16 %v1399, %v1398
          %v1417 = vpack.c.b16 %v1401, %v1400
          %v1420 = vunpack.c.l.b16 %v1328
          %v1421 = vunpack.c.l.b16 %v1329
          %v1422 = vpack.c.b16 %v1421, %v1420
          %vm1424 = vcmask 130048
          %v1426 = vsel %vm1424, %v1402, 0
          %v1429 = vsel %vm1424, %v1403, 0
          %v1432 = vsel %vm1424, %v1404, 0
          %v1435 = vsel %vm1424, %v1405, 0
          %v1438 = vsel %vm1424, %v1406, 0
          %v1441 = vsel %vm1424, %v1407, 0
          %v1444 = vsel %vm1424, %v1408, 0
          %v1447 = vsel %vm1424, %v1409, 0
          %v1450 = vsel %vm1424, %v1410, 0
          %v1453 = vsel %vm1424, %v1411, 0
          %v1456 = vsel %vm1424, %v1412, 0
          %v1459 = vsel %vm1424, %v1413, 0
          %v1462 = vsel %vm1424, %v1414, 0
          %v1465 = vsel %vm1424, %v1415, 0
          %v1468 = vsel %vm1424, %v1416, 0
          %v1471 = vsel %vm1424, %v1417, 0
          %1473 = vmatprep.subr.bf16.mxu0 0
          %1474 = vmatpush1.bf16.msra.mxu0 %v1422
          %1475 = vmatprep.subr.bf16.mxu0 0
          %1476 = vmatpush1.bf16.msra.mxu0 0
          %1477 = vmatprep.subr.bf16.mxu0 0
          %1478 = vmatpush1.bf16.msra.mxu0 0
          %1479 = vmatprep.subr.bf16.mxu0 0
          %1480 = vmatpush1.bf16.msra.mxu0 0
          %1481 = vmatprep.subr.bf16.mxu0 0
          %1482 = vmatpush1.bf16.msra.mxu0 0
          %1483 = vmatprep.subr.bf16.mxu0 0
          %1484 = vmatpush1.bf16.msra.mxu0 0
          %1485 = vmatprep.subr.bf16.mxu0 0
          %1486 = vmatpush1.bf16.msra.mxu0 0
          %1487 = vmatprep.subr.bf16.mxu0 0
          %1488 = vmatpush1.bf16.msra.mxu0 0
          %1489 = vmatprep.subr.bf16.mxu0 0
          %1490 = vmatpush1.bf16.msra.mxu0 0
          %1491 = vmatprep.subr.bf16.mxu0 0
          %1492 = vmatpush1.bf16.msra.mxu0 0
          %1493 = vmatprep.subr.bf16.mxu0 0
          %1494 = vmatpush1.bf16.msra.mxu0 0
          %1495 = vmatprep.subr.bf16.mxu0 0
          %1496 = vmatpush1.bf16.msra.mxu0 0
          %1497 = vmatprep.subr.bf16.mxu0 0
          %1498 = vmatpush1.bf16.msra.mxu0 0
          %1499 = vmatprep.subr.bf16.mxu0 0
          %1500 = vmatpush1.bf16.msra.mxu0 0
          %1501 = vmatprep.subr.bf16.mxu0 0
          %1502 = vmatpush1.bf16.msra.mxu0 0
          %1503 = vmatprep.subr.bf16.mxu0 0
          %1504 = vmatpush1.bf16.msra.mxu0 0
          %1505 = vmatprep.mubr.bf16.mxu0 0
          %1506 = vmatmul.mubr.bf16.gmra.mrb[0].mxu0 %v1426
          %v1507 = vpop.f32.mrb[0].mxu0
          %v1508 = vadd.f32 %v1336, %v1507
          %v1509 = vpop.f32.mrb[0].mxu0
          %v1510 = vpop.f32.mrb[0].mxu0
          %v1511 = vadd.f32 %v1336, %v1510
          %v1512 = vpop.f32.mrb[0].mxu0
          %1513 = vmatprep.mubr.bf16.mxu0 0
          %1514 = vmatmul.mubr.bf16.gmra.mrb[0].mxu0 %v1429
          %v1515 = vpop.f32.mrb[0].mxu0
          %v1516 = vadd.f32 %v1336, %v1515
          %v1517 = vpop.f32.mrb[0].mxu0
          %v1518 = vpop.f32.mrb[0].mxu0
          %v1519 = vadd.f32 %v1336, %v1518
          %v1520 = vpop.f32.mrb[0].mxu0
          %1521 = vmatprep.mubr.bf16.mxu0 0
          %1522 = vmatmul.mubr.bf16.gmra.mrb[0].mxu0 %v1432
          %v1523 = vpop.f32.mrb[0].mxu0
          %v1524 = vadd.f32 %v1336, %v1523
          %v1525 = vpop.f32.mrb[0].mxu0
          %v1526 = vpop.f32.mrb[0].mxu0
          %v1527 = vadd.f32 %v1336, %v1526
          %v1528 = vpop.f32.mrb[0].mxu0
          %1529 = vmatprep.mubr.bf16.mxu0 0
          %1530 = vmatmul.mubr.bf16.gmra.mrb[0].mxu0 %v1435
          %v1531 = vpop.f32.mrb[0].mxu0
          %v1532 = vadd.f32 %v1336, %v1531
          %v1533 = vpop.f32.mrb[0].mxu0
          %v1534 = vpop.f32.mrb[0].mxu0
          %v1535 = vadd.f32 %v1336, %v1534
          %v1536 = vpop.f32.mrb[0].mxu0
          %1537 = vmatprep.mubr.bf16.mxu0 0
          %1538 = vmatmul.mubr.bf16.gmra.mrb[0].mxu0 %v1438
          %v1539 = vpop.f32.mrb[0].mxu0
          %v1540 = vadd.f32 %v1336, %v1539
          %v1541 = vpop.f32.mrb[0].mxu0
          %v1542 = vpop.f32.mrb[0].mxu0
          %v1543 = vadd.f32 %v1336, %v1542
          %v1544 = vpop.f32.mrb[0].mxu0
          %1545 = vmatprep.mubr.bf16.mxu0 0
          %1546 = vmatmul.mubr.bf16.gmra.mrb[0].mxu0 %v1441
          %v1547 = vpop.f32.mrb[0].mxu0
          %v1548 = vadd.f32 %v1336, %v1547
          %v1549 = vpop.f32.mrb[0].mxu0
          %v1550 = vpop.f32.mrb[0].mxu0
          %v1551 = vadd.f32 %v1336, %v1550
          %v1552 = vpop.f32.mrb[0].mxu0
          %1553 = vmatprep.mubr.bf16.mxu0 0
          %1554 = vmatmul.mubr.bf16.gmra.mrb[0].mxu0 %v1444
          %v1555 = vpop.f32.mrb[0].mxu0
          %v1556 = vadd.f32 %v1336, %v1555
          %v1557 = vpop.f32.mrb[0].mxu0
          %v1558 = vpop.f32.mrb[0].mxu0
          %v1559 = vadd.f32 %v1336, %v1558
          %v1560 = vpop.f32.mrb[0].mxu0
          %1561 = vmatprep.mubr.bf16.mxu0 0
          %1562 = vmatmul.mubr.bf16.gmra.mrb[0].mxu0 %v1447
          %v1563 = vpop.f32.mrb[0].mxu0
          %v1564 = vadd.f32 %v1336, %v1563
          %v1565 = vpop.f32.mrb[0].mxu0
          %v1566 = vpop.f32.mrb[0].mxu0
          %v1567 = vadd.f32 %v1336, %v1566
          %v1568 = vpop.f32.mrb[0].mxu0
          %1569 = vmatprep.mubr.bf16.mxu0 0
          %1570 = vmatmul.mubr.bf16.gmra.mrb[0].mxu0 %v1450
          %v1571 = vpop.f32.mrb[0].mxu0
          %v1572 = vadd.f32 %v1336, %v1571
          %v1573 = vpop.f32.mrb[0].mxu0
          %v1574 = vpop.f32.mrb[0].mxu0
          %v1575 = vadd.f32 %v1336, %v1574
          %v1576 = vpop.f32.mrb[0].mxu0
          %1577 = vmatprep.mubr.bf16.mxu0 0
          %1578 = vmatmul.mubr.bf16.gmra.mrb[0].mxu0 %v1453
          %v1579 = vpop.f32.mrb[0].mxu0
          %v1580 = vadd.f32 %v1336, %v1579
          %v1581 = vpop.f32.mrb[0].mxu0
          %v1582 = vpop.f32.mrb[0].mxu0
          %v1583 = vadd.f32 %v1336, %v1582
          %v1584 = vpop.f32.mrb[0].mxu0
          %1585 = vmatprep.mubr.bf16.mxu0 0
          %1586 = vmatmul.mubr.bf16.gmra.mrb[0].mxu0 %v1456
          %v1587 = vpop.f32.mrb[0].mxu0
          %v1588 = vadd.f32 %v1336, %v1587
          %v1589 = vpop.f32.mrb[0].mxu0
          %v1590 = vpop.f32.mrb[0].mxu0
          %v1591 = vadd.f32 %v1336, %v1590
          %v1592 = vpop.f32.mrb[0].mxu0
          %1593 = vmatprep.mubr.bf16.mxu0 0
          %1594 = vmatmul.mubr.bf16.gmra.mrb[0].mxu0 %v1459
          %v1595 = vpop.f32.mrb[0].mxu0
          %v1596 = vadd.f32 %v1336, %v1595
          %v1597 = vpop.f32.mrb[0].mxu0
          %v1598 = vpop.f32.mrb[0].mxu0
          %v1599 = vadd.f32 %v1336, %v1598
          %v1600 = vpop.f32.mrb[0].mxu0
          %1601 = vmatprep.mubr.bf16.mxu0 0
          %1602 = vmatmul.mubr.bf16.gmra.mrb[0].mxu0 %v1462
          %v1603 = vpop.f32.mrb[0].mxu0
          %v1604 = vadd.f32 %v1336, %v1603
          %v1605 = vpop.f32.mrb[0].mxu0
          %v1606 = vpop.f32.mrb[0].mxu0
          %v1607 = vadd.f32 %v1336, %v1606
          %v1608 = vpop.f32.mrb[0].mxu0
          %1609 = vmatprep.mubr.bf16.mxu0 0
          %1610 = vmatmul.mubr.bf16.gmra.mrb[0].mxu0 %v1465
          %v1611 = vpop.f32.mrb[0].mxu0
          %v1612 = vadd.f32 %v1336, %v1611
          %v1613 = vpop.f32.mrb[0].mxu0
          %v1614 = vpop.f32.mrb[0].mxu0
          %v1615 = vadd.f32 %v1336, %v1614
          %v1616 = vpop.f32.mrb[0].mxu0
          %1617 = vmatprep.mubr.bf16.mxu0 0
          %1618 = vmatmul.mubr.bf16.gmra.mrb[0].mxu0 %v1468
          %v1619 = vpop.f32.mrb[0].mxu0
          %v1620 = vadd.f32 %v1336, %v1619
          %v1621 = vpop.f32.mrb[0].mxu0
          %v1622 = vpop.f32.mrb[0].mxu0
          %v1623 = vadd.f32 %v1336, %v1622
          %v1624 = vpop.f32.mrb[0].mxu0
          %1625 = vmatprep.mubr.bf16.mxu0 0
          %1626 = vmatmul.mubr.bf16.gmra.mrb[0].mxu0 %v1471
          %v1627 = vpop.f32.mrb[0].mxu0
          %v1628 = vadd.f32 %v1336, %v1627
          %v1629 = vpop.f32.mrb[0].mxu0
          %v1630 = vpop.f32.mrb[0].mxu0
          %v1631 = vadd.f32 %v1336, %v1630
          %v1632 = vpop.f32.mrb[0].mxu0
          %1633 = vdwg.mxu0
          %v1634 = vmax.f32 %v1508, 0.0
          %v1635 = vmax.f32 %v1511, 0.0
          %v1636 = vmax.f32 %v1516, 0.0
          %v1637 = vmax.f32 %v1519, 0.0
          %v1638 = vmax.f32 %v1524, 0.0
          %v1639 = vmax.f32 %v1527, 0.0
          %v1640 = vmax.f32 %v1532, 0.0
          %v1641 = vmax.f32 %v1535, 0.0
          %v1642 = vmax.f32 %v1540, 0.0
          %v1643 = vmax.f32 %v1543, 0.0
          %v1644 = vmax.f32 %v1548, 0.0
          %v1645 = vmax.f32 %v1551, 0.0
          %v1646 = vmax.f32 %v1556, 0.0
          %v1647 = vmax.f32 %v1559, 0.0
          %v1648 = vmax.f32 %v1564, 0.0
          %v1649 = vmax.f32 %v1567, 0.0
          %v1650 = vmax.f32 %v1572, 0.0
          %v1651 = vmax.f32 %v1575, 0.0
          %v1652 = vmax.f32 %v1580, 0.0
          %v1653 = vmax.f32 %v1583, 0.0
          %v1654 = vmax.f32 %v1588, 0.0
          %v1655 = vmax.f32 %v1591, 0.0
          %v1656 = vmax.f32 %v1596, 0.0
          %v1657 = vmax.f32 %v1599, 0.0
          %v1658 = vmax.f32 %v1604, 0.0
          %v1659 = vmax.f32 %v1607, 0.0
          %v1660 = vmax.f32 %v1612, 0.0
          %v1661 = vmax.f32 %v1615, 0.0
          %v1662 = vmax.f32 %v1620, 0.0
          %v1663 = vmax.f32 %v1623, 0.0
          %v1664 = vmax.f32 %v1628, 0.0
          %v1665 = vmax.f32 %v1631, 0.0
          %v1666 = vpack.c.bf16 %v1635, %v1634
          %v1667 = vpack.c.bf16 %v1637, %v1636
          %v1668 = vpack.c.bf16 %v1639, %v1638
          %v1669 = vpack.c.bf16 %v1641, %v1640
          %v1670 = vpack.c.bf16 %v1643, %v1642
          %v1671 = vpack.c.bf16 %v1645, %v1644
          %v1672 = vpack.c.bf16 %v1647, %v1646
          %v1673 = vpack.c.bf16 %v1649, %v1648
          %v1674 = vpack.c.bf16 %v1651, %v1650
          %v1675 = vpack.c.bf16 %v1653, %v1652
          %v1676 = vpack.c.bf16 %v1655, %v1654
          %v1677 = vpack.c.bf16 %v1657, %v1656
          %v1678 = vpack.c.bf16 %v1659, %v1658
          %v1679 = vpack.c.bf16 %v1661, %v1660
          %v1680 = vpack.c.bf16 %v1663, %v1662
          %v1681 = vpack.c.bf16 %v1665, %v1664
          %s1682 = smul.u32 %s1285, 4
          %s1683 = smul.addr %s1682, 4
          %s1684 = scalar_lea.vmem %s3, %s1683
          %v1685 = vld [vmem:[%s1684] sm:$0xf]
          %v1686 = vld [vmem:[%s1684 + $0x4] sm:$0xf]
          %v1687 = vld [vmem:[%s1684 + $0x8] sm:$0xf]
          %v1688 = vld [vmem:[%s1684 + $0xc] sm:$0xf]
          %s1689 = scalar_lea.vmem %s4, %s1285
          %v1690 = vld [vmem:[%s1689] sm:$0x1]
          %v1692 = vlaneseq
          %v1693 = vshrl.u32 %v1692, 7
          %v1694 = vsub.s32 0, %v1693
          %v1695 = vrot.slane %v1690, %v1694
          %v1701 = vunpack.c.l.b16 %v1685
          %v1702 = vunpack.c.l.b16 %v1686
          %v1703 = vunpack.c.l.b16 %v1687
          %v1704 = vunpack.c.l.b16 %v1688
          %v1705 = vpack.c.b16 %v1702, %v1701
          %v1706 = vpack.c.b16 %v1704, %v1703
          %vm1709 = vcmask 261120
          %v1711 = vsel %vm1709, %v1666, 0
          %v1714 = vsel %vm1709, %v1667, 0
          %v1717 = vsel %vm1709, %v1668, 0
          %v1720 = vsel %vm1709, %v1669, 0
          %v1723 = vsel %vm1709, %v1670, 0
          %v1726 = vsel %vm1709, %v1671, 0
          %v1729 = vsel %vm1709, %v1672, 0
          %v1732 = vsel %vm1709, %v1673, 0
          %v1735 = vsel %vm1709, %v1674, 0
          %v1738 = vsel %vm1709, %v1675, 0
          %v1741 = vsel %vm1709, %v1676, 0
          %v1744 = vsel %vm1709, %v1677, 0
          %v1747 = vsel %vm1709, %v1678, 0
          %v1750 = vsel %vm1709, %v1679, 0
          %v1753 = vsel %vm1709, %v1680, 0
          %v1756 = vsel %vm1709, %v1681, 0
          %1758 = vmatprep.subr.bf16.mxu0 0
          %1759 = vmatpush1.bf16.msra.mxu0 %v1705
          %1760 = vmatprep.subr.bf16.mxu0 0
          %1761 = vmatpush1.bf16.msra.mxu0 %v1706
          %1762 = vmatprep.subr.bf16.mxu0 0
          %1763 = vmatpush1.bf16.msra.mxu0 0
          %1764 = vmatprep.subr.bf16.mxu0 0
          %1765 = vmatpush1.bf16.msra.mxu0 0
          %1766 = vmatprep.subr.bf16.mxu0 0
          %1767 = vmatpush1.bf16.msra.mxu0 0
          %1768 = vmatprep.subr.bf16.mxu0 0
          %1769 = vmatpush1.bf16.msra.mxu0 0
          %1770 = vmatprep.subr.bf16.mxu0 0
          %1771 = vmatpush1.bf16.msra.mxu0 0
          %1772 = vmatprep.subr.bf16.mxu0 0
          %1773 = vmatpush1.bf16.msra.mxu0 0
          %1774 = vmatprep.subr.bf16.mxu0 0
          %1775 = vmatpush1.bf16.msra.mxu0 0
          %1776 = vmatprep.subr.bf16.mxu0 0
          %1777 = vmatpush1.bf16.msra.mxu0 0
          %1778 = vmatprep.subr.bf16.mxu0 0
          %1779 = vmatpush1.bf16.msra.mxu0 0
          %1780 = vmatprep.subr.bf16.mxu0 0
          %1781 = vmatpush1.bf16.msra.mxu0 0
          %1782 = vmatprep.subr.bf16.mxu0 0
          %1783 = vmatpush1.bf16.msra.mxu0 0
          %1784 = vmatprep.subr.bf16.mxu0 0
          %1785 = vmatpush1.bf16.msra.mxu0 0
          %1786 = vmatprep.subr.bf16.mxu0 0
          %1787 = vmatpush1.bf16.msra.mxu0 0
          %1788 = vmatprep.subr.bf16.mxu0 0
          %1789 = vmatpush1.bf16.msra.mxu0 0
          %1790 = vmatprep.mubr.bf16.mxu0 0
          %1791 = vmatmul.mubr.bf16.gmra.mrb[0].mxu0 %v1711
          %v1792 = vpop.f32.mrb[0].mxu0
          %v1793 = vadd.f32 %v1695, %v1792
          %v1794 = vpop.f32.mrb[0].mxu0
          %v1795 = vpop.f32.mrb[0].mxu0
          %v1796 = vadd.f32 %v1695, %v1795
          %v1797 = vpop.f32.mrb[0].mxu0
          %1798 = vmatprep.mubr.bf16.mxu0 0
          %1799 = vmatmul.mubr.bf16.gmra.mrb[0].mxu0 %v1714
          %v1800 = vpop.f32.mrb[0].mxu0
          %v1801 = vadd.f32 %v1695, %v1800
          %v1802 = vpop.f32.mrb[0].mxu0
          %v1803 = vpop.f32.mrb[0].mxu0
          %v1804 = vadd.f32 %v1695, %v1803
          %v1805 = vpop.f32.mrb[0].mxu0
          %1806 = vmatprep.mubr.bf16.mxu0 0
          %1807 = vmatmul.mubr.bf16.gmra.mrb[0].mxu0 %v1717
          %v1808 = vpop.f32.mrb[0].mxu0
          %v1809 = vadd.f32 %v1695, %v1808
          %v1810 = vpop.f32.mrb[0].mxu0
          %v1811 = vpop.f32.mrb[0].mxu0
          %v1812 = vadd.f32 %v1695, %v1811
          %v1813 = vpop.f32.mrb[0].mxu0
          %1814 = vmatprep.mubr.bf16.mxu0 0
          %1815 = vmatmul.mubr.bf16.gmra.mrb[0].mxu0 %v1720
          %v1816 = vpop.f32.mrb[0].mxu0
          %v1817 = vadd.f32 %v1695, %v1816
          %v1818 = vpop.f32.mrb[0].mxu0
          %v1819 = vpop.f32.mrb[0].mxu0
          %v1820 = vadd.f32 %v1695, %v1819
          %v1821 = vpop.f32.mrb[0].mxu0
          %1822 = vmatprep.mubr.bf16.mxu0 0
          %1823 = vmatmul.mubr.bf16.gmra.mrb[0].mxu0 %v1723
          %v1824 = vpop.f32.mrb[0].mxu0
          %v1825 = vadd.f32 %v1695, %v1824
          %v1826 = vpop.f32.mrb[0].mxu0
          %v1827 = vpop.f32.mrb[0].mxu0
          %v1828 = vadd.f32 %v1695, %v1827
          %v1829 = vpop.f32.mrb[0].mxu0
          %1830 = vmatprep.mubr.bf16.mxu0 0
          %1831 = vmatmul.mubr.bf16.gmra.mrb[0].mxu0 %v1726
          %v1832 = vpop.f32.mrb[0].mxu0
          %v1833 = vadd.f32 %v1695, %v1832
          %v1834 = vpop.f32.mrb[0].mxu0
          %v1835 = vpop.f32.mrb[0].mxu0
          %v1836 = vadd.f32 %v1695, %v1835
          %v1837 = vpop.f32.mrb[0].mxu0
          %1838 = vmatprep.mubr.bf16.mxu0 0
          %1839 = vmatmul.mubr.bf16.gmra.mrb[0].mxu0 %v1729
          %v1840 = vpop.f32.mrb[0].mxu0
          %v1841 = vadd.f32 %v1695, %v1840
          %v1842 = vpop.f32.mrb[0].mxu0
          %v1843 = vpop.f32.mrb[0].mxu0
          %v1844 = vadd.f32 %v1695, %v1843
          %v1845 = vpop.f32.mrb[0].mxu0
          %1846 = vmatprep.mubr.bf16.mxu0 0
          %1847 = vmatmul.mubr.bf16.gmra.mrb[0].mxu0 %v1732
          %v1848 = vpop.f32.mrb[0].mxu0
          %v1849 = vadd.f32 %v1695, %v1848
          %v1850 = vpop.f32.mrb[0].mxu0
          %v1851 = vpop.f32.mrb[0].mxu0
          %v1852 = vadd.f32 %v1695, %v1851
          %v1853 = vpop.f32.mrb[0].mxu0
          %1854 = vmatprep.mubr.bf16.mxu0 0
          %1855 = vmatmul.mubr.bf16.gmra.mrb[0].mxu0 %v1735
          %v1856 = vpop.f32.mrb[0].mxu0
          %v1857 = vadd.f32 %v1695, %v1856
          %v1858 = vpop.f32.mrb[0].mxu0
          %v1859 = vpop.f32.mrb[0].mxu0
          %v1860 = vadd.f32 %v1695, %v1859
          %v1861 = vpop.f32.mrb[0].mxu0
          %1862 = vmatprep.mubr.bf16.mxu0 0
          %1863 = vmatmul.mubr.bf16.gmra.mrb[0].mxu0 %v1738
          %v1864 = vpop.f32.mrb[0].mxu0
          %v1865 = vadd.f32 %v1695, %v1864
          %v1866 = vpop.f32.mrb[0].mxu0
          %v1867 = vpop.f32.mrb[0].mxu0
          %v1868 = vadd.f32 %v1695, %v1867
          %v1869 = vpop.f32.mrb[0].mxu0
          %1870 = vmatprep.mubr.bf16.mxu0 0
          %1871 = vmatmul.mubr.bf16.gmra.mrb[0].mxu0 %v1741
          %v1872 = vpop.f32.mrb[0].mxu0
          %v1873 = vadd.f32 %v1695, %v1872
          %v1874 = vpop.f32.mrb[0].mxu0
          %v1875 = vpop.f32.mrb[0].mxu0
          %v1876 = vadd.f32 %v1695, %v1875
          %v1877 = vpop.f32.mrb[0].mxu0
          %1878 = vmatprep.mubr.bf16.mxu0 0
          %1879 = vmatmul.mubr.bf16.gmra.mrb[0].mxu0 %v1744
          %v1880 = vpop.f32.mrb[0].mxu0
          %v1881 = vadd.f32 %v1695, %v1880
          %v1882 = vpop.f32.mrb[0].mxu0
          %v1883 = vpop.f32.mrb[0].mxu0
          %v1884 = vadd.f32 %v1695, %v1883
          %v1885 = vpop.f32.mrb[0].mxu0
          %1886 = vmatprep.mubr.bf16.mxu0 0
          %1887 = vmatmul.mubr.bf16.gmra.mrb[0].mxu0 %v1747
          %v1888 = vpop.f32.mrb[0].mxu0
          %v1889 = vadd.f32 %v1695, %v1888
          %v1890 = vpop.f32.mrb[0].mxu0
          %v1891 = vpop.f32.mrb[0].mxu0
          %v1892 = vadd.f32 %v1695, %v1891
          %v1893 = vpop.f32.mrb[0].mxu0
          %1894 = vmatprep.mubr.bf16.mxu0 0
          %1895 = vmatmul.mubr.bf16.gmra.mrb[0].mxu0 %v1750
          %v1896 = vpop.f32.mrb[0].mxu0
          %v1897 = vadd.f32 %v1695, %v1896
          %v1898 = vpop.f32.mrb[0].mxu0
          %v1899 = vpop.f32.mrb[0].mxu0
          %v1900 = vadd.f32 %v1695, %v1899
          %v1901 = vpop.f32.mrb[0].mxu0
          %1902 = vmatprep.mubr.bf16.mxu0 0
          %1903 = vmatmul.mubr.bf16.gmra.mrb[0].mxu0 %v1753
          %v1904 = vpop.f32.mrb[0].mxu0
          %v1905 = vadd.f32 %v1695, %v1904
          %v1906 = vpop.f32.mrb[0].mxu0
          %v1907 = vpop.f32.mrb[0].mxu0
          %v1908 = vadd.f32 %v1695, %v1907
          %v1909 = vpop.f32.mrb[0].mxu0
          %1910 = vmatprep.mubr.bf16.mxu0 0
          %1911 = vmatmul.mubr.bf16.gmra.mrb[0].mxu0 %v1756
          %v1912 = vpop.f32.mrb[0].mxu0
          %v1913 = vadd.f32 %v1695, %v1912
          %v1914 = vpop.f32.mrb[0].mxu0
          %v1915 = vpop.f32.mrb[0].mxu0
          %v1916 = vadd.f32 %v1695, %v1915
          %v1917 = vpop.f32.mrb[0].mxu0
          %1918 = vdwg.mxu0
          %vm1919 = vcmp.gt.f32.partialorder %v1793, 0.01
          %vm1920 = vcmp.gt.f32.partialorder %v1796, 0.01
          %vm1921 = vcmp.gt.f32.partialorder %v1801, 0.01
          %vm1922 = vcmp.gt.f32.partialorder %v1804, 0.01
          %vm1923 = vcmp.gt.f32.partialorder %v1809, 0.01
          %vm1924 = vcmp.gt.f32.partialorder %v1812, 0.01
          %vm1925 = vcmp.gt.f32.partialorder %v1817, 0.01
          %vm1926 = vcmp.gt.f32.partialorder %v1820, 0.01
          %vm1927 = vcmp.gt.f32.partialorder %v1825, 0.01
          %vm1928 = vcmp.gt.f32.partialorder %v1828, 0.01
          %vm1929 = vcmp.gt.f32.partialorder %v1833, 0.01
          %vm1930 = vcmp.gt.f32.partialorder %v1836, 0.01
          %vm1931 = vcmp.gt.f32.partialorder %v1841, 0.01
          %vm1932 = vcmp.gt.f32.partialorder %v1844, 0.01
          %vm1933 = vcmp.gt.f32.partialorder %v1849, 0.01
          %vm1934 = vcmp.gt.f32.partialorder %v1852, 0.01
          %vm1935 = vcmp.gt.f32.partialorder %v1857, 0.01
          %vm1936 = vcmp.gt.f32.partialorder %v1860, 0.01
          %vm1937 = vcmp.gt.f32.partialorder %v1865, 0.01
          %vm1938 = vcmp.gt.f32.partialorder %v1868, 0.01
          %vm1939 = vcmp.gt.f32.partialorder %v1873, 0.01
          %vm1940 = vcmp.gt.f32.partialorder %v1876, 0.01
          %vm1941 = vcmp.gt.f32.partialorder %v1881, 0.01
          %vm1942 = vcmp.gt.f32.partialorder %v1884, 0.01
          %vm1943 = vcmp.gt.f32.partialorder %v1889, 0.01
          %vm1944 = vcmp.gt.f32.partialorder %v1892, 0.01
          %vm1945 = vcmp.gt.f32.partialorder %v1897, 0.01
          %vm1946 = vcmp.gt.f32.partialorder %v1900, 0.01
          %vm1947 = vcmp.gt.f32.partialorder %v1905, 0.01
          %vm1948 = vcmp.gt.f32.partialorder %v1908, 0.01
          %vm1949 = vcmp.gt.f32.partialorder %v1913, 0.01
          %vm1950 = vcmp.gt.f32.partialorder %v1916, 0.01
          %v1951 = vsub.f32 %v1793, 0.01
          %v1952 = vsub.f32 %v1796, 0.01
          %v1953 = vsub.f32 %v1801, 0.01
          %v1954 = vsub.f32 %v1804, 0.01
          %v1955 = vsub.f32 %v1809, 0.01
          %v1956 = vsub.f32 %v1812, 0.01
          %v1957 = vsub.f32 %v1817, 0.01
          %v1958 = vsub.f32 %v1820, 0.01
          %v1959 = vsub.f32 %v1825, 0.01
          %v1960 = vsub.f32 %v1828, 0.01
          %v1961 = vsub.f32 %v1833, 0.01
          %v1962 = vsub.f32 %v1836, 0.01
          %v1963 = vsub.f32 %v1841, 0.01
          %v1964 = vsub.f32 %v1844, 0.01
          %v1965 = vsub.f32 %v1849, 0.01
          %v1966 = vsub.f32 %v1852, 0.01
          %v1967 = vsub.f32 %v1857, 0.01
          %v1968 = vsub.f32 %v1860, 0.01
          %v1969 = vsub.f32 %v1865, 0.01
          %v1970 = vsub.f32 %v1868, 0.01
          %v1971 = vsub.f32 %v1873, 0.01
          %v1972 = vsub.f32 %v1876, 0.01
          %v1973 = vsub.f32 %v1881, 0.01
          %v1974 = vsub.f32 %v1884, 0.01
          %v1975 = vsub.f32 %v1889, 0.01
          %v1976 = vsub.f32 %v1892, 0.01
          %v1977 = vsub.f32 %v1897, 0.01
          %v1978 = vsub.f32 %v1900, 0.01
          %v1979 = vsub.f32 %v1905, 0.01
          %v1980 = vsub.f32 %v1908, 0.01
          %v1981 = vsub.f32 %v1913, 0.01
          %v1982 = vsub.f32 %v1916, 0.01
          %vm1983 = vcmp.lt.f32.partialorder %v1793, -0.01
          %vm1984 = vcmp.lt.f32.partialorder %v1796, -0.01
          %vm1985 = vcmp.lt.f32.partialorder %v1801, -0.01
          %vm1986 = vcmp.lt.f32.partialorder %v1804, -0.01
          %vm1987 = vcmp.lt.f32.partialorder %v1809, -0.01
          %vm1988 = vcmp.lt.f32.partialorder %v1812, -0.01
          %vm1989 = vcmp.lt.f32.partialorder %v1817, -0.01
          %vm1990 = vcmp.lt.f32.partialorder %v1820, -0.01
          %vm1991 = vcmp.lt.f32.partialorder %v1825, -0.01
          %vm1992 = vcmp.lt.f32.partialorder %v1828, -0.01
          %vm1993 = vcmp.lt.f32.partialorder %v1833, -0.01
          %vm1994 = vcmp.lt.f32.partialorder %v1836, -0.01
          %vm1995 = vcmp.lt.f32.partialorder %v1841, -0.01
          %vm1996 = vcmp.lt.f32.partialorder %v1844, -0.01
          %vm1997 = vcmp.lt.f32.partialorder %v1849, -0.01
          %vm1998 = vcmp.lt.f32.partialorder %v1852, -0.01
          %vm1999 = vcmp.lt.f32.partialorder %v1857, -0.01
          %vm2000 = vcmp.lt.f32.partialorder %v1860, -0.01
          %vm2001 = vcmp.lt.f32.partialorder %v1865, -0.01
          %vm2002 = vcmp.lt.f32.partialorder %v1868, -0.01
          %vm2003 = vcmp.lt.f32.partialorder %v1873, -0.01
          %vm2004 = vcmp.lt.f32.partialorder %v1876, -0.01
          %vm2005 = vcmp.lt.f32.partialorder %v1881, -0.01
          %vm2006 = vcmp.lt.f32.partialorder %v1884, -0.01
          %vm2007 = vcmp.lt.f32.partialorder %v1889, -0.01
          %vm2008 = vcmp.lt.f32.partialorder %v1892, -0.01
          %vm2009 = vcmp.lt.f32.partialorder %v1897, -0.01
          %vm2010 = vcmp.lt.f32.partialorder %v1900, -0.01
          %vm2011 = vcmp.lt.f32.partialorder %v1905, -0.01
          %vm2012 = vcmp.lt.f32.partialorder %v1908, -0.01
          %vm2013 = vcmp.lt.f32.partialorder %v1913, -0.01
          %vm2014 = vcmp.lt.f32.partialorder %v1916, -0.01
          %v2015 = vadd.f32 %v1793, 0.01
          %v2016 = vadd.f32 %v1796, 0.01
          %v2017 = vadd.f32 %v1801, 0.01
          %v2018 = vadd.f32 %v1804, 0.01
          %v2019 = vadd.f32 %v1809, 0.01
          %v2020 = vadd.f32 %v1812, 0.01
          %v2021 = vadd.f32 %v1817, 0.01
          %v2022 = vadd.f32 %v1820, 0.01
          %v2023 = vadd.f32 %v1825, 0.01
          %v2024 = vadd.f32 %v1828, 0.01
          %v2025 = vadd.f32 %v1833, 0.01
          %v2026 = vadd.f32 %v1836, 0.01
          %v2027 = vadd.f32 %v1841, 0.01
          %v2028 = vadd.f32 %v1844, 0.01
          %v2029 = vadd.f32 %v1849, 0.01
          %v2030 = vadd.f32 %v1852, 0.01
          %v2031 = vadd.f32 %v1857, 0.01
          %v2032 = vadd.f32 %v1860, 0.01
          %v2033 = vadd.f32 %v1865, 0.01
          %v2034 = vadd.f32 %v1868, 0.01
          %v2035 = vadd.f32 %v1873, 0.01
          %v2036 = vadd.f32 %v1876, 0.01
          %v2037 = vadd.f32 %v1881, 0.01
          %v2038 = vadd.f32 %v1884, 0.01
          %v2039 = vadd.f32 %v1889, 0.01
          %v2040 = vadd.f32 %v1892, 0.01
          %v2041 = vadd.f32 %v1897, 0.01
          %v2042 = vadd.f32 %v1900, 0.01
          %v2043 = vadd.f32 %v1905, 0.01
          %v2044 = vadd.f32 %v1908, 0.01
          %v2045 = vadd.f32 %v1913, 0.01
          %v2046 = vadd.f32 %v1916, 0.01
          %v2047 = vsel %vm1983, %v2015, 0.0
          %v2048 = vsel %vm1984, %v2016, 0.0
          %v2049 = vsel %vm1985, %v2017, 0.0
          %v2050 = vsel %vm1986, %v2018, 0.0
          %v2051 = vsel %vm1987, %v2019, 0.0
          %v2052 = vsel %vm1988, %v2020, 0.0
          %v2053 = vsel %vm1989, %v2021, 0.0
          %v2054 = vsel %vm1990, %v2022, 0.0
          %v2055 = vsel %vm1991, %v2023, 0.0
          %v2056 = vsel %vm1992, %v2024, 0.0
          %v2057 = vsel %vm1993, %v2025, 0.0
          %v2058 = vsel %vm1994, %v2026, 0.0
          %v2059 = vsel %vm1995, %v2027, 0.0
          %v2060 = vsel %vm1996, %v2028, 0.0
          %v2061 = vsel %vm1997, %v2029, 0.0
          %v2062 = vsel %vm1998, %v2030, 0.0
          %v2063 = vsel %vm1999, %v2031, 0.0
          %v2064 = vsel %vm2000, %v2032, 0.0
          %v2065 = vsel %vm2001, %v2033, 0.0
          %v2066 = vsel %vm2002, %v2034, 0.0
          %v2067 = vsel %vm2003, %v2035, 0.0
          %v2068 = vsel %vm2004, %v2036, 0.0
          %v2069 = vsel %vm2005, %v2037, 0.0
          %v2070 = vsel %vm2006, %v2038, 0.0
          %v2071 = vsel %vm2007, %v2039, 0.0
          %v2072 = vsel %vm2008, %v2040, 0.0
          %v2073 = vsel %vm2009, %v2041, 0.0
          %v2074 = vsel %vm2010, %v2042, 0.0
          %v2075 = vsel %vm2011, %v2043, 0.0
          %v2076 = vsel %vm2012, %v2044, 0.0
          %v2077 = vsel %vm2013, %v2045, 0.0
          %v2078 = vsel %vm2014, %v2046, 0.0
          %v2079 = vsel %vm1919, %v1951, %v2047
          %v2080 = vsel %vm1920, %v1952, %v2048
          %v2081 = vsel %vm1921, %v1953, %v2049
          %v2082 = vsel %vm1922, %v1954, %v2050
          %v2083 = vsel %vm1923, %v1955, %v2051
          %v2084 = vsel %vm1924, %v1956, %v2052
          %v2085 = vsel %vm1925, %v1957, %v2053
          %v2086 = vsel %vm1926, %v1958, %v2054
          %v2087 = vsel %vm1927, %v1959, %v2055
          %v2088 = vsel %vm1928, %v1960, %v2056
          %v2089 = vsel %vm1929, %v1961, %v2057
          %v2090 = vsel %vm1930, %v1962, %v2058
          %v2091 = vsel %vm1931, %v1963, %v2059
          %v2092 = vsel %vm1932, %v1964, %v2060
          %v2093 = vsel %vm1933, %v1965, %v2061
          %v2094 = vsel %vm1934, %v1966, %v2062
          %v2095 = vsel %vm1935, %v1967, %v2063
          %v2096 = vsel %vm1936, %v1968, %v2064
          %v2097 = vsel %vm1937, %v1969, %v2065
          %v2098 = vsel %vm1938, %v1970, %v2066
          %v2099 = vsel %vm1939, %v1971, %v2067
          %v2100 = vsel %vm1940, %v1972, %v2068
          %v2101 = vsel %vm1941, %v1973, %v2069
          %v2102 = vsel %vm1942, %v1974, %v2070
          %v2103 = vsel %vm1943, %v1975, %v2071
          %v2104 = vsel %vm1944, %v1976, %v2072
          %v2105 = vsel %vm1945, %v1977, %v2073
          %v2106 = vsel %vm1946, %v1978, %v2074
          %v2107 = vsel %vm1947, %v1979, %v2075
          %v2108 = vsel %vm1948, %v1980, %v2076
          %v2109 = vsel %vm1949, %v1981, %v2077
          %v2110 = vsel %vm1950, %v1982, %v2078
          %v2111 = vpack.c.bf16 %v2080, %v2079
          %v2112 = vpack.c.bf16 %v2082, %v2081
          %v2113 = vpack.c.bf16 %v2084, %v2083
          %v2114 = vpack.c.bf16 %v2086, %v2085
          %v2115 = vpack.c.bf16 %v2088, %v2087
          %v2116 = vpack.c.bf16 %v2090, %v2089
          %v2117 = vpack.c.bf16 %v2092, %v2091
          %v2118 = vpack.c.bf16 %v2094, %v2093
          %v2119 = vpack.c.bf16 %v2096, %v2095
          %v2120 = vpack.c.bf16 %v2098, %v2097
          %v2121 = vpack.c.bf16 %v2100, %v2099
          %v2122 = vpack.c.bf16 %v2102, %v2101
          %v2123 = vpack.c.bf16 %v2104, %v2103
          %v2124 = vpack.c.bf16 %v2106, %v2105
          %v2125 = vpack.c.bf16 %v2108, %v2107
          %v2126 = vpack.c.bf16 %v2110, %v2109
          %v2143 = vunpack.c.l.b16 %v2111
          %v2144 = vunpack.c.h.b16 %v2111
          %v2145 = vunpack.c.l.b16 %v2112
          %v2146 = vunpack.c.h.b16 %v2112
          %v2147 = vunpack.c.l.b16 %v2113
          %v2148 = vunpack.c.h.b16 %v2113
          %v2149 = vunpack.c.l.b16 %v2114
          %v2150 = vunpack.c.h.b16 %v2114
          %v2151 = vunpack.c.l.b16 %v2115
          %v2152 = vunpack.c.h.b16 %v2115
          %v2153 = vunpack.c.l.b16 %v2116
          %v2154 = vunpack.c.h.b16 %v2116
          %v2155 = vunpack.c.l.b16 %v2117
          %v2156 = vunpack.c.h.b16 %v2117
          %v2157 = vunpack.c.l.b16 %v2118
          %v2158 = vunpack.c.h.b16 %v2118
          %v2159 = vunpack.c.l.b16 %v2119
          %v2160 = vunpack.c.h.b16 %v2119
          %v2161 = vunpack.c.l.b16 %v2120
          %v2162 = vunpack.c.h.b16 %v2120
          %v2163 = vunpack.c.l.b16 %v2121
          %v2164 = vunpack.c.h.b16 %v2121
          %v2165 = vunpack.c.l.b16 %v2122
          %v2166 = vunpack.c.h.b16 %v2122
          %v2167 = vunpack.c.l.b16 %v2123
          %v2168 = vunpack.c.h.b16 %v2123
          %v2169 = vunpack.c.l.b16 %v2124
          %v2170 = vunpack.c.h.b16 %v2124
          %v2171 = vunpack.c.l.b16 %v2125
          %v2172 = vunpack.c.h.b16 %v2125
          %v2173 = vunpack.c.l.b16 %v2126
          %v2174 = vunpack.c.h.b16 %v2126
          %v2175 = vpack.c.b16 %v2143, %v2143
          %v2176 = vpack.c.b16 %v2144, %v2144
          %v2177 = vpack.c.b16 %v2145, %v2145
          %v2178 = vpack.c.b16 %v2146, %v2146
          %v2179 = vpack.c.b16 %v2147, %v2147
          %v2180 = vpack.c.b16 %v2148, %v2148
          %v2181 = vpack.c.b16 %v2149, %v2149
          %v2182 = vpack.c.b16 %v2150, %v2150
          %v2183 = vpack.c.b16 %v2151, %v2151
          %v2184 = vpack.c.b16 %v2152, %v2152
          %v2185 = vpack.c.b16 %v2153, %v2153
          %v2186 = vpack.c.b16 %v2154, %v2154
          %v2187 = vpack.c.b16 %v2155, %v2155
          %v2188 = vpack.c.b16 %v2156, %v2156
          %v2189 = vpack.c.b16 %v2157, %v2157
          %v2190 = vpack.c.b16 %v2158, %v2158
          %v2191 = vpack.c.b16 %v2159, %v2159
          %v2192 = vpack.c.b16 %v2160, %v2160
          %v2193 = vpack.c.b16 %v2161, %v2161
          %v2194 = vpack.c.b16 %v2162, %v2162
          %v2195 = vpack.c.b16 %v2163, %v2163
          %v2196 = vpack.c.b16 %v2164, %v2164
          %v2197 = vpack.c.b16 %v2165, %v2165
          %v2198 = vpack.c.b16 %v2166, %v2166
          %v2199 = vpack.c.b16 %v2167, %v2167
          %v2200 = vpack.c.b16 %v2168, %v2168
          %v2201 = vpack.c.b16 %v2169, %v2169
          %v2202 = vpack.c.b16 %v2170, %v2170
          %v2203 = vpack.c.b16 %v2171, %v2171
          %v2204 = vpack.c.b16 %v2172, %v2172
          %v2205 = vpack.c.b16 %v2173, %v2173
          %v2206 = vpack.c.b16 %v2174, %v2174
          %s2239 = smul.addr %s1290, 4
          %s2240 = scalar_lea.vmem %s1280, %s2239 [#allocation3]
          %vm2241 = vcmask 125952
          %2242 = vst.msk [vmem:[%s2240] sm:$0xf] %vm2241, %v2175
          %2243 = vst.msk [vmem:[%s2240 + $0x4] sm:$0xf] %vm2241, %v2176
          %2244 = vst.msk [vmem:[%s2240 + $0x8] sm:$0xf] %vm2241, %v2177
          %2245 = vst.msk [vmem:[%s2240 + $0xc] sm:$0xf] %vm2241, %v2178
          %2246 = vst.msk [vmem:[%s2240 + $0x10] sm:$0xf] %vm2241, %v2179
          %2247 = vst.msk [vmem:[%s2240 + $0x14] sm:$0xf] %vm2241, %v2180
          %2248 = vst.msk [vmem:[%s2240 + $0x18] sm:$0xf] %vm2241, %v2181
          %2249 = vst.msk [vmem:[%s2240 + $0x1c] sm:$0xf] %vm2241, %v2182
          %2250 = vst.msk [vmem:[%s2240 + $0x20] sm:$0xf] %vm2241, %v2183
          %2251 = vst.msk [vmem:[%s2240 + $0x24] sm:$0xf] %vm2241, %v2184
          %2252 = vst.msk [vmem:[%s2240 + $0x28] sm:$0xf] %vm2241, %v2185
          %2253 = vst.msk [vmem:[%s2240 + $0x2c] sm:$0xf] %vm2241, %v2186
          %2254 = vst.msk [vmem:[%s2240 + $0x30] sm:$0xf] %vm2241, %v2187
          %2255 = vst.msk [vmem:[%s2240 + $0x34] sm:$0xf] %vm2241, %v2188
          %2256 = vst.msk [vmem:[%s2240 + $0x38] sm:$0xf] %vm2241, %v2189
          %2257 = vst.msk [vmem:[%s2240 + $0x3c] sm:$0xf] %vm2241, %v2190
          %2258 = vst.msk [vmem:[%s2240 + $0x40] sm:$0xf] %vm2241, %v2191
          %2259 = vst.msk [vmem:[%s2240 + $0x44] sm:$0xf] %vm2241, %v2192
          %2260 = vst.msk [vmem:[%s2240 + $0x48] sm:$0xf] %vm2241, %v2193
          %2261 = vst.msk [vmem:[%s2240 + $0x4c] sm:$0xf] %vm2241, %v2194
          %2262 = vst.msk [vmem:[%s2240 + $0x50] sm:$0xf] %vm2241, %v2195
          %2263 = vst.msk [vmem:[%s2240 + $0x54] sm:$0xf] %vm2241, %v2196
          %2264 = vst.msk [vmem:[%s2240 + $0x58] sm:$0xf] %vm2241, %v2197
          %2265 = vst.msk [vmem:[%s2240 + $0x5c] sm:$0xf] %vm2241, %v2198
          %2266 = vst.msk [vmem:[%s2240 + $0x60] sm:$0xf] %vm2241, %v2199
          %2267 = vst.msk [vmem:[%s2240 + $0x64] sm:$0xf] %vm2241, %v2200
          %2268 = vst.msk [vmem:[%s2240 + $0x68] sm:$0xf] %vm2241, %v2201
          %2269 = vst.msk [vmem:[%s2240 + $0x6c] sm:$0xf] %vm2241, %v2202
          %2270 = vst.msk [vmem:[%s2240 + $0x70] sm:$0xf] %vm2241, %v2203
          %2271 = vst.msk [vmem:[%s2240 + $0x74] sm:$0xf] %vm2241, %v2204
          %2272 = vst.msk [vmem:[%s2240 + $0x78] sm:$0xf] %vm2241, %v2205
          %2273 = vst.msk [vmem:[%s2240 + $0x7c] sm:$0xf] %vm2241, %v2206
        $region86: #{a_call__.1} parent=76 // loop_footer
          %s1289 = sadd.s32 1, %s1285
        $region87: #{a_call__.1} parent=76 // loop_footer_branch
          %1284 = sbr.rel target = $region83
        $region88: #{a_call__.1} parent=76 // loop_exit
          _
        %s2274 = sand.u32 %s134, 1
        %s2275 = sand.u32 %s134, 1
        %s2276 = smul.addr %s2275, 1024
        %s2277 = scalar_lea.vmem [#allocation3], %s2276
        // Predicated region
        $region89: #{a_call__.1} parent=76 // pred_check
          %p2278 = pneg %p144
        $region90: #{a_call__.1} parent=76 // pred_check_branch
          %2280 = sbr.rel (%p2278) target = $region92
        $region91: #{a_call__.1} parent=76 // pred_region
          %s2281 = smul.u32 32, %s16
          %s2282 = smul.addr %s2281, 4
          %s2283 = scalar_lea.vmem %s5, %s2282
          // Predicated region
          $region93: #{a_call__.1} parent=91 // pred_check
            _
          $region94: #{a_call__.1} parent=91 // pred_check_branch
            %2285 = sbr.rel (0) target = $region96
          $region95: #{a_call__.1} parent=91 // pred_region
            // Predicated region
            $region97: #{a_call__.1} parent=95 // pred_check
              _
            $region98: #{a_call__.1} parent=95 // pred_check_branch
              %2287 = sbr.rel target = $region100
            $region99: #{a_call__.1} parent=95 // pred_region
              // Predicated region
              $region112: #{a_call__.1} parent=99 // pred_check
                _
              $region113: #{a_call__.1} parent=99 // pred_check_branch
                %2812 = sbr.rel (0) target = $region115
              $region114: #{a_call__.1} parent=99 // pred_region
                loop: start=0, step=1, limit=1
                $region116: #{a_call__.1} parent=114 // loop_pre_header
                  _
                $region117: #{a_call__.1} parent=114 // loop_header
                  %s2814 = sphi 0, %s2818
                  %p2815 = scmp.ge.s32.totalorder %s2814, 1
                  %s2819 = sphi %s2277, %s2277
                  %s2820 = sphi %s2283, %s2283
                $region118: #{a_call__.1} parent=114 // loop_header_branch
                  %2817 = sbr.rel (%p2815) target = $region122
                $region119: #{a_call__.1} parent=114 // loop_body
                  _
                $region120: #{a_call__.1} parent=114 // loop_footer
                  %s2818 = sadd.s32 1, %s2814
                $region121: #{a_call__.1} parent=114 // loop_footer_branch
                  %2813 = sbr.rel target = $region117
                $region122: #{a_call__.1} parent=114 // loop_exit
                  _
                loop: start=0, step=1, limit=1
                $region123: #{a_call__.1} parent=114 // loop_pre_header
                  _
                $region124: #{a_call__.1} parent=114 // loop_header
                  %s2823 = sphi 0, %s2827
                  %p2824 = scmp.ge.s32.totalorder %s2823, 1
                  %s2828 = sphi %s2277, %s2277
                  %s2829 = sphi %s2283, %s2283
                $region125: #{a_call__.1} parent=114 // loop_header_branch
                  %2826 = sbr.rel (%p2824) target = $region129
                $region126: #{a_call__.1} parent=114 // loop_body
                  %v2830 = vld [vmem:[%s2828] sm:$0xf]
                  %2831 = vst [vmem:[%s2829] sm:$0xf] %v2830
                  %v2832 = vld [vmem:[%s2828 + $0x4] sm:$0xf]
                  %2833 = vst [vmem:[%s2829 + $0x4] sm:$0xf] %v2832
                  %v2834 = vld [vmem:[%s2828 + $0x8] sm:$0xf]
                  %2835 = vst [vmem:[%s2829 + $0x8] sm:$0xf] %v2834
                  %v2836 = vld [vmem:[%s2828 + $0xc] sm:$0xf]
                  %2837 = vst [vmem:[%s2829 + $0xc] sm:$0xf] %v2836
                  %v2838 = vld [vmem:[%s2828 + $0x10] sm:$0xf]
                  %2839 = vst [vmem:[%s2829 + $0x10] sm:$0xf] %v2838
                  %v2840 = vld [vmem:[%s2828 + $0x14] sm:$0xf]
                  %2841 = vst [vmem:[%s2829 + $0x14] sm:$0xf] %v2840
                  %v2842 = vld [vmem:[%s2828 + $0x18] sm:$0xf]
                  %2843 = vst [vmem:[%s2829 + $0x18] sm:$0xf] %v2842
                  %v2844 = vld [vmem:[%s2828 + $0x1c] sm:$0xf]
                  %2845 = vst [vmem:[%s2829 + $0x1c] sm:$0xf] %v2844
                  %v2846 = vld [vmem:[%s2828 + $0x20] sm:$0xf]
                  %2847 = vst [vmem:[%s2829 + $0x20] sm:$0xf] %v2846
                  %v2848 = vld [vmem:[%s2828 + $0x24] sm:$0xf]
                  %2849 = vst [vmem:[%s2829 + $0x24] sm:$0xf] %v2848
                  %v2850 = vld [vmem:[%s2828 + $0x28] sm:$0xf]
                  %2851 = vst [vmem:[%s2829 + $0x28] sm:$0xf] %v2850
                  %v2852 = vld [vmem:[%s2828 + $0x2c] sm:$0xf]
                  %2853 = vst [vmem:[%s2829 + $0x2c] sm:$0xf] %v2852
                  %v2854 = vld [vmem:[%s2828 + $0x30] sm:$0xf]
                  %2855 = vst [vmem:[%s2829 + $0x30] sm:$0xf] %v2854
                  %v2856 = vld [vmem:[%s2828 + $0x34] sm:$0xf]
                  %2857 = vst [vmem:[%s2829 + $0x34] sm:$0xf] %v2856
                  %v2858 = vld [vmem:[%s2828 + $0x38] sm:$0xf]
                  %2859 = vst [vmem:[%s2829 + $0x38] sm:$0xf] %v2858
                  %v2860 = vld [vmem:[%s2828 + $0x3c] sm:$0xf]
                  %2861 = vst [vmem:[%s2829 + $0x3c] sm:$0xf] %v2860
                  %v2862 = vld [vmem:[%s2828 + $0x40] sm:$0xf]
                  %2863 = vst [vmem:[%s2829 + $0x40] sm:$0xf] %v2862
                  %v2864 = vld [vmem:[%s2828 + $0x44] sm:$0xf]
                  %2865 = vst [vmem:[%s2829 + $0x44] sm:$0xf] %v2864
                  %v2866 = vld [vmem:[%s2828 + $0x48] sm:$0xf]
                  %2867 = vst [vmem:[%s2829 + $0x48] sm:$0xf] %v2866
                  %v2868 = vld [vmem:[%s2828 + $0x4c] sm:$0xf]
                  %2869 = vst [vmem:[%s2829 + $0x4c] sm:$0xf] %v2868
                  %v2870 = vld [vmem:[%s2828 + $0x50] sm:$0xf]
                  %2871 = vst [vmem:[%s2829 + $0x50] sm:$0xf] %v2870
                  %v2872 = vld [vmem:[%s2828 + $0x54] sm:$0xf]
                  %2873 = vst [vmem:[%s2829 + $0x54] sm:$0xf] %v2872
                  %v2874 = vld [vmem:[%s2828 + $0x58] sm:$0xf]
                  %2875 = vst [vmem:[%s2829 + $0x58] sm:$0xf] %v2874
                  %v2876 = vld [vmem:[%s2828 + $0x5c] sm:$0xf]
                  %2877 = vst [vmem:[%s2829 + $0x5c] sm:$0xf] %v2876
                  %v2878 = vld [vmem:[%s2828 + $0x60] sm:$0xf]
                  %2879 = vst [vmem:[%s2829 + $0x60] sm:$0xf] %v2878
                  %v2880 = vld [vmem:[%s2828 + $0x64] sm:$0xf]
                  %2881 = vst [vmem:[%s2829 + $0x64] sm:$0xf] %v2880
                  %v2882 = vld [vmem:[%s2828 + $0x68] sm:$0xf]
                  %2883 = vst [vmem:[%s2829 + $0x68] sm:$0xf] %v2882
                  %v2884 = vld [vmem:[%s2828 + $0x6c] sm:$0xf]
                  %2885 = vst [vmem:[%s2829 + $0x6c] sm:$0xf] %v2884
                  %v2886 = vld [vmem:[%s2828 + $0x70] sm:$0xf]
                  %2887 = vst [vmem:[%s2829 + $0x70] sm:$0xf] %v2886
                  %v2888 = vld [vmem:[%s2828 + $0x74] sm:$0xf]
                  %2889 = vst [vmem:[%s2829 + $0x74] sm:$0xf] %v2888
                  %v2890 = vld [vmem:[%s2828 + $0x78] sm:$0xf]
                  %2891 = vst [vmem:[%s2829 + $0x78] sm:$0xf] %v2890
                  %v2892 = vld [vmem:[%s2828 + $0x7c] sm:$0xf]
                  %2893 = vst [vmem:[%s2829 + $0x7c] sm:$0xf] %v2892
                  %v2894 = vld [vmem:[%s2828 + $0x80] sm:$0xf]
                  %2895 = vst [vmem:[%s2829 + $0x100] sm:$0xf] %v2894
                  %v2896 = vld [vmem:[%s2828 + $0x84] sm:$0xf]
                  %2897 = vst [vmem:[%s2829 + $0x104] sm:$0xf] %v2896
                  %v2898 = vld [vmem:[%s2828 + $0x88] sm:$0xf]
                  %2899 = vst [vmem:[%s2829 + $0x108] sm:$0xf] %v2898
                  %v2900 = vld [vmem:[%s2828 + $0x8c] sm:$0xf]
                  %2901 = vst [vmem:[%s2829 + $0x10c] sm:$0xf] %v2900
                  %v2902 = vld [vmem:[%s2828 + $0x90] sm:$0xf]
                  %2903 = vst [vmem:[%s2829 + $0x110] sm:$0xf] %v2902
                  %v2904 = vld [vmem:[%s2828 + $0x94] sm:$0xf]
                  %2905 = vst [vmem:[%s2829 + $0x114] sm:$0xf] %v2904
                  %v2906 = vld [vmem:[%s2828 + $0x98] sm:$0xf]
                  %2907 = vst [vmem:[%s2829 + $0x118] sm:$0xf] %v2906
                  %v2908 = vld [vmem:[%s2828 + $0x9c] sm:$0xf]
                  %2909 = vst [vmem:[%s2829 + $0x11c] sm:$0xf] %v2908
                  %v2910 = vld [vmem:[%s2828 + $0xa0] sm:$0xf]
                  %2911 = vst [vmem:[%s2829 + $0x120] sm:$0xf] %v2910
                  %v2912 = vld [vmem:[%s2828 + $0xa4] sm:$0xf]
                  %2913 = vst [vmem:[%s2829 + $0x124] sm:$0xf] %v2912
                  %v2914 = vld [vmem:[%s2828 + $0xa8] sm:$0xf]
                  %2915 = vst [vmem:[%s2829 + $0x128] sm:$0xf] %v2914
                  %v2916 = vld [vmem:[%s2828 + $0xac] sm:$0xf]
                  %2917 = vst [vmem:[%s2829 + $0x12c] sm:$0xf] %v2916
                  %v2918 = vld [vmem:[%s2828 + $0xb0] sm:$0xf]
                  %2919 = vst [vmem:[%s2829 + $0x130] sm:$0xf] %v2918
                  %v2920 = vld [vmem:[%s2828 + $0xb4] sm:$0xf]
                  %2921 = vst [vmem:[%s2829 + $0x134] sm:$0xf] %v2920
                  %v2922 = vld [vmem:[%s2828 + $0xb8] sm:$0xf]
                  %2923 = vst [vmem:[%s2829 + $0x138] sm:$0xf] %v2922
                  %v2924 = vld [vmem:[%s2828 + $0xbc] sm:$0xf]
                  %2925 = vst [vmem:[%s2829 + $0x13c] sm:$0xf] %v2924
                  %v2926 = vld [vmem:[%s2828 + $0xc0] sm:$0xf]
                  %2927 = vst [vmem:[%s2829 + $0x140] sm:$0xf] %v2926
                  %v2928 = vld [vmem:[%s2828 + $0xc4] sm:$0xf]
                  %2929 = vst [vmem:[%s2829 + $0x144] sm:$0xf] %v2928
                  %v2930 = vld [vmem:[%s2828 + $0xc8] sm:$0xf]
                  %2931 = vst [vmem:[%s2829 + $0x148] sm:$0xf] %v2930
                  %v2932 = vld [vmem:[%s2828 + $0xcc] sm:$0xf]
                  %2933 = vst [vmem:[%s2829 + $0x14c] sm:$0xf] %v2932
                  %v2934 = vld [vmem:[%s2828 + $0xd0] sm:$0xf]
                  %2935 = vst [vmem:[%s2829 + $0x150] sm:$0xf] %v2934
                  %v2936 = vld [vmem:[%s2828 + $0xd4] sm:$0xf]
                  %2937 = vst [vmem:[%s2829 + $0x154] sm:$0xf] %v2936
                  %v2938 = vld [vmem:[%s2828 + $0xd8] sm:$0xf]
                  %2939 = vst [vmem:[%s2829 + $0x158] sm:$0xf] %v2938
                  %v2940 = vld [vmem:[%s2828 + $0xdc] sm:$0xf]
                  %2941 = vst [vmem:[%s2829 + $0x15c] sm:$0xf] %v2940
                  %v2942 = vld [vmem:[%s2828 + $0xe0] sm:$0xf]
                  %2943 = vst [vmem:[%s2829 + $0x160] sm:$0xf] %v2942
                  %v2944 = vld [vmem:[%s2828 + $0xe4] sm:$0xf]
                  %2945 = vst [vmem:[%s2829 + $0x164] sm:$0xf] %v2944
                  %v2946 = vld [vmem:[%s2828 + $0xe8] sm:$0xf]
                  %2947 = vst [vmem:[%s2829 + $0x168] sm:$0xf] %v2946
                  %v2948 = vld [vmem:[%s2828 + $0xec] sm:$0xf]
                  %2949 = vst [vmem:[%s2829 + $0x16c] sm:$0xf] %v2948
                  %v2950 = vld [vmem:[%s2828 + $0xf0] sm:$0xf]
                  %2951 = vst [vmem:[%s2829 + $0x170] sm:$0xf] %v2950
                  %v2952 = vld [vmem:[%s2828 + $0xf4] sm:$0xf]
                  %2953 = vst [vmem:[%s2829 + $0x174] sm:$0xf] %v2952
                  %v2954 = vld [vmem:[%s2828 + $0xf8] sm:$0xf]
                  %2955 = vst [vmem:[%s2829 + $0x178] sm:$0xf] %v2954
                  %v2956 = vld [vmem:[%s2828 + $0xfc] sm:$0xf]
                  %2957 = vst [vmem:[%s2829 + $0x17c] sm:$0xf] %v2956
                  %v2958 = vld [vmem:[%s2828 + $0x100] sm:$0xf]
                  %2959 = vst [vmem:[%s2829 + $0x200] sm:$0xf] %v2958
                  %v2960 = vld [vmem:[%s2828 + $0x104] sm:$0xf]
                  %2961 = vst [vmem:[%s2829 + $0x204] sm:$0xf] %v2960
                  %v2962 = vld [vmem:[%s2828 + $0x108] sm:$0xf]
                  %2963 = vst [vmem:[%s2829 + $0x208] sm:$0xf] %v2962
                  %v2964 = vld [vmem:[%s2828 + $0x10c] sm:$0xf]
                  %2965 = vst [vmem:[%s2829 + $0x20c] sm:$0xf] %v2964
                  %v2966 = vld [vmem:[%s2828 + $0x110] sm:$0xf]
                  %2967 = vst [vmem:[%s2829 + $0x210] sm:$0xf] %v2966
                  %v2968 = vld [vmem:[%s2828 + $0x114] sm:$0xf]
                  %2969 = vst [vmem:[%s2829 + $0x214] sm:$0xf] %v2968
                  %v2970 = vld [vmem:[%s2828 + $0x118] sm:$0xf]
                  %2971 = vst [vmem:[%s2829 + $0x218] sm:$0xf] %v2970
                  %v2972 = vld [vmem:[%s2828 + $0x11c] sm:$0xf]
                  %2973 = vst [vmem:[%s2829 + $0x21c] sm:$0xf] %v2972
                  %v2974 = vld [vmem:[%s2828 + $0x120] sm:$0xf]
                  %2975 = vst [vmem:[%s2829 + $0x220] sm:$0xf] %v2974
                  %v2976 = vld [vmem:[%s2828 + $0x124] sm:$0xf]
                  %2977 = vst [vmem:[%s2829 + $0x224] sm:$0xf] %v2976
                  %v2978 = vld [vmem:[%s2828 + $0x128] sm:$0xf]
                  %2979 = vst [vmem:[%s2829 + $0x228] sm:$0xf] %v2978
                  %v2980 = vld [vmem:[%s2828 + $0x12c] sm:$0xf]
                  %2981 = vst [vmem:[%s2829 + $0x22c] sm:$0xf] %v2980
                  %v2982 = vld [vmem:[%s2828 + $0x130] sm:$0xf]
                  %2983 = vst [vmem:[%s2829 + $0x230] sm:$0xf] %v2982
                  %v2984 = vld [vmem:[%s2828 + $0x134] sm:$0xf]
                  %2985 = vst [vmem:[%s2829 + $0x234] sm:$0xf] %v2984
                  %v2986 = vld [vmem:[%s2828 + $0x138] sm:$0xf]
                  %2987 = vst [vmem:[%s2829 + $0x238] sm:$0xf] %v2986
                  %v2988 = vld [vmem:[%s2828 + $0x13c] sm:$0xf]
                  %2989 = vst [vmem:[%s2829 + $0x23c] sm:$0xf] %v2988
                  %v2990 = vld [vmem:[%s2828 + $0x140] sm:$0xf]
                  %2991 = vst [vmem:[%s2829 + $0x240] sm:$0xf] %v2990
                  %v2992 = vld [vmem:[%s2828 + $0x144] sm:$0xf]
                  %2993 = vst [vmem:[%s2829 + $0x244] sm:$0xf] %v2992
                  %v2994 = vld [vmem:[%s2828 + $0x148] sm:$0xf]
                  %2995 = vst [vmem:[%s2829 + $0x248] sm:$0xf] %v2994
                  %v2996 = vld [vmem:[%s2828 + $0x14c] sm:$0xf]
                  %2997 = vst [vmem:[%s2829 + $0x24c] sm:$0xf] %v2996
                  %v2998 = vld [vmem:[%s2828 + $0x150] sm:$0xf]
                  %2999 = vst [vmem:[%s2829 + $0x250] sm:$0xf] %v2998
                  %v3000 = vld [vmem:[%s2828 + $0x154] sm:$0xf]
                  %3001 = vst [vmem:[%s2829 + $0x254] sm:$0xf] %v3000
                  %v3002 = vld [vmem:[%s2828 + $0x158] sm:$0xf]
                  %3003 = vst [vmem:[%s2829 + $0x258] sm:$0xf] %v3002
                  %v3004 = vld [vmem:[%s2828 + $0x15c] sm:$0xf]
                  %3005 = vst [vmem:[%s2829 + $0x25c] sm:$0xf] %v3004
                  %v3006 = vld [vmem:[%s2828 + $0x160] sm:$0xf]
                  %3007 = vst [vmem:[%s2829 + $0x260] sm:$0xf] %v3006
                  %v3008 = vld [vmem:[%s2828 + $0x164] sm:$0xf]
                  %3009 = vst [vmem:[%s2829 + $0x264] sm:$0xf] %v3008
                  %v3010 = vld [vmem:[%s2828 + $0x168] sm:$0xf]
                  %3011 = vst [vmem:[%s2829 + $0x268] sm:$0xf] %v3010
                  %v3012 = vld [vmem:[%s2828 + $0x16c] sm:$0xf]
                  %3013 = vst [vmem:[%s2829 + $0x26c] sm:$0xf] %v3012
                  %v3014 = vld [vmem:[%s2828 + $0x170] sm:$0xf]
                  %3015 = vst [vmem:[%s2829 + $0x270] sm:$0xf] %v3014
                  %v3016 = vld [vmem:[%s2828 + $0x174] sm:$0xf]
                  %3017 = vst [vmem:[%s2829 + $0x274] sm:$0xf] %v3016
                  %v3018 = vld [vmem:[%s2828 + $0x178] sm:$0xf]
                  %3019 = vst [vmem:[%s2829 + $0x278] sm:$0xf] %v3018
                  %v3020 = vld [vmem:[%s2828 + $0x17c] sm:$0xf]
                  %3021 = vst [vmem:[%s2829 + $0x27c] sm:$0xf] %v3020
                  %v3022 = vld [vmem:[%s2828 + $0x180] sm:$0xf]
                  %3023 = vst [vmem:[%s2829 + $0x300] sm:$0xf] %v3022
                  %v3024 = vld [vmem:[%s2828 + $0x184] sm:$0xf]
                  %3025 = vst [vmem:[%s2829 + $0x304] sm:$0xf] %v3024
                  %v3026 = vld [vmem:[%s2828 + $0x188] sm:$0xf]
                  %3027 = vst [vmem:[%s2829 + $0x308] sm:$0xf] %v3026
                  %v3028 = vld [vmem:[%s2828 + $0x18c] sm:$0xf]
                  %3029 = vst [vmem:[%s2829 + $0x30c] sm:$0xf] %v3028
                  %v3030 = vld [vmem:[%s2828 + $0x190] sm:$0xf]
                  %3031 = vst [vmem:[%s2829 + $0x310] sm:$0xf] %v3030
                  %v3032 = vld [vmem:[%s2828 + $0x194] sm:$0xf]
                  %3033 = vst [vmem:[%s2829 + $0x314] sm:$0xf] %v3032
                  %v3034 = vld [vmem:[%s2828 + $0x198] sm:$0xf]
                  %3035 = vst [vmem:[%s2829 + $0x318] sm:$0xf] %v3034
                  %v3036 = vld [vmem:[%s2828 + $0x19c] sm:$0xf]
                  %3037 = vst [vmem:[%s2829 + $0x31c] sm:$0xf] %v3036
                  %v3038 = vld [vmem:[%s2828 + $0x1a0] sm:$0xf]
                  %3039 = vst [vmem:[%s2829 + $0x320] sm:$0xf] %v3038
                  %v3040 = vld [vmem:[%s2828 + $0x1a4] sm:$0xf]
                  %3041 = vst [vmem:[%s2829 + $0x324] sm:$0xf] %v3040
                  %v3042 = vld [vmem:[%s2828 + $0x1a8] sm:$0xf]
                  %3043 = vst [vmem:[%s2829 + $0x328] sm:$0xf] %v3042
                  %v3044 = vld [vmem:[%s2828 + $0x1ac] sm:$0xf]
                  %3045 = vst [vmem:[%s2829 + $0x32c] sm:$0xf] %v3044
                  %v3046 = vld [vmem:[%s2828 + $0x1b0] sm:$0xf]
                  %3047 = vst [vmem:[%s2829 + $0x330] sm:$0xf] %v3046
                  %v3048 = vld [vmem:[%s2828 + $0x1b4] sm:$0xf]
                  %3049 = vst [vmem:[%s2829 + $0x334] sm:$0xf] %v3048
                  %v3050 = vld [vmem:[%s2828 + $0x1b8] sm:$0xf]
                  %3051 = vst [vmem:[%s2829 + $0x338] sm:$0xf] %v3050
                  %v3052 = vld [vmem:[%s2828 + $0x1bc] sm:$0xf]
                  %3053 = vst [vmem:[%s2829 + $0x33c] sm:$0xf] %v3052
                  %v3054 = vld [vmem:[%s2828 + $0x1c0] sm:$0xf]
                  %3055 = vst [vmem:[%s2829 + $0x340] sm:$0xf] %v3054
                  %v3056 = vld [vmem:[%s2828 + $0x1c4] sm:$0xf]
                  %3057 = vst [vmem:[%s2829 + $0x344] sm:$0xf] %v3056
                  %v3058 = vld [vmem:[%s2828 + $0x1c8] sm:$0xf]
                  %3059 = vst [vmem:[%s2829 + $0x348] sm:$0xf] %v3058
                  %v3060 = vld [vmem:[%s2828 + $0x1cc] sm:$0xf]
                  %3061 = vst [vmem:[%s2829 + $0x34c] sm:$0xf] %v3060
                  %v3062 = vld [vmem:[%s2828 + $0x1d0] sm:$0xf]
                  %3063 = vst [vmem:[%s2829 + $0x350] sm:$0xf] %v3062
                  %v3064 = vld [vmem:[%s2828 + $0x1d4] sm:$0xf]
                  %3065 = vst [vmem:[%s2829 + $0x354] sm:$0xf] %v3064
                  %v3066 = vld [vmem:[%s2828 + $0x1d8] sm:$0xf]
                  %3067 = vst [vmem:[%s2829 + $0x358] sm:$0xf] %v3066
                  %v3068 = vld [vmem:[%s2828 + $0x1dc] sm:$0xf]
                  %3069 = vst [vmem:[%s2829 + $0x35c] sm:$0xf] %v3068
                  %v3070 = vld [vmem:[%s2828 + $0x1e0] sm:$0xf]
                  %3071 = vst [vmem:[%s2829 + $0x360] sm:$0xf] %v3070
                  %v3072 = vld [vmem:[%s2828 + $0x1e4] sm:$0xf]
                  %3073 = vst [vmem:[%s2829 + $0x364] sm:$0xf] %v3072
                  %v3074 = vld [vmem:[%s2828 + $0x1e8] sm:$0xf]
                  %3075 = vst [vmem:[%s2829 + $0x368] sm:$0xf] %v3074
                  %v3076 = vld [vmem:[%s2828 + $0x1ec] sm:$0xf]
                  %3077 = vst [vmem:[%s2829 + $0x36c] sm:$0xf] %v3076
                  %v3078 = vld [vmem:[%s2828 + $0x1f0] sm:$0xf]
                  %3079 = vst [vmem:[%s2829 + $0x370] sm:$0xf] %v3078
                  %v3080 = vld [vmem:[%s2828 + $0x1f4] sm:$0xf]
                  %3081 = vst [vmem:[%s2829 + $0x374] sm:$0xf] %v3080
                  %v3082 = vld [vmem:[%s2828 + $0x1f8] sm:$0xf]
                  %3083 = vst [vmem:[%s2829 + $0x378] sm:$0xf] %v3082
                  %v3084 = vld [vmem:[%s2828 + $0x1fc] sm:$0xf]
                  %3085 = vst [vmem:[%s2829 + $0x37c] sm:$0xf] %v3084
                  %v3086 = vld [vmem:[%s2828 + $0x200] sm:$0xf]
                  %3087 = vst [vmem:[%s2829 + $0x400] sm:$0xf] %v3086
                  %v3088 = vld [vmem:[%s2828 + $0x204] sm:$0xf]
                  %3089 = vst [vmem:[%s2829 + $0x404] sm:$0xf] %v3088
                  %v3090 = vld [vmem:[%s2828 + $0x208] sm:$0xf]
                  %3091 = vst [vmem:[%s2829 + $0x408] sm:$0xf] %v3090
                  %v3092 = vld [vmem:[%s2828 + $0x20c] sm:$0xf]
                  %3093 = vst [vmem:[%s2829 + $0x40c] sm:$0xf] %v3092
                  %v3094 = vld [vmem:[%s2828 + $0x210] sm:$0xf]
                  %3095 = vst [vmem:[%s2829 + $0x410] sm:$0xf] %v3094
                  %v3096 = vld [vmem:[%s2828 + $0x214] sm:$0xf]
                  %3097 = vst [vmem:[%s2829 + $0x414] sm:$0xf] %v3096
                  %v3098 = vld [vmem:[%s2828 + $0x218] sm:$0xf]
                  %3099 = vst [vmem:[%s2829 + $0x418] sm:$0xf] %v3098
                  %v3100 = vld [vmem:[%s2828 + $0x21c] sm:$0xf]
                  %3101 = vst [vmem:[%s2829 + $0x41c] sm:$0xf] %v3100
                  %v3102 = vld [vmem:[%s2828 + $0x220] sm:$0xf]
                  %3103 = vst [vmem:[%s2829 + $0x420] sm:$0xf] %v3102
                  %v3104 = vld [vmem:[%s2828 + $0x224] sm:$0xf]
                  %3105 = vst [vmem:[%s2829 + $0x424] sm:$0xf] %v3104
                  %v3106 = vld [vmem:[%s2828 + $0x228] sm:$0xf]
                  %3107 = vst [vmem:[%s2829 + $0x428] sm:$0xf] %v3106
                  %v3108 = vld [vmem:[%s2828 + $0x22c] sm:$0xf]
                  %3109 = vst [vmem:[%s2829 + $0x42c] sm:$0xf] %v3108
                  %v3110 = vld [vmem:[%s2828 + $0x230] sm:$0xf]
                  %3111 = vst [vmem:[%s2829 + $0x430] sm:$0xf] %v3110
                  %v3112 = vld [vmem:[%s2828 + $0x234] sm:$0xf]
                  %3113 = vst [vmem:[%s2829 + $0x434] sm:$0xf] %v3112
                  %v3114 = vld [vmem:[%s2828 + $0x238] sm:$0xf]
                  %3115 = vst [vmem:[%s2829 + $0x438] sm:$0xf] %v3114
                  %v3116 = vld [vmem:[%s2828 + $0x23c] sm:$0xf]
                  %3117 = vst [vmem:[%s2829 + $0x43c] sm:$0xf] %v3116
                  %v3118 = vld [vmem:[%s2828 + $0x240] sm:$0xf]
                  %3119 = vst [vmem:[%s2829 + $0x440] sm:$0xf] %v3118
                  %v3120 = vld [vmem:[%s2828 + $0x244] sm:$0xf]
                  %3121 = vst [vmem:[%s2829 + $0x444] sm:$0xf] %v3120
                  %v3122 = vld [vmem:[%s2828 + $0x248] sm:$0xf]
                  %3123 = vst [vmem:[%s2829 + $0x448] sm:$0xf] %v3122
                  %v3124 = vld [vmem:[%s2828 + $0x24c] sm:$0xf]
                  %3125 = vst [vmem:[%s2829 + $0x44c] sm:$0xf] %v3124
                  %v3126 = vld [vmem:[%s2828 + $0x250] sm:$0xf]
                  %3127 = vst [vmem:[%s2829 + $0x450] sm:$0xf] %v3126
                  %v3128 = vld [vmem:[%s2828 + $0x254] sm:$0xf]
                  %3129 = vst [vmem:[%s2829 + $0x454] sm:$0xf] %v3128
                  %v3130 = vld [vmem:[%s2828 + $0x258] sm:$0xf]
                  %3131 = vst [vmem:[%s2829 + $0x458] sm:$0xf] %v3130
                  %v3132 = vld [vmem:[%s2828 + $0x25c] sm:$0xf]
                  %3133 = vst [vmem:[%s2829 + $0x45c] sm:$0xf] %v3132
                  %v3134 = vld [vmem:[%s2828 + $0x260] sm:$0xf]
                  %3135 = vst [vmem:[%s2829 + $0x460] sm:$0xf] %v3134
                  %v3136 = vld [vmem:[%s2828 + $0x264] sm:$0xf]
                  %3137 = vst [vmem:[%s2829 + $0x464] sm:$0xf] %v3136
                  %v3138 = vld [vmem:[%s2828 + $0x268] sm:$0xf]
                  %3139 = vst [vmem:[%s2829 + $0x468] sm:$0xf] %v3138
                  %v3140 = vld [vmem:[%s2828 + $0x26c] sm:$0xf]
                  %3141 = vst [vmem:[%s2829 + $0x46c] sm:$0xf] %v3140
                  %v3142 = vld [vmem:[%s2828 + $0x270] sm:$0xf]
                  %3143 = vst [vmem:[%s2829 + $0x470] sm:$0xf] %v3142
                  %v3144 = vld [vmem:[%s2828 + $0x274] sm:$0xf]
                  %3145 = vst [vmem:[%s2829 + $0x474] sm:$0xf] %v3144
                  %v3146 = vld [vmem:[%s2828 + $0x278] sm:$0xf]
                  %3147 = vst [vmem:[%s2829 + $0x478] sm:$0xf] %v3146
                  %v3148 = vld [vmem:[%s2828 + $0x27c] sm:$0xf]
                  %3149 = vst [vmem:[%s2829 + $0x47c] sm:$0xf] %v3148
                  %v3150 = vld [vmem:[%s2828 + $0x280] sm:$0xf]
                  %3151 = vst [vmem:[%s2829 + $0x500] sm:$0xf] %v3150
                  %v3152 = vld [vmem:[%s2828 + $0x284] sm:$0xf]
                  %3153 = vst [vmem:[%s2829 + $0x504] sm:$0xf] %v3152
                  %v3154 = vld [vmem:[%s2828 + $0x288] sm:$0xf]
                  %3155 = vst [vmem:[%s2829 + $0x508] sm:$0xf] %v3154
                  %v3156 = vld [vmem:[%s2828 + $0x28c] sm:$0xf]
                  %3157 = vst [vmem:[%s2829 + $0x50c] sm:$0xf] %v3156
                  %v3158 = vld [vmem:[%s2828 + $0x290] sm:$0xf]
                  %3159 = vst [vmem:[%s2829 + $0x510] sm:$0xf] %v3158
                  %v3160 = vld [vmem:[%s2828 + $0x294] sm:$0xf]
                  %3161 = vst [vmem:[%s2829 + $0x514] sm:$0xf] %v3160
                  %v3162 = vld [vmem:[%s2828 + $0x298] sm:$0xf]
                  %3163 = vst [vmem:[%s2829 + $0x518] sm:$0xf] %v3162
                  %v3164 = vld [vmem:[%s2828 + $0x29c] sm:$0xf]
                  %3165 = vst [vmem:[%s2829 + $0x51c] sm:$0xf] %v3164
                  %v3166 = vld [vmem:[%s2828 + $0x2a0] sm:$0xf]
                  %3167 = vst [vmem:[%s2829 + $0x520] sm:$0xf] %v3166
                  %v3168 = vld [vmem:[%s2828 + $0x2a4] sm:$0xf]
                  %3169 = vst [vmem:[%s2829 + $0x524] sm:$0xf] %v3168
                  %v3170 = vld [vmem:[%s2828 + $0x2a8] sm:$0xf]
                  %3171 = vst [vmem:[%s2829 + $0x528] sm:$0xf] %v3170
                  %v3172 = vld [vmem:[%s2828 + $0x2ac] sm:$0xf]
                  %3173 = vst [vmem:[%s2829 + $0x52c] sm:$0xf] %v3172
                  %v3174 = vld [vmem:[%s2828 + $0x2b0] sm:$0xf]
                  %3175 = vst [vmem:[%s2829 + $0x530] sm:$0xf] %v3174
                  %v3176 = vld [vmem:[%s2828 + $0x2b4] sm:$0xf]
                  %3177 = vst [vmem:[%s2829 + $0x534] sm:$0xf] %v3176
                  %v3178 = vld [vmem:[%s2828 + $0x2b8] sm:$0xf]
                  %3179 = vst [vmem:[%s2829 + $0x538] sm:$0xf] %v3178
                  %v3180 = vld [vmem:[%s2828 + $0x2bc] sm:$0xf]
                  %3181 = vst [vmem:[%s2829 + $0x53c] sm:$0xf] %v3180
                  %v3182 = vld [vmem:[%s2828 + $0x2c0] sm:$0xf]
                  %3183 = vst [vmem:[%s2829 + $0x540] sm:$0xf] %v3182
                  %v3184 = vld [vmem:[%s2828 + $0x2c4] sm:$0xf]
                  %3185 = vst [vmem:[%s2829 + $0x544] sm:$0xf] %v3184
                  %v3186 = vld [vmem:[%s2828 + $0x2c8] sm:$0xf]
                  %3187 = vst [vmem:[%s2829 + $0x548] sm:$0xf] %v3186
                  %v3188 = vld [vmem:[%s2828 + $0x2cc] sm:$0xf]
                  %3189 = vst [vmem:[%s2829 + $0x54c] sm:$0xf] %v3188
                  %v3190 = vld [vmem:[%s2828 + $0x2d0] sm:$0xf]
                  %3191 = vst [vmem:[%s2829 + $0x550] sm:$0xf] %v3190
                  %v3192 = vld [vmem:[%s2828 + $0x2d4] sm:$0xf]
                  %3193 = vst [vmem:[%s2829 + $0x554] sm:$0xf] %v3192
                  %v3194 = vld [vmem:[%s2828 + $0x2d8] sm:$0xf]
                  %3195 = vst [vmem:[%s2829 + $0x558] sm:$0xf] %v3194
                  %v3196 = vld [vmem:[%s2828 + $0x2dc] sm:$0xf]
                  %3197 = vst [vmem:[%s2829 + $0x55c] sm:$0xf] %v3196
                  %v3198 = vld [vmem:[%s2828 + $0x2e0] sm:$0xf]
                  %3199 = vst [vmem:[%s2829 + $0x560] sm:$0xf] %v3198
                  %v3200 = vld [vmem:[%s2828 + $0x2e4] sm:$0xf]
                  %3201 = vst [vmem:[%s2829 + $0x564] sm:$0xf] %v3200
                  %v3202 = vld [vmem:[%s2828 + $0x2e8] sm:$0xf]
                  %3203 = vst [vmem:[%s2829 + $0x568] sm:$0xf] %v3202
                  %v3204 = vld [vmem:[%s2828 + $0x2ec] sm:$0xf]
                  %3205 = vst [vmem:[%s2829 + $0x56c] sm:$0xf] %v3204
                  %v3206 = vld [vmem:[%s2828 + $0x2f0] sm:$0xf]
                  %3207 = vst [vmem:[%s2829 + $0x570] sm:$0xf] %v3206
                  %v3208 = vld [vmem:[%s2828 + $0x2f4] sm:$0xf]
                  %3209 = vst [vmem:[%s2829 + $0x574] sm:$0xf] %v3208
                  %v3210 = vld [vmem:[%s2828 + $0x2f8] sm:$0xf]
                  %3211 = vst [vmem:[%s2829 + $0x578] sm:$0xf] %v3210
                  %v3212 = vld [vmem:[%s2828 + $0x2fc] sm:$0xf]
                  %3213 = vst [vmem:[%s2829 + $0x57c] sm:$0xf] %v3212
                  %v3214 = vld [vmem:[%s2828 + $0x300] sm:$0xf]
                  %3215 = vst [vmem:[%s2829 + $0x600] sm:$0xf] %v3214
                  %v3216 = vld [vmem:[%s2828 + $0x304] sm:$0xf]
                  %3217 = vst [vmem:[%s2829 + $0x604] sm:$0xf] %v3216
                  %v3218 = vld [vmem:[%s2828 + $0x308] sm:$0xf]
                  %3219 = vst [vmem:[%s2829 + $0x608] sm:$0xf] %v3218
                  %v3220 = vld [vmem:[%s2828 + $0x30c] sm:$0xf]
                  %3221 = vst [vmem:[%s2829 + $0x60c] sm:$0xf] %v3220
                  %v3222 = vld [vmem:[%s2828 + $0x310] sm:$0xf]
                  %3223 = vst [vmem:[%s2829 + $0x610] sm:$0xf] %v3222
                  %v3224 = vld [vmem:[%s2828 + $0x314] sm:$0xf]
                  %3225 = vst [vmem:[%s2829 + $0x614] sm:$0xf] %v3224
                  %v3226 = vld [vmem:[%s2828 + $0x318] sm:$0xf]
                  %3227 = vst [vmem:[%s2829 + $0x618] sm:$0xf] %v3226
                  %v3228 = vld [vmem:[%s2828 + $0x31c] sm:$0xf]
                  %3229 = vst [vmem:[%s2829 + $0x61c] sm:$0xf] %v3228
                  %v3230 = vld [vmem:[%s2828 + $0x320] sm:$0xf]
                  %3231 = vst [vmem:[%s2829 + $0x620] sm:$0xf] %v3230
                  %v3232 = vld [vmem:[%s2828 + $0x324] sm:$0xf]
                  %3233 = vst [vmem:[%s2829 + $0x624] sm:$0xf] %v3232
                  %v3234 = vld [vmem:[%s2828 + $0x328] sm:$0xf]
                  %3235 = vst [vmem:[%s2829 + $0x628] sm:$0xf] %v3234
                  %v3236 = vld [vmem:[%s2828 + $0x32c] sm:$0xf]
                  %3237 = vst [vmem:[%s2829 + $0x62c] sm:$0xf] %v3236
                  %v3238 = vld [vmem:[%s2828 + $0x330] sm:$0xf]
                  %3239 = vst [vmem:[%s2829 + $0x630] sm:$0xf] %v3238
                  %v3240 = vld [vmem:[%s2828 + $0x334] sm:$0xf]
                  %3241 = vst [vmem:[%s2829 + $0x634] sm:$0xf] %v3240
                  %v3242 = vld [vmem:[%s2828 + $0x338] sm:$0xf]
                  %3243 = vst [vmem:[%s2829 + $0x638] sm:$0xf] %v3242
                  %v3244 = vld [vmem:[%s2828 + $0x33c] sm:$0xf]
                  %3245 = vst [vmem:[%s2829 + $0x63c] sm:$0xf] %v3244
                  %v3246 = vld [vmem:[%s2828 + $0x340] sm:$0xf]
                  %3247 = vst [vmem:[%s2829 + $0x640] sm:$0xf] %v3246
                  %v3248 = vld [vmem:[%s2828 + $0x344] sm:$0xf]
                  %3249 = vst [vmem:[%s2829 + $0x644] sm:$0xf] %v3248
                  %v3250 = vld [vmem:[%s2828 + $0x348] sm:$0xf]
                  %3251 = vst [vmem:[%s2829 + $0x648] sm:$0xf] %v3250
                  %v3252 = vld [vmem:[%s2828 + $0x34c] sm:$0xf]
                  %3253 = vst [vmem:[%s2829 + $0x64c] sm:$0xf] %v3252
                  %v3254 = vld [vmem:[%s2828 + $0x350] sm:$0xf]
                  %3255 = vst [vmem:[%s2829 + $0x650] sm:$0xf] %v3254
                  %v3256 = vld [vmem:[%s2828 + $0x354] sm:$0xf]
                  %3257 = vst [vmem:[%s2829 + $0x654] sm:$0xf] %v3256
                  %v3258 = vld [vmem:[%s2828 + $0x358] sm:$0xf]
                  %3259 = vst [vmem:[%s2829 + $0x658] sm:$0xf] %v3258
                  %v3260 = vld [vmem:[%s2828 + $0x35c] sm:$0xf]
                  %3261 = vst [vmem:[%s2829 + $0x65c] sm:$0xf] %v3260
                  %v3262 = vld [vmem:[%s2828 + $0x360] sm:$0xf]
                  %3263 = vst [vmem:[%s2829 + $0x660] sm:$0xf] %v3262
                  %v3264 = vld [vmem:[%s2828 + $0x364] sm:$0xf]
                  %3265 = vst [vmem:[%s2829 + $0x664] sm:$0xf] %v3264
                  %v3266 = vld [vmem:[%s2828 + $0x368] sm:$0xf]
                  %3267 = vst [vmem:[%s2829 + $0x668] sm:$0xf] %v3266
                  %v3268 = vld [vmem:[%s2828 + $0x36c] sm:$0xf]
                  %3269 = vst [vmem:[%s2829 + $0x66c] sm:$0xf] %v3268
                  %v3270 = vld [vmem:[%s2828 + $0x370] sm:$0xf]
                  %3271 = vst [vmem:[%s2829 + $0x670] sm:$0xf] %v3270
                  %v3272 = vld [vmem:[%s2828 + $0x374] sm:$0xf]
                  %3273 = vst [vmem:[%s2829 + $0x674] sm:$0xf] %v3272
                  %v3274 = vld [vmem:[%s2828 + $0x378] sm:$0xf]
                  %3275 = vst [vmem:[%s2829 + $0x678] sm:$0xf] %v3274
                  %v3276 = vld [vmem:[%s2828 + $0x37c] sm:$0xf]
                  %3277 = vst [vmem:[%s2829 + $0x67c] sm:$0xf] %v3276
                  %v3278 = vld [vmem:[%s2828 + $0x380] sm:$0xf]
                  %3279 = vst [vmem:[%s2829 + $0x700] sm:$0xf] %v3278
                  %v3280 = vld [vmem:[%s2828 + $0x384] sm:$0xf]
                  %3281 = vst [vmem:[%s2829 + $0x704] sm:$0xf] %v3280
                  %v3282 = vld [vmem:[%s2828 + $0x388] sm:$0xf]
                  %3283 = vst [vmem:[%s2829 + $0x708] sm:$0xf] %v3282
                  %v3284 = vld [vmem:[%s2828 + $0x38c] sm:$0xf]
                  %3285 = vst [vmem:[%s2829 + $0x70c] sm:$0xf] %v3284
                  %v3286 = vld [vmem:[%s2828 + $0x390] sm:$0xf]
                  %3287 = vst [vmem:[%s2829 + $0x710] sm:$0xf] %v3286
                  %v3288 = vld [vmem:[%s2828 + $0x394] sm:$0xf]
                  %3289 = vst [vmem:[%s2829 + $0x714] sm:$0xf] %v3288
                  %v3290 = vld [vmem:[%s2828 + $0x398] sm:$0xf]
                  %3291 = vst [vmem:[%s2829 + $0x718] sm:$0xf] %v3290
                  %v3292 = vld [vmem:[%s2828 + $0x39c] sm:$0xf]
                  %3293 = vst [vmem:[%s2829 + $0x71c] sm:$0xf] %v3292
                  %v3294 = vld [vmem:[%s2828 + $0x3a0] sm:$0xf]
                  %3295 = vst [vmem:[%s2829 + $0x720] sm:$0xf] %v3294
                  %v3296 = vld [vmem:[%s2828 + $0x3a4] sm:$0xf]
                  %3297 = vst [vmem:[%s2829 + $0x724] sm:$0xf] %v3296
                  %v3298 = vld [vmem:[%s2828 + $0x3a8] sm:$0xf]
                  %3299 = vst [vmem:[%s2829 + $0x728] sm:$0xf] %v3298
                  %v3300 = vld [vmem:[%s2828 + $0x3ac] sm:$0xf]
                  %3301 = vst [vmem:[%s2829 + $0x72c] sm:$0xf] %v3300
                  %v3302 = vld [vmem:[%s2828 + $0x3b0] sm:$0xf]
                  %3303 = vst [vmem:[%s2829 + $0x730] sm:$0xf] %v3302
                  %v3304 = vld [vmem:[%s2828 + $0x3b4] sm:$0xf]
                  %3305 = vst [vmem:[%s2829 + $0x734] sm:$0xf] %v3304
                  %v3306 = vld [vmem:[%s2828 + $0x3b8] sm:$0xf]
                  %3307 = vst [vmem:[%s2829 + $0x738] sm:$0xf] %v3306
                  %v3308 = vld [vmem:[%s2828 + $0x3bc] sm:$0xf]
                  %3309 = vst [vmem:[%s2829 + $0x73c] sm:$0xf] %v3308
                  %v3310 = vld [vmem:[%s2828 + $0x3c0] sm:$0xf]
                  %3311 = vst [vmem:[%s2829 + $0x740] sm:$0xf] %v3310
                  %v3312 = vld [vmem:[%s2828 + $0x3c4] sm:$0xf]
                  %3313 = vst [vmem:[%s2829 + $0x744] sm:$0xf] %v3312
                  %v3314 = vld [vmem:[%s2828 + $0x3c8] sm:$0xf]
                  %3315 = vst [vmem:[%s2829 + $0x748] sm:$0xf] %v3314
                  %v3316 = vld [vmem:[%s2828 + $0x3cc] sm:$0xf]
                  %3317 = vst [vmem:[%s2829 + $0x74c] sm:$0xf] %v3316
                  %v3318 = vld [vmem:[%s2828 + $0x3d0] sm:$0xf]
                  %3319 = vst [vmem:[%s2829 + $0x750] sm:$0xf] %v3318
                  %v3320 = vld [vmem:[%s2828 + $0x3d4] sm:$0xf]
                  %3321 = vst [vmem:[%s2829 + $0x754] sm:$0xf] %v3320
                  %v3322 = vld [vmem:[%s2828 + $0x3d8] sm:$0xf]
                  %3323 = vst [vmem:[%s2829 + $0x758] sm:$0xf] %v3322
                  %v3324 = vld [vmem:[%s2828 + $0x3dc] sm:$0xf]
                  %3325 = vst [vmem:[%s2829 + $0x75c] sm:$0xf] %v3324
                  %v3326 = vld [vmem:[%s2828 + $0x3e0] sm:$0xf]
                  %3327 = vst [vmem:[%s2829 + $0x760] sm:$0xf] %v3326
                  %v3328 = vld [vmem:[%s2828 + $0x3e4] sm:$0xf]
                  %3329 = vst [vmem:[%s2829 + $0x764] sm:$0xf] %v3328
                  %v3330 = vld [vmem:[%s2828 + $0x3e8] sm:$0xf]
                  %3331 = vst [vmem:[%s2829 + $0x768] sm:$0xf] %v3330
                  %v3332 = vld [vmem:[%s2828 + $0x3ec] sm:$0xf]
                  %3333 = vst [vmem:[%s2829 + $0x76c] sm:$0xf] %v3332
                  %v3334 = vld [vmem:[%s2828 + $0x3f0] sm:$0xf]
                  %3335 = vst [vmem:[%s2829 + $0x770] sm:$0xf] %v3334
                  %v3336 = vld [vmem:[%s2828 + $0x3f4] sm:$0xf]
                  %3337 = vst [vmem:[%s2829 + $0x774] sm:$0xf] %v3336
                  %v3338 = vld [vmem:[%s2828 + $0x3f8] sm:$0xf]
                  %3339 = vst [vmem:[%s2829 + $0x778] sm:$0xf] %v3338
                  %v3340 = vld [vmem:[%s2828 + $0x3fc] sm:$0xf]
                  %3341 = vst [vmem:[%s2829 + $0x77c] sm:$0xf] %v3340
                $region127: #{a_call__.1} parent=114 // loop_footer
                  %s2827 = sadd.s32 1, %s2823
                $region128: #{a_call__.1} parent=114 // loop_footer_branch
                  %2822 = sbr.rel target = $region124
                $region129: #{a_call__.1} parent=114 // loop_exit
                  _
              $region115: #{a_call__.1} parent=99 // pred_fallthru
                _
            $region100: #{a_call__.1} parent=95 // pred_fallthru
              _
            // Predicated region
            $region101: #{a_call__.1} parent=95 // pred_check
              _
            $region102: #{a_call__.1} parent=95 // pred_check_branch
              %2289 = sbr.rel (0) target = $region104
            $region103: #{a_call__.1} parent=95 // pred_region
              loop: start=0, step=1, limit=1
              $region105: #{a_call__.1} parent=103 // loop_pre_header
                _
              $region106: #{a_call__.1} parent=103 // loop_header
                %s2292 = sphi 0, %s2296
                %p2293 = scmp.ge.s32.totalorder %s2292, 1
                %s2297 = sphi %s2277, %s2277
                %s2298 = sphi %s2283, %s2283
              $region107: #{a_call__.1} parent=103 // loop_header_branch
                %2295 = sbr.rel (%p2293) target = $region111
              $region108: #{a_call__.1} parent=103 // loop_body
                %v2299 = vld [vmem:[%s2297] sm:$0xf]
                %2300 = vst [vmem:[%s2298] sm:$0xf] %v2299
                %v2301 = vld [vmem:[%s2297 + $0x4] sm:$0xf]
                %2302 = vst [vmem:[%s2298 + $0x4] sm:$0xf] %v2301
                %v2303 = vld [vmem:[%s2297 + $0x8] sm:$0xf]
                %2304 = vst [vmem:[%s2298 + $0x8] sm:$0xf] %v2303
                %v2305 = vld [vmem:[%s2297 + $0xc] sm:$0xf]
                %2306 = vst [vmem:[%s2298 + $0xc] sm:$0xf] %v2305
                %v2307 = vld [vmem:[%s2297 + $0x10] sm:$0xf]
                %2308 = vst [vmem:[%s2298 + $0x10] sm:$0xf] %v2307
                %v2309 = vld [vmem:[%s2297 + $0x14] sm:$0xf]
                %2310 = vst [vmem:[%s2298 + $0x14] sm:$0xf] %v2309
                %v2311 = vld [vmem:[%s2297 + $0x18] sm:$0xf]
                %2312 = vst [vmem:[%s2298 + $0x18] sm:$0xf] %v2311
                %v2313 = vld [vmem:[%s2297 + $0x1c] sm:$0xf]
                %2314 = vst [vmem:[%s2298 + $0x1c] sm:$0xf] %v2313
                %v2315 = vld [vmem:[%s2297 + $0x20] sm:$0xf]
                %2316 = vst [vmem:[%s2298 + $0x20] sm:$0xf] %v2315
                %v2317 = vld [vmem:[%s2297 + $0x24] sm:$0xf]
                %2318 = vst [vmem:[%s2298 + $0x24] sm:$0xf] %v2317
                %v2319 = vld [vmem:[%s2297 + $0x28] sm:$0xf]
                %2320 = vst [vmem:[%s2298 + $0x28] sm:$0xf] %v2319
                %v2321 = vld [vmem:[%s2297 + $0x2c] sm:$0xf]
                %2322 = vst [vmem:[%s2298 + $0x2c] sm:$0xf] %v2321
                %v2323 = vld [vmem:[%s2297 + $0x30] sm:$0xf]
                %2324 = vst [vmem:[%s2298 + $0x30] sm:$0xf] %v2323
                %v2325 = vld [vmem:[%s2297 + $0x34] sm:$0xf]
                %2326 = vst [vmem:[%s2298 + $0x34] sm:$0xf] %v2325
                %v2327 = vld [vmem:[%s2297 + $0x38] sm:$0xf]
                %2328 = vst [vmem:[%s2298 + $0x38] sm:$0xf] %v2327
                %v2329 = vld [vmem:[%s2297 + $0x3c] sm:$0xf]
                %2330 = vst [vmem:[%s2298 + $0x3c] sm:$0xf] %v2329
                %v2331 = vld [vmem:[%s2297 + $0x40] sm:$0xf]
                %2332 = vst [vmem:[%s2298 + $0x40] sm:$0xf] %v2331
                %v2333 = vld [vmem:[%s2297 + $0x44] sm:$0xf]
                %2334 = vst [vmem:[%s2298 + $0x44] sm:$0xf] %v2333
                %v2335 = vld [vmem:[%s2297 + $0x48] sm:$0xf]
                %2336 = vst [vmem:[%s2298 + $0x48] sm:$0xf] %v2335
                %v2337 = vld [vmem:[%s2297 + $0x4c] sm:$0xf]
                %2338 = vst [vmem:[%s2298 + $0x4c] sm:$0xf] %v2337
                %v2339 = vld [vmem:[%s2297 + $0x50] sm:$0xf]
                %2340 = vst [vmem:[%s2298 + $0x50] sm:$0xf] %v2339
                %v2341 = vld [vmem:[%s2297 + $0x54] sm:$0xf]
                %2342 = vst [vmem:[%s2298 + $0x54] sm:$0xf] %v2341
                %v2343 = vld [vmem:[%s2297 + $0x58] sm:$0xf]
                %2344 = vst [vmem:[%s2298 + $0x58] sm:$0xf] %v2343
                %v2345 = vld [vmem:[%s2297 + $0x5c] sm:$0xf]
                %2346 = vst [vmem:[%s2298 + $0x5c] sm:$0xf] %v2345
                %v2347 = vld [vmem:[%s2297 + $0x60] sm:$0xf]
                %2348 = vst [vmem:[%s2298 + $0x60] sm:$0xf] %v2347
                %v2349 = vld [vmem:[%s2297 + $0x64] sm:$0xf]
                %2350 = vst [vmem:[%s2298 + $0x64] sm:$0xf] %v2349
                %v2351 = vld [vmem:[%s2297 + $0x68] sm:$0xf]
                %2352 = vst [vmem:[%s2298 + $0x68] sm:$0xf] %v2351
                %v2353 = vld [vmem:[%s2297 + $0x6c] sm:$0xf]
                %2354 = vst [vmem:[%s2298 + $0x6c] sm:$0xf] %v2353
                %v2355 = vld [vmem:[%s2297 + $0x70] sm:$0xf]
                %2356 = vst [vmem:[%s2298 + $0x70] sm:$0xf] %v2355
                %v2357 = vld [vmem:[%s2297 + $0x74] sm:$0xf]
                %2358 = vst [vmem:[%s2298 + $0x74] sm:$0xf] %v2357
                %v2359 = vld [vmem:[%s2297 + $0x78] sm:$0xf]
                %2360 = vst [vmem:[%s2298 + $0x78] sm:$0xf] %v2359
                %v2361 = vld [vmem:[%s2297 + $0x7c] sm:$0xf]
                %2362 = vst [vmem:[%s2298 + $0x7c] sm:$0xf] %v2361
                %v2363 = vld [vmem:[%s2297 + $0x80] sm:$0xf]
                %2364 = vst [vmem:[%s2298 + $0x100] sm:$0xf] %v2363
                %v2365 = vld [vmem:[%s2297 + $0x84] sm:$0xf]
                %2366 = vst [vmem:[%s2298 + $0x104] sm:$0xf] %v2365
                %v2367 = vld [vmem:[%s2297 + $0x88] sm:$0xf]
                %2368 = vst [vmem:[%s2298 + $0x108] sm:$0xf] %v2367
                %v2369 = vld [vmem:[%s2297 + $0x8c] sm:$0xf]
                %2370 = vst [vmem:[%s2298 + $0x10c] sm:$0xf] %v2369
                %v2371 = vld [vmem:[%s2297 + $0x90] sm:$0xf]
                %2372 = vst [vmem:[%s2298 + $0x110] sm:$0xf] %v2371
                %v2373 = vld [vmem:[%s2297 + $0x94] sm:$0xf]
                %2374 = vst [vmem:[%s2298 + $0x114] sm:$0xf] %v2373
                %v2375 = vld [vmem:[%s2297 + $0x98] sm:$0xf]
                %2376 = vst [vmem:[%s2298 + $0x118] sm:$0xf] %v2375
                %v2377 = vld [vmem:[%s2297 + $0x9c] sm:$0xf]
                %2378 = vst [vmem:[%s2298 + $0x11c] sm:$0xf] %v2377
                %v2379 = vld [vmem:[%s2297 + $0xa0] sm:$0xf]
                %2380 = vst [vmem:[%s2298 + $0x120] sm:$0xf] %v2379
                %v2381 = vld [vmem:[%s2297 + $0xa4] sm:$0xf]
                %2382 = vst [vmem:[%s2298 + $0x124] sm:$0xf] %v2381
                %v2383 = vld [vmem:[%s2297 + $0xa8] sm:$0xf]
                %2384 = vst [vmem:[%s2298 + $0x128] sm:$0xf] %v2383
                %v2385 = vld [vmem:[%s2297 + $0xac] sm:$0xf]
                %2386 = vst [vmem:[%s2298 + $0x12c] sm:$0xf] %v2385
                %v2387 = vld [vmem:[%s2297 + $0xb0] sm:$0xf]
                %2388 = vst [vmem:[%s2298 + $0x130] sm:$0xf] %v2387
                %v2389 = vld [vmem:[%s2297 + $0xb4] sm:$0xf]
                %2390 = vst [vmem:[%s2298 + $0x134] sm:$0xf] %v2389
                %v2391 = vld [vmem:[%s2297 + $0xb8] sm:$0xf]
                %2392 = vst [vmem:[%s2298 + $0x138] sm:$0xf] %v2391
                %v2393 = vld [vmem:[%s2297 + $0xbc] sm:$0xf]
                %2394 = vst [vmem:[%s2298 + $0x13c] sm:$0xf] %v2393
                %v2395 = vld [vmem:[%s2297 + $0xc0] sm:$0xf]
                %2396 = vst [vmem:[%s2298 + $0x140] sm:$0xf] %v2395
                %v2397 = vld [vmem:[%s2297 + $0xc4] sm:$0xf]
                %2398 = vst [vmem:[%s2298 + $0x144] sm:$0xf] %v2397
                %v2399 = vld [vmem:[%s2297 + $0xc8] sm:$0xf]
                %2400 = vst [vmem:[%s2298 + $0x148] sm:$0xf] %v2399
                %v2401 = vld [vmem:[%s2297 + $0xcc] sm:$0xf]
                %2402 = vst [vmem:[%s2298 + $0x14c] sm:$0xf] %v2401
                %v2403 = vld [vmem:[%s2297 + $0xd0] sm:$0xf]
                %2404 = vst [vmem:[%s2298 + $0x150] sm:$0xf] %v2403
                %v2405 = vld [vmem:[%s2297 + $0xd4] sm:$0xf]
                %2406 = vst [vmem:[%s2298 + $0x154] sm:$0xf] %v2405
                %v2407 = vld [vmem:[%s2297 + $0xd8] sm:$0xf]
                %2408 = vst [vmem:[%s2298 + $0x158] sm:$0xf] %v2407
                %v2409 = vld [vmem:[%s2297 + $0xdc] sm:$0xf]
                %2410 = vst [vmem:[%s2298 + $0x15c] sm:$0xf] %v2409
                %v2411 = vld [vmem:[%s2297 + $0xe0] sm:$0xf]
                %2412 = vst [vmem:[%s2298 + $0x160] sm:$0xf] %v2411
                %v2413 = vld [vmem:[%s2297 + $0xe4] sm:$0xf]
                %2414 = vst [vmem:[%s2298 + $0x164] sm:$0xf] %v2413
                %v2415 = vld [vmem:[%s2297 + $0xe8] sm:$0xf]
                %2416 = vst [vmem:[%s2298 + $0x168] sm:$0xf] %v2415
                %v2417 = vld [vmem:[%s2297 + $0xec] sm:$0xf]
                %2418 = vst [vmem:[%s2298 + $0x16c] sm:$0xf] %v2417
                %v2419 = vld [vmem:[%s2297 + $0xf0] sm:$0xf]
                %2420 = vst [vmem:[%s2298 + $0x170] sm:$0xf] %v2419
                %v2421 = vld [vmem:[%s2297 + $0xf4] sm:$0xf]
                %2422 = vst [vmem:[%s2298 + $0x174] sm:$0xf] %v2421
                %v2423 = vld [vmem:[%s2297 + $0xf8] sm:$0xf]
                %2424 = vst [vmem:[%s2298 + $0x178] sm:$0xf] %v2423
                %v2425 = vld [vmem:[%s2297 + $0xfc] sm:$0xf]
                %2426 = vst [vmem:[%s2298 + $0x17c] sm:$0xf] %v2425
                %v2427 = vld [vmem:[%s2297 + $0x100] sm:$0xf]
                %2428 = vst [vmem:[%s2298 + $0x200] sm:$0xf] %v2427
                %v2429 = vld [vmem:[%s2297 + $0x104] sm:$0xf]
                %2430 = vst [vmem:[%s2298 + $0x204] sm:$0xf] %v2429
                %v2431 = vld [vmem:[%s2297 + $0x108] sm:$0xf]
                %2432 = vst [vmem:[%s2298 + $0x208] sm:$0xf] %v2431
                %v2433 = vld [vmem:[%s2297 + $0x10c] sm:$0xf]
                %2434 = vst [vmem:[%s2298 + $0x20c] sm:$0xf] %v2433
                %v2435 = vld [vmem:[%s2297 + $0x110] sm:$0xf]
                %2436 = vst [vmem:[%s2298 + $0x210] sm:$0xf] %v2435
                %v2437 = vld [vmem:[%s2297 + $0x114] sm:$0xf]
                %2438 = vst [vmem:[%s2298 + $0x214] sm:$0xf] %v2437
                %v2439 = vld [vmem:[%s2297 + $0x118] sm:$0xf]
                %2440 = vst [vmem:[%s2298 + $0x218] sm:$0xf] %v2439
                %v2441 = vld [vmem:[%s2297 + $0x11c] sm:$0xf]
                %2442 = vst [vmem:[%s2298 + $0x21c] sm:$0xf] %v2441
                %v2443 = vld [vmem:[%s2297 + $0x120] sm:$0xf]
                %2444 = vst [vmem:[%s2298 + $0x220] sm:$0xf] %v2443
                %v2445 = vld [vmem:[%s2297 + $0x124] sm:$0xf]
                %2446 = vst [vmem:[%s2298 + $0x224] sm:$0xf] %v2445
                %v2447 = vld [vmem:[%s2297 + $0x128] sm:$0xf]
                %2448 = vst [vmem:[%s2298 + $0x228] sm:$0xf] %v2447
                %v2449 = vld [vmem:[%s2297 + $0x12c] sm:$0xf]
                %2450 = vst [vmem:[%s2298 + $0x22c] sm:$0xf] %v2449
                %v2451 = vld [vmem:[%s2297 + $0x130] sm:$0xf]
                %2452 = vst [vmem:[%s2298 + $0x230] sm:$0xf] %v2451
                %v2453 = vld [vmem:[%s2297 + $0x134] sm:$0xf]
                %2454 = vst [vmem:[%s2298 + $0x234] sm:$0xf] %v2453
                %v2455 = vld [vmem:[%s2297 + $0x138] sm:$0xf]
                %2456 = vst [vmem:[%s2298 + $0x238] sm:$0xf] %v2455
                %v2457 = vld [vmem:[%s2297 + $0x13c] sm:$0xf]
                %2458 = vst [vmem:[%s2298 + $0x23c] sm:$0xf] %v2457
                %v2459 = vld [vmem:[%s2297 + $0x140] sm:$0xf]
                %2460 = vst [vmem:[%s2298 + $0x240] sm:$0xf] %v2459
                %v2461 = vld [vmem:[%s2297 + $0x144] sm:$0xf]
                %2462 = vst [vmem:[%s2298 + $0x244] sm:$0xf] %v2461
                %v2463 = vld [vmem:[%s2297 + $0x148] sm:$0xf]
                %2464 = vst [vmem:[%s2298 + $0x248] sm:$0xf] %v2463
                %v2465 = vld [vmem:[%s2297 + $0x14c] sm:$0xf]
                %2466 = vst [vmem:[%s2298 + $0x24c] sm:$0xf] %v2465
                %v2467 = vld [vmem:[%s2297 + $0x150] sm:$0xf]
                %2468 = vst [vmem:[%s2298 + $0x250] sm:$0xf] %v2467
                %v2469 = vld [vmem:[%s2297 + $0x154] sm:$0xf]
                %2470 = vst [vmem:[%s2298 + $0x254] sm:$0xf] %v2469
                %v2471 = vld [vmem:[%s2297 + $0x158] sm:$0xf]
                %2472 = vst [vmem:[%s2298 + $0x258] sm:$0xf] %v2471
                %v2473 = vld [vmem:[%s2297 + $0x15c] sm:$0xf]
                %2474 = vst [vmem:[%s2298 + $0x25c] sm:$0xf] %v2473
                %v2475 = vld [vmem:[%s2297 + $0x160] sm:$0xf]
                %2476 = vst [vmem:[%s2298 + $0x260] sm:$0xf] %v2475
                %v2477 = vld [vmem:[%s2297 + $0x164] sm:$0xf]
                %2478 = vst [vmem:[%s2298 + $0x264] sm:$0xf] %v2477
                %v2479 = vld [vmem:[%s2297 + $0x168] sm:$0xf]
                %2480 = vst [vmem:[%s2298 + $0x268] sm:$0xf] %v2479
                %v2481 = vld [vmem:[%s2297 + $0x16c] sm:$0xf]
                %2482 = vst [vmem:[%s2298 + $0x26c] sm:$0xf] %v2481
                %v2483 = vld [vmem:[%s2297 + $0x170] sm:$0xf]
                %2484 = vst [vmem:[%s2298 + $0x270] sm:$0xf] %v2483
                %v2485 = vld [vmem:[%s2297 + $0x174] sm:$0xf]
                %2486 = vst [vmem:[%s2298 + $0x274] sm:$0xf] %v2485
                %v2487 = vld [vmem:[%s2297 + $0x178] sm:$0xf]
                %2488 = vst [vmem:[%s2298 + $0x278] sm:$0xf] %v2487
                %v2489 = vld [vmem:[%s2297 + $0x17c] sm:$0xf]
                %2490 = vst [vmem:[%s2298 + $0x27c] sm:$0xf] %v2489
                %v2491 = vld [vmem:[%s2297 + $0x180] sm:$0xf]
                %2492 = vst [vmem:[%s2298 + $0x300] sm:$0xf] %v2491
                %v2493 = vld [vmem:[%s2297 + $0x184] sm:$0xf]
                %2494 = vst [vmem:[%s2298 + $0x304] sm:$0xf] %v2493
                %v2495 = vld [vmem:[%s2297 + $0x188] sm:$0xf]
                %2496 = vst [vmem:[%s2298 + $0x308] sm:$0xf] %v2495
                %v2497 = vld [vmem:[%s2297 + $0x18c] sm:$0xf]
                %2498 = vst [vmem:[%s2298 + $0x30c] sm:$0xf] %v2497
                %v2499 = vld [vmem:[%s2297 + $0x190] sm:$0xf]
                %2500 = vst [vmem:[%s2298 + $0x310] sm:$0xf] %v2499
                %v2501 = vld [vmem:[%s2297 + $0x194] sm:$0xf]
                %2502 = vst [vmem:[%s2298 + $0x314] sm:$0xf] %v2501
                %v2503 = vld [vmem:[%s2297 + $0x198] sm:$0xf]
                %2504 = vst [vmem:[%s2298 + $0x318] sm:$0xf] %v2503
                %v2505 = vld [vmem:[%s2297 + $0x19c] sm:$0xf]
                %2506 = vst [vmem:[%s2298 + $0x31c] sm:$0xf] %v2505
                %v2507 = vld [vmem:[%s2297 + $0x1a0] sm:$0xf]
                %2508 = vst [vmem:[%s2298 + $0x320] sm:$0xf] %v2507
                %v2509 = vld [vmem:[%s2297 + $0x1a4] sm:$0xf]
                %2510 = vst [vmem:[%s2298 + $0x324] sm:$0xf] %v2509
                %v2511 = vld [vmem:[%s2297 + $0x1a8] sm:$0xf]
                %2512 = vst [vmem:[%s2298 + $0x328] sm:$0xf] %v2511
                %v2513 = vld [vmem:[%s2297 + $0x1ac] sm:$0xf]
                %2514 = vst [vmem:[%s2298 + $0x32c] sm:$0xf] %v2513
                %v2515 = vld [vmem:[%s2297 + $0x1b0] sm:$0xf]
                %2516 = vst [vmem:[%s2298 + $0x330] sm:$0xf] %v2515
                %v2517 = vld [vmem:[%s2297 + $0x1b4] sm:$0xf]
                %2518 = vst [vmem:[%s2298 + $0x334] sm:$0xf] %v2517
                %v2519 = vld [vmem:[%s2297 + $0x1b8] sm:$0xf]
                %2520 = vst [vmem:[%s2298 + $0x338] sm:$0xf] %v2519
                %v2521 = vld [vmem:[%s2297 + $0x1bc] sm:$0xf]
                %2522 = vst [vmem:[%s2298 + $0x33c] sm:$0xf] %v2521
                %v2523 = vld [vmem:[%s2297 + $0x1c0] sm:$0xf]
                %2524 = vst [vmem:[%s2298 + $0x340] sm:$0xf] %v2523
                %v2525 = vld [vmem:[%s2297 + $0x1c4] sm:$0xf]
                %2526 = vst [vmem:[%s2298 + $0x344] sm:$0xf] %v2525
                %v2527 = vld [vmem:[%s2297 + $0x1c8] sm:$0xf]
                %2528 = vst [vmem:[%s2298 + $0x348] sm:$0xf] %v2527
                %v2529 = vld [vmem:[%s2297 + $0x1cc] sm:$0xf]
                %2530 = vst [vmem:[%s2298 + $0x34c] sm:$0xf] %v2529
                %v2531 = vld [vmem:[%s2297 + $0x1d0] sm:$0xf]
                %2532 = vst [vmem:[%s2298 + $0x350] sm:$0xf] %v2531
                %v2533 = vld [vmem:[%s2297 + $0x1d4] sm:$0xf]
                %2534 = vst [vmem:[%s2298 + $0x354] sm:$0xf] %v2533
                %v2535 = vld [vmem:[%s2297 + $0x1d8] sm:$0xf]
                %2536 = vst [vmem:[%s2298 + $0x358] sm:$0xf] %v2535
                %v2537 = vld [vmem:[%s2297 + $0x1dc] sm:$0xf]
                %2538 = vst [vmem:[%s2298 + $0x35c] sm:$0xf] %v2537
                %v2539 = vld [vmem:[%s2297 + $0x1e0] sm:$0xf]
                %2540 = vst [vmem:[%s2298 + $0x360] sm:$0xf] %v2539
                %v2541 = vld [vmem:[%s2297 + $0x1e4] sm:$0xf]
                %2542 = vst [vmem:[%s2298 + $0x364] sm:$0xf] %v2541
                %v2543 = vld [vmem:[%s2297 + $0x1e8] sm:$0xf]
                %2544 = vst [vmem:[%s2298 + $0x368] sm:$0xf] %v2543
                %v2545 = vld [vmem:[%s2297 + $0x1ec] sm:$0xf]
                %2546 = vst [vmem:[%s2298 + $0x36c] sm:$0xf] %v2545
                %v2547 = vld [vmem:[%s2297 + $0x1f0] sm:$0xf]
                %2548 = vst [vmem:[%s2298 + $0x370] sm:$0xf] %v2547
                %v2549 = vld [vmem:[%s2297 + $0x1f4] sm:$0xf]
                %2550 = vst [vmem:[%s2298 + $0x374] sm:$0xf] %v2549
                %v2551 = vld [vmem:[%s2297 + $0x1f8] sm:$0xf]
                %2552 = vst [vmem:[%s2298 + $0x378] sm:$0xf] %v2551
                %v2553 = vld [vmem:[%s2297 + $0x1fc] sm:$0xf]
                %2554 = vst [vmem:[%s2298 + $0x37c] sm:$0xf] %v2553
                %v2555 = vld [vmem:[%s2297 + $0x200] sm:$0xf]
                %2556 = vst [vmem:[%s2298 + $0x400] sm:$0xf] %v2555
                %v2557 = vld [vmem:[%s2297 + $0x204] sm:$0xf]
                %2558 = vst [vmem:[%s2298 + $0x404] sm:$0xf] %v2557
                %v2559 = vld [vmem:[%s2297 + $0x208] sm:$0xf]
                %2560 = vst [vmem:[%s2298 + $0x408] sm:$0xf] %v2559
                %v2561 = vld [vmem:[%s2297 + $0x20c] sm:$0xf]
                %2562 = vst [vmem:[%s2298 + $0x40c] sm:$0xf] %v2561
                %v2563 = vld [vmem:[%s2297 + $0x210] sm:$0xf]
                %2564 = vst [vmem:[%s2298 + $0x410] sm:$0xf] %v2563
                %v2565 = vld [vmem:[%s2297 + $0x214] sm:$0xf]
                %2566 = vst [vmem:[%s2298 + $0x414] sm:$0xf] %v2565
                %v2567 = vld [vmem:[%s2297 + $0x218] sm:$0xf]
                %2568 = vst [vmem:[%s2298 + $0x418] sm:$0xf] %v2567
                %v2569 = vld [vmem:[%s2297 + $0x21c] sm:$0xf]
                %2570 = vst [vmem:[%s2298 + $0x41c] sm:$0xf] %v2569
                %v2571 = vld [vmem:[%s2297 + $0x220] sm:$0xf]
                %2572 = vst [vmem:[%s2298 + $0x420] sm:$0xf] %v2571
                %v2573 = vld [vmem:[%s2297 + $0x224] sm:$0xf]
                %2574 = vst [vmem:[%s2298 + $0x424] sm:$0xf] %v2573
                %v2575 = vld [vmem:[%s2297 + $0x228] sm:$0xf]
                %2576 = vst [vmem:[%s2298 + $0x428] sm:$0xf] %v2575
                %v2577 = vld [vmem:[%s2297 + $0x22c] sm:$0xf]
                %2578 = vst [vmem:[%s2298 + $0x42c] sm:$0xf] %v2577
                %v2579 = vld [vmem:[%s2297 + $0x230] sm:$0xf]
                %2580 = vst [vmem:[%s2298 + $0x430] sm:$0xf] %v2579
                %v2581 = vld [vmem:[%s2297 + $0x234] sm:$0xf]
                %2582 = vst [vmem:[%s2298 + $0x434] sm:$0xf] %v2581
                %v2583 = vld [vmem:[%s2297 + $0x238] sm:$0xf]
                %2584 = vst [vmem:[%s2298 + $0x438] sm:$0xf] %v2583
                %v2585 = vld [vmem:[%s2297 + $0x23c] sm:$0xf]
                %2586 = vst [vmem:[%s2298 + $0x43c] sm:$0xf] %v2585
                %v2587 = vld [vmem:[%s2297 + $0x240] sm:$0xf]
                %2588 = vst [vmem:[%s2298 + $0x440] sm:$0xf] %v2587
                %v2589 = vld [vmem:[%s2297 + $0x244] sm:$0xf]
                %2590 = vst [vmem:[%s2298 + $0x444] sm:$0xf] %v2589
                %v2591 = vld [vmem:[%s2297 + $0x248] sm:$0xf]
                %2592 = vst [vmem:[%s2298 + $0x448] sm:$0xf] %v2591
                %v2593 = vld [vmem:[%s2297 + $0x24c] sm:$0xf]
                %2594 = vst [vmem:[%s2298 + $0x44c] sm:$0xf] %v2593
                %v2595 = vld [vmem:[%s2297 + $0x250] sm:$0xf]
                %2596 = vst [vmem:[%s2298 + $0x450] sm:$0xf] %v2595
                %v2597 = vld [vmem:[%s2297 + $0x254] sm:$0xf]
                %2598 = vst [vmem:[%s2298 + $0x454] sm:$0xf] %v2597
                %v2599 = vld [vmem:[%s2297 + $0x258] sm:$0xf]
                %2600 = vst [vmem:[%s2298 + $0x458] sm:$0xf] %v2599
                %v2601 = vld [vmem:[%s2297 + $0x25c] sm:$0xf]
                %2602 = vst [vmem:[%s2298 + $0x45c] sm:$0xf] %v2601
                %v2603 = vld [vmem:[%s2297 + $0x260] sm:$0xf]
                %2604 = vst [vmem:[%s2298 + $0x460] sm:$0xf] %v2603
                %v2605 = vld [vmem:[%s2297 + $0x264] sm:$0xf]
                %2606 = vst [vmem:[%s2298 + $0x464] sm:$0xf] %v2605
                %v2607 = vld [vmem:[%s2297 + $0x268] sm:$0xf]
                %2608 = vst [vmem:[%s2298 + $0x468] sm:$0xf] %v2607
                %v2609 = vld [vmem:[%s2297 + $0x26c] sm:$0xf]
                %2610 = vst [vmem:[%s2298 + $0x46c] sm:$0xf] %v2609
                %v2611 = vld [vmem:[%s2297 + $0x270] sm:$0xf]
                %2612 = vst [vmem:[%s2298 + $0x470] sm:$0xf] %v2611
                %v2613 = vld [vmem:[%s2297 + $0x274] sm:$0xf]
                %2614 = vst [vmem:[%s2298 + $0x474] sm:$0xf] %v2613
                %v2615 = vld [vmem:[%s2297 + $0x278] sm:$0xf]
                %2616 = vst [vmem:[%s2298 + $0x478] sm:$0xf] %v2615
                %v2617 = vld [vmem:[%s2297 + $0x27c] sm:$0xf]
                %2618 = vst [vmem:[%s2298 + $0x47c] sm:$0xf] %v2617
                %v2619 = vld [vmem:[%s2297 + $0x280] sm:$0xf]
                %2620 = vst [vmem:[%s2298 + $0x500] sm:$0xf] %v2619
                %v2621 = vld [vmem:[%s2297 + $0x284] sm:$0xf]
                %2622 = vst [vmem:[%s2298 + $0x504] sm:$0xf] %v2621
                %v2623 = vld [vmem:[%s2297 + $0x288] sm:$0xf]
                %2624 = vst [vmem:[%s2298 + $0x508] sm:$0xf] %v2623
                %v2625 = vld [vmem:[%s2297 + $0x28c] sm:$0xf]
                %2626 = vst [vmem:[%s2298 + $0x50c] sm:$0xf] %v2625
                %v2627 = vld [vmem:[%s2297 + $0x290] sm:$0xf]
                %2628 = vst [vmem:[%s2298 + $0x510] sm:$0xf] %v2627
                %v2629 = vld [vmem:[%s2297 + $0x294] sm:$0xf]
                %2630 = vst [vmem:[%s2298 + $0x514] sm:$0xf] %v2629
                %v2631 = vld [vmem:[%s2297 + $0x298] sm:$0xf]
                %2632 = vst [vmem:[%s2298 + $0x518] sm:$0xf] %v2631
                %v2633 = vld [vmem:[%s2297 + $0x29c] sm:$0xf]
                %2634 = vst [vmem:[%s2298 + $0x51c] sm:$0xf] %v2633
                %v2635 = vld [vmem:[%s2297 + $0x2a0] sm:$0xf]
                %2636 = vst [vmem:[%s2298 + $0x520] sm:$0xf] %v2635
                %v2637 = vld [vmem:[%s2297 + $0x2a4] sm:$0xf]
                %2638 = vst [vmem:[%s2298 + $0x524] sm:$0xf] %v2637
                %v2639 = vld [vmem:[%s2297 + $0x2a8] sm:$0xf]
                %2640 = vst [vmem:[%s2298 + $0x528] sm:$0xf] %v2639
                %v2641 = vld [vmem:[%s2297 + $0x2ac] sm:$0xf]
                %2642 = vst [vmem:[%s2298 + $0x52c] sm:$0xf] %v2641
                %v2643 = vld [vmem:[%s2297 + $0x2b0] sm:$0xf]
                %2644 = vst [vmem:[%s2298 + $0x530] sm:$0xf] %v2643
                %v2645 = vld [vmem:[%s2297 + $0x2b4] sm:$0xf]
                %2646 = vst [vmem:[%s2298 + $0x534] sm:$0xf] %v2645
                %v2647 = vld [vmem:[%s2297 + $0x2b8] sm:$0xf]
                %2648 = vst [vmem:[%s2298 + $0x538] sm:$0xf] %v2647
                %v2649 = vld [vmem:[%s2297 + $0x2bc] sm:$0xf]
                %2650 = vst [vmem:[%s2298 + $0x53c] sm:$0xf] %v2649
                %v2651 = vld [vmem:[%s2297 + $0x2c0] sm:$0xf]
                %2652 = vst [vmem:[%s2298 + $0x540] sm:$0xf] %v2651
                %v2653 = vld [vmem:[%s2297 + $0x2c4] sm:$0xf]
                %2654 = vst [vmem:[%s2298 + $0x544] sm:$0xf] %v2653
                %v2655 = vld [vmem:[%s2297 + $0x2c8] sm:$0xf]
                %2656 = vst [vmem:[%s2298 + $0x548] sm:$0xf] %v2655
                %v2657 = vld [vmem:[%s2297 + $0x2cc] sm:$0xf]
                %2658 = vst [vmem:[%s2298 + $0x54c] sm:$0xf] %v2657
                %v2659 = vld [vmem:[%s2297 + $0x2d0] sm:$0xf]
                %2660 = vst [vmem:[%s2298 + $0x550] sm:$0xf] %v2659
                %v2661 = vld [vmem:[%s2297 + $0x2d4] sm:$0xf]
                %2662 = vst [vmem:[%s2298 + $0x554] sm:$0xf] %v2661
                %v2663 = vld [vmem:[%s2297 + $0x2d8] sm:$0xf]
                %2664 = vst [vmem:[%s2298 + $0x558] sm:$0xf] %v2663
                %v2665 = vld [vmem:[%s2297 + $0x2dc] sm:$0xf]
                %2666 = vst [vmem:[%s2298 + $0x55c] sm:$0xf] %v2665
                %v2667 = vld [vmem:[%s2297 + $0x2e0] sm:$0xf]
                %2668 = vst [vmem:[%s2298 + $0x560] sm:$0xf] %v2667
                %v2669 = vld [vmem:[%s2297 + $0x2e4] sm:$0xf]
                %2670 = vst [vmem:[%s2298 + $0x564] sm:$0xf] %v2669
                %v2671 = vld [vmem:[%s2297 + $0x2e8] sm:$0xf]
                %2672 = vst [vmem:[%s2298 + $0x568] sm:$0xf] %v2671
                %v2673 = vld [vmem:[%s2297 + $0x2ec] sm:$0xf]
                %2674 = vst [vmem:[%s2298 + $0x56c] sm:$0xf] %v2673
                %v2675 = vld [vmem:[%s2297 + $0x2f0] sm:$0xf]
                %2676 = vst [vmem:[%s2298 + $0x570] sm:$0xf] %v2675
                %v2677 = vld [vmem:[%s2297 + $0x2f4] sm:$0xf]
                %2678 = vst [vmem:[%s2298 + $0x574] sm:$0xf] %v2677
                %v2679 = vld [vmem:[%s2297 + $0x2f8] sm:$0xf]
                %2680 = vst [vmem:[%s2298 + $0x578] sm:$0xf] %v2679
                %v2681 = vld [vmem:[%s2297 + $0x2fc] sm:$0xf]
                %2682 = vst [vmem:[%s2298 + $0x57c] sm:$0xf] %v2681
                %v2683 = vld [vmem:[%s2297 + $0x300] sm:$0xf]
                %2684 = vst [vmem:[%s2298 + $0x600] sm:$0xf] %v2683
                %v2685 = vld [vmem:[%s2297 + $0x304] sm:$0xf]
                %2686 = vst [vmem:[%s2298 + $0x604] sm:$0xf] %v2685
                %v2687 = vld [vmem:[%s2297 + $0x308] sm:$0xf]
                %2688 = vst [vmem:[%s2298 + $0x608] sm:$0xf] %v2687
                %v2689 = vld [vmem:[%s2297 + $0x30c] sm:$0xf]
                %2690 = vst [vmem:[%s2298 + $0x60c] sm:$0xf] %v2689
                %v2691 = vld [vmem:[%s2297 + $0x310] sm:$0xf]
                %2692 = vst [vmem:[%s2298 + $0x610] sm:$0xf] %v2691
                %v2693 = vld [vmem:[%s2297 + $0x314] sm:$0xf]
                %2694 = vst [vmem:[%s2298 + $0x614] sm:$0xf] %v2693
                %v2695 = vld [vmem:[%s2297 + $0x318] sm:$0xf]
                %2696 = vst [vmem:[%s2298 + $0x618] sm:$0xf] %v2695
                %v2697 = vld [vmem:[%s2297 + $0x31c] sm:$0xf]
                %2698 = vst [vmem:[%s2298 + $0x61c] sm:$0xf] %v2697
                %v2699 = vld [vmem:[%s2297 + $0x320] sm:$0xf]
                %2700 = vst [vmem:[%s2298 + $0x620] sm:$0xf] %v2699
                %v2701 = vld [vmem:[%s2297 + $0x324] sm:$0xf]
                %2702 = vst [vmem:[%s2298 + $0x624] sm:$0xf] %v2701
                %v2703 = vld [vmem:[%s2297 + $0x328] sm:$0xf]
                %2704 = vst [vmem:[%s2298 + $0x628] sm:$0xf] %v2703
                %v2705 = vld [vmem:[%s2297 + $0x32c] sm:$0xf]
                %2706 = vst [vmem:[%s2298 + $0x62c] sm:$0xf] %v2705
                %v2707 = vld [vmem:[%s2297 + $0x330] sm:$0xf]
                %2708 = vst [vmem:[%s2298 + $0x630] sm:$0xf] %v2707
                %v2709 = vld [vmem:[%s2297 + $0x334] sm:$0xf]
                %2710 = vst [vmem:[%s2298 + $0x634] sm:$0xf] %v2709
                %v2711 = vld [vmem:[%s2297 + $0x338] sm:$0xf]
                %2712 = vst [vmem:[%s2298 + $0x638] sm:$0xf] %v2711
                %v2713 = vld [vmem:[%s2297 + $0x33c] sm:$0xf]
                %2714 = vst [vmem:[%s2298 + $0x63c] sm:$0xf] %v2713
                %v2715 = vld [vmem:[%s2297 + $0x340] sm:$0xf]
                %2716 = vst [vmem:[%s2298 + $0x640] sm:$0xf] %v2715
                %v2717 = vld [vmem:[%s2297 + $0x344] sm:$0xf]
                %2718 = vst [vmem:[%s2298 + $0x644] sm:$0xf] %v2717
                %v2719 = vld [vmem:[%s2297 + $0x348] sm:$0xf]
                %2720 = vst [vmem:[%s2298 + $0x648] sm:$0xf] %v2719
                %v2721 = vld [vmem:[%s2297 + $0x34c] sm:$0xf]
                %2722 = vst [vmem:[%s2298 + $0x64c] sm:$0xf] %v2721
                %v2723 = vld [vmem:[%s2297 + $0x350] sm:$0xf]
                %2724 = vst [vmem:[%s2298 + $0x650] sm:$0xf] %v2723
                %v2725 = vld [vmem:[%s2297 + $0x354] sm:$0xf]
                %2726 = vst [vmem:[%s2298 + $0x654] sm:$0xf] %v2725
                %v2727 = vld [vmem:[%s2297 + $0x358] sm:$0xf]
                %2728 = vst [vmem:[%s2298 + $0x658] sm:$0xf] %v2727
                %v2729 = vld [vmem:[%s2297 + $0x35c] sm:$0xf]
                %2730 = vst [vmem:[%s2298 + $0x65c] sm:$0xf] %v2729
                %v2731 = vld [vmem:[%s2297 + $0x360] sm:$0xf]
                %2732 = vst [vmem:[%s2298 + $0x660] sm:$0xf] %v2731
                %v2733 = vld [vmem:[%s2297 + $0x364] sm:$0xf]
                %2734 = vst [vmem:[%s2298 + $0x664] sm:$0xf] %v2733
                %v2735 = vld [vmem:[%s2297 + $0x368] sm:$0xf]
                %2736 = vst [vmem:[%s2298 + $0x668] sm:$0xf] %v2735
                %v2737 = vld [vmem:[%s2297 + $0x36c] sm:$0xf]
                %2738 = vst [vmem:[%s2298 + $0x66c] sm:$0xf] %v2737
                %v2739 = vld [vmem:[%s2297 + $0x370] sm:$0xf]
                %2740 = vst [vmem:[%s2298 + $0x670] sm:$0xf] %v2739
                %v2741 = vld [vmem:[%s2297 + $0x374] sm:$0xf]
                %2742 = vst [vmem:[%s2298 + $0x674] sm:$0xf] %v2741
                %v2743 = vld [vmem:[%s2297 + $0x378] sm:$0xf]
                %2744 = vst [vmem:[%s2298 + $0x678] sm:$0xf] %v2743
                %v2745 = vld [vmem:[%s2297 + $0x37c] sm:$0xf]
                %2746 = vst [vmem:[%s2298 + $0x67c] sm:$0xf] %v2745
                %v2747 = vld [vmem:[%s2297 + $0x380] sm:$0xf]
                %2748 = vst [vmem:[%s2298 + $0x700] sm:$0xf] %v2747
                %v2749 = vld [vmem:[%s2297 + $0x384] sm:$0xf]
                %2750 = vst [vmem:[%s2298 + $0x704] sm:$0xf] %v2749
                %v2751 = vld [vmem:[%s2297 + $0x388] sm:$0xf]
                %2752 = vst [vmem:[%s2298 + $0x708] sm:$0xf] %v2751
                %v2753 = vld [vmem:[%s2297 + $0x38c] sm:$0xf]
                %2754 = vst [vmem:[%s2298 + $0x70c] sm:$0xf] %v2753
                %v2755 = vld [vmem:[%s2297 + $0x390] sm:$0xf]
                %2756 = vst [vmem:[%s2298 + $0x710] sm:$0xf] %v2755
                %v2757 = vld [vmem:[%s2297 + $0x394] sm:$0xf]
                %2758 = vst [vmem:[%s2298 + $0x714] sm:$0xf] %v2757
                %v2759 = vld [vmem:[%s2297 + $0x398] sm:$0xf]
                %2760 = vst [vmem:[%s2298 + $0x718] sm:$0xf] %v2759
                %v2761 = vld [vmem:[%s2297 + $0x39c] sm:$0xf]
                %2762 = vst [vmem:[%s2298 + $0x71c] sm:$0xf] %v2761
                %v2763 = vld [vmem:[%s2297 + $0x3a0] sm:$0xf]
                %2764 = vst [vmem:[%s2298 + $0x720] sm:$0xf] %v2763
                %v2765 = vld [vmem:[%s2297 + $0x3a4] sm:$0xf]
                %2766 = vst [vmem:[%s2298 + $0x724] sm:$0xf] %v2765
                %v2767 = vld [vmem:[%s2297 + $0x3a8] sm:$0xf]
                %2768 = vst [vmem:[%s2298 + $0x728] sm:$0xf] %v2767
                %v2769 = vld [vmem:[%s2297 + $0x3ac] sm:$0xf]
                %2770 = vst [vmem:[%s2298 + $0x72c] sm:$0xf] %v2769
                %v2771 = vld [vmem:[%s2297 + $0x3b0] sm:$0xf]
                %2772 = vst [vmem:[%s2298 + $0x730] sm:$0xf] %v2771
                %v2773 = vld [vmem:[%s2297 + $0x3b4] sm:$0xf]
                %2774 = vst [vmem:[%s2298 + $0x734] sm:$0xf] %v2773
                %v2775 = vld [vmem:[%s2297 + $0x3b8] sm:$0xf]
                %2776 = vst [vmem:[%s2298 + $0x738] sm:$0xf] %v2775
                %v2777 = vld [vmem:[%s2297 + $0x3bc] sm:$0xf]
                %2778 = vst [vmem:[%s2298 + $0x73c] sm:$0xf] %v2777
                %v2779 = vld [vmem:[%s2297 + $0x3c0] sm:$0xf]
                %2780 = vst [vmem:[%s2298 + $0x740] sm:$0xf] %v2779
                %v2781 = vld [vmem:[%s2297 + $0x3c4] sm:$0xf]
                %2782 = vst [vmem:[%s2298 + $0x744] sm:$0xf] %v2781
                %v2783 = vld [vmem:[%s2297 + $0x3c8] sm:$0xf]
                %2784 = vst [vmem:[%s2298 + $0x748] sm:$0xf] %v2783
                %v2785 = vld [vmem:[%s2297 + $0x3cc] sm:$0xf]
                %2786 = vst [vmem:[%s2298 + $0x74c] sm:$0xf] %v2785
                %v2787 = vld [vmem:[%s2297 + $0x3d0] sm:$0xf]
                %2788 = vst [vmem:[%s2298 + $0x750] sm:$0xf] %v2787
                %v2789 = vld [vmem:[%s2297 + $0x3d4] sm:$0xf]
                %2790 = vst [vmem:[%s2298 + $0x754] sm:$0xf] %v2789
                %v2791 = vld [vmem:[%s2297 + $0x3d8] sm:$0xf]
                %2792 = vst [vmem:[%s2298 + $0x758] sm:$0xf] %v2791
                %v2793 = vld [vmem:[%s2297 + $0x3dc] sm:$0xf]
                %2794 = vst [vmem:[%s2298 + $0x75c] sm:$0xf] %v2793
                %v2795 = vld [vmem:[%s2297 + $0x3e0] sm:$0xf]
                %2796 = vst [vmem:[%s2298 + $0x760] sm:$0xf] %v2795
                %v2797 = vld [vmem:[%s2297 + $0x3e4] sm:$0xf]
                %2798 = vst [vmem:[%s2298 + $0x764] sm:$0xf] %v2797
                %v2799 = vld [vmem:[%s2297 + $0x3e8] sm:$0xf]
                %2800 = vst [vmem:[%s2298 + $0x768] sm:$0xf] %v2799
                %v2801 = vld [vmem:[%s2297 + $0x3ec] sm:$0xf]
                %2802 = vst [vmem:[%s2298 + $0x76c] sm:$0xf] %v2801
                %v2803 = vld [vmem:[%s2297 + $0x3f0] sm:$0xf]
                %2804 = vst [vmem:[%s2298 + $0x770] sm:$0xf] %v2803
                %v2805 = vld [vmem:[%s2297 + $0x3f4] sm:$0xf]
                %2806 = vst [vmem:[%s2298 + $0x774] sm:$0xf] %v2805
                %v2807 = vld [vmem:[%s2297 + $0x3f8] sm:$0xf]
                %2808 = vst [vmem:[%s2298 + $0x778] sm:$0xf] %v2807
                %v2809 = vld [vmem:[%s2297 + $0x3fc] sm:$0xf]
                %2810 = vst [vmem:[%s2298 + $0x77c] sm:$0xf] %v2809
              $region109: #{a_call__.1} parent=103 // loop_footer
                %s2296 = sadd.s32 1, %s2292
              $region110: #{a_call__.1} parent=103 // loop_footer_branch
                %2291 = sbr.rel target = $region106
              $region111: #{a_call__.1} parent=103 // loop_exit
                _
            $region104: #{a_call__.1} parent=95 // pred_fallthru
              _
          $region96: #{a_call__.1} parent=91 // pred_fallthru
            _
          %3342 = vnop
        $region92: #{a_call__.1} parent=76 // pred_fallthru
          _
      $region77: #{a_call__.1} parent=5 // pred_fallthru
        _
      %p3343 = scmp.le.s32.totalorder 2, %s11
      // Predicated region
      $region130: #{a_call__.1} parent=5 // pred_check
        %p3344 = pneg %p3343
      $region131: #{a_call__.1} parent=5 // pred_check_branch
        %3346 = sbr.rel (%p3344) target = $region133
      $region132: #{a_call__.1} parent=5 // pred_region
        %s3347 = ssub.s32 %s11, 2
        // Predicated region
        $region134: #{a_call__.1} parent=132 // pred_check
          %p3348 = pneg %p150
        $region135: #{a_call__.1} parent=132 // pred_check_branch
          %3350 = sbr.rel (%p3348) target = $region137
        $region136: #{a_call__.1} parent=132 // pred_region
          %s3351 = sand.u32 %s135, 1
          %s3352 = sand.u32 %s135, 1
          %s3353 = smul.addr %s3352, 1024
          %s3354 = scalar_lea.vmem [#allocation3], %s3353
        $region137: #{a_call__.1} parent=132 // pred_fallthru
          _
      $region133: #{a_call__.1} parent=5 // pred_fallthru
        _
    $region6: #{a_call__.1} parent=1 // loop_footer
      %s15 = sadd.s32 1, %s11
    $region7: #{a_call__.1} parent=1 // loop_footer_branch
      %10 = sbr.rel target = $region3
    $region8: #{a_call__.1} parent=1 // loop_exit
      _

// kernel: reverse.1
$region0: #{reverse.1}
  #allocation0 [shape = 's32[1]{0}', space=sflag, size = 0x4, scoped, tag = 'scoped memory for reverse.1']
  %s0 = inlined_call_operand.vmem [shape: f32[2,64,4,8,3], index: 0, kind: input, shape index: {}]
  %s1 = inlined_call_operand.vmem [shape: f32[2,64,4,8,3], index: 1, kind: output, shape index: {}]
  %s2 = scalar_lea.vmem %s0, 64
  %v3 = vld [vmem:[%s2] sm:$0xff]
  %4 = vst [vmem:[%s1] sm:$0xff] %v3
  %s5 = scalar_lea.vmem %s0, 160
  %v6 = vld [vmem:[%s5] sm:$0xff]
  %s7 = scalar_lea.vmem %s1, 96
  %8 = vst [vmem:[%s7] sm:$0xff] %v6
  %s9 = scalar_lea.vmem %s0, 32
  %v10 = vld [vmem:[%s9] sm:$0xff]
  %s11 = scalar_lea.vmem %s1, 32
  %12 = vst [vmem:[%s11] sm:$0xff] %v10
  %s13 = scalar_lea.vmem %s0, 128
  %v14 = vld [vmem:[%s13] sm:$0xff]
  %s15 = scalar_lea.vmem %s1, 128
  %16 = vst [vmem:[%s15] sm:$0xff] %v14
  %v17 = vld [vmem:[%s0] sm:$0xff]
  %s18 = scalar_lea.vmem %s1, 64
  %19 = vst [vmem:[%s18] sm:$0xff] %v17
  %s20 = scalar_lea.vmem %s0, 96
  %v21 = vld [vmem:[%s20] sm:$0xff]
  %s22 = scalar_lea.vmem %s1, 160
  %23 = vst [vmem:[%s22] sm:$0xff] %v21
  %s24 = scalar_lea.vmem %s0, 72
  %v25 = vld [vmem:[%s24] sm:$0xff]
  %s26 = scalar_lea.vmem %s1, 8
  %27 = vst [vmem:[%s26] sm:$0xff] %v25
  %s28 = scalar_lea.vmem %s0, 168
  %v29 = vld [vmem:[%s28] sm:$0xff]
  %s30 = scalar_lea.vmem %s1, 104
  %31 = vst [vmem:[%s30] sm:$0xff] %v29
  %s32 = scalar_lea.vmem %s0, 40
  %v33 = vld [vmem:[%s32] sm:$0xff]
  %s34 = scalar_lea.vmem %s1, 40
  %35 = vst [vmem:[%s34] sm:$0xff] %v33
  %s36 = scalar_lea.vmem %s0, 136
  %v37 = vld [vmem:[%s36] sm:$0xff]
  %s38 = scalar_lea.vmem %s1, 136
  %39 = vst [vmem:[%s38] sm:$0xff] %v37
  %s40 = scalar_lea.vmem %s0, 8
  %v41 = vld [vmem:[%s40] sm:$0xff]
  %s42 = scalar_lea.vmem %s1, 72
  %43 = vst [vmem:[%s42] sm:$0xff] %v41
  %s44 = scalar_lea.vmem %s0, 104
  %v45 = vld [vmem:[%s44] sm:$0xff]
  %s46 = scalar_lea.vmem %s1, 168
  %47 = vst [vmem:[%s46] sm:$0xff] %v45
  %s48 = scalar_lea.vmem %s0, 80
  %v49 = vld [vmem:[%s48] sm:$0xff]
  %s50 = scalar_lea.vmem %s1, 16
  %51 = vst [vmem:[%s50] sm:$0xff] %v49
  %s52 = scalar_lea.vmem %s0, 176
  %v53 = vld [vmem:[%s52] sm:$0xff]
  %s54 = scalar_lea.vmem %s1, 112
  %55 = vst [vmem:[%s54] sm:$0xff] %v53
  %s56 = scalar_lea.vmem %s0, 48
  %v57 = vld [vmem:[%s56] sm:$0xff]
  %s58 = scalar_lea.vmem %s1, 48
  %59 = vst [vmem:[%s58] sm:$0xff] %v57
  %s60 = scalar_lea.vmem %s0, 144
  %v61 = vld [vmem:[%s60] sm:$0xff]
  %s62 = scalar_lea.vmem %s1, 144
  %63 = vst [vmem:[%s62] sm:$0xff] %v61
  %s64 = scalar_lea.vmem %s0, 16
  %v65 = vld [vmem:[%s64] sm:$0xff]
  %s66 = scalar_lea.vmem %s1, 80
  %67 = vst [vmem:[%s66] sm:$0xff] %v65
  %s68 = scalar_lea.vmem %s0, 112
  %v69 = vld [vmem:[%s68] sm:$0xff]
  %s70 = scalar_lea.vmem %s1, 176
  %71 = vst [vmem:[%s70] sm:$0xff] %v69
  %s72 = scalar_lea.vmem %s0, 88
  %v73 = vld [vmem:[%s72] sm:$0xff]
  %s74 = scalar_lea.vmem %s1, 24
  %75 = vst [vmem:[%s74] sm:$0xff] %v73
  %s76 = scalar_lea.vmem %s0, 184
  %v77 = vld [vmem:[%s76] sm:$0xff]
  %s78 = scalar_lea.vmem %s1, 120
  %79 = vst [vmem:[%s78] sm:$0xff] %v77
  %s80 = scalar_lea.vmem %s0, 56
  %v81 = vld [vmem:[%s80] sm:$0xff]
  %s82 = scalar_lea.vmem %s1, 56
  %83 = vst [vmem:[%s82] sm:$0xff] %v81
  %s84 = scalar_lea.vmem %s0, 152
  %v85 = vld [vmem:[%s84] sm:$0xff]
  %s86 = scalar_lea.vmem %s1, 152
  %87 = vst [vmem:[%s86] sm:$0xff] %v85
  %s88 = scalar_lea.vmem %s0, 24
  %v89 = vld [vmem:[%s88] sm:$0xff]
  %s90 = scalar_lea.vmem %s1, 88
  %91 = vst [vmem:[%s90] sm:$0xff] %v89
  %s92 = scalar_lea.vmem %s0, 120
  %v93 = vld [vmem:[%s92] sm:$0xff]
  %s94 = scalar_lea.vmem %s1, 184
  %95 = vst [vmem:[%s94] sm:$0xff] %v93

</llo_original>
